<compile_context>
chip_gen: v7x
topology: tpu7x:2x2x1
jax: 0.10.0
libtpu: 0.0.40
codegen_flags: <defaults>
</compile_context>

<pallas_src>
import functools

import numpy as np
import jax
import jax.numpy as jnp
from jax.experimental import pallas as pl
from jax.experimental.pallas import tpu as pltpu


def _gelu_exact(x):
    # nn.GELU() default (exact erf formulation) -- used by the pure-JAX reference.
    return 0.5 * x * (1.0 + jax.lax.erf(x * 0.7071067811865476))


def _layer_norm(x, gamma, beta, eps=1e-5):
    mu = jnp.mean(x, axis=-1, keepdims=True)
    var = jnp.mean(jnp.square(x - mu), axis=-1, keepdims=True)
    return (x - mu) * jax.lax.rsqrt(var + eps) * gamma + beta


def _rpe_layer_kernel(x_ref, mem_ref, pos_ref, maskb_ref,
                      wqkv_ref, bqkv_ref, wp_ref,
                      wo_ref, bo_ref, ln1_ref,
                      we_ref, be_ref, ws_ref, bs_ref, ln2_ref,
                      out_ref, attn_ref=None,
                      *, num_head, d_head, eps):
    f32 = jnp.float32
    H, d = num_head, d_head

    x = x_ref[0]               # (TN, C)  compute dtype (bf16 or f32)
    mem = mem_ref[0]           # (M, C)
    pos = pos_ref[0]           # (TN, M, C)
    mask_bias = maskb_ref[0]   # (1, M) f32 additive bias (0 or -1e30)

    TN, C = x.shape
    M = mem.shape[0]
    cdt = x.dtype
    scale = 1.0 / (float(d) ** 0.5)

    # ---- Full-lane Q/K/V projections on the MXU (lanes = C, not d). ----
    q = jnp.dot(x, wqkv_ref[0], preferred_element_type=f32) + bqkv_ref[0]    # (TN, C)
    k = jnp.dot(mem, wqkv_ref[1], preferred_element_type=f32) + bqkv_ref[1]  # (M, C)
    v = jnp.dot(mem, wqkv_ref[2], preferred_element_type=f32) + bqkv_ref[2]  # (M, C)

    qc, kc, vc = q.astype(cdt), k.astype(cdt), v.astype(cdt)
    # Head split with static lane slices + leading-axis stack (no lane-splitting
    # reshape, no broadcast_to of x/mem).
    q_h = jnp.stack([qc[:, h * d:(h + 1) * d] for h in range(H)], axis=0)    # (H, TN, d)
    k_h = jnp.stack([kc[:, h * d:(h + 1) * d] for h in range(H)], axis=0)    # (H, M, d)
    v_h = jnp.stack([vc[:, h * d:(h + 1) * d] for h in range(H)], axis=0)    # (H, M, d)

    # ---- scores_e: head-batched q·k^T (lanes = M). ----
    scores_e = jnp.einsum('hnj,hmj->hnm', q_h, k_h,
                          preferred_element_type=f32)                        # (H, TN, M)

    # ---- Folded P projection, fully on the MXU:
    #   r[h,n,c]        = sum_j q_h[h,n,j] * Wp[c, h*d + j]
    #   scores_p[h,n,m] = sum_c pos[n,m,c] * r[h,n,c]
    # The n-batched dot reads the pos tile exactly once; the redundant
    # q·b_p term is dropped (constant per softmax row -> cancels exactly). ----
    r = jnp.einsum('hnj,hcj->hnc', q_h, wp_ref[...],
                   preferred_element_type=f32)                               # (H, TN, C)
    scores_p = jnp.einsum('hnc,nmc->hnm', r.astype(cdt), pos,
                          preferred_element_type=f32)                        # (H, TN, M)

    scores = (scores_e + scores_p) * scale + mask_bias[None]

    # ---- softmax over M (f32), approx reciprocal on the EUP ----
    smax = jnp.max(scores, axis=-1, keepdims=True)
    expd = jnp.exp(scores - smax)
    denom = jnp.sum(expd, axis=-1, keepdims=True)
    probs = expd * pl.reciprocal(denom, approx=True)                         # (H, TN, M)
    if attn_ref is not None:
        attn_ref[0] = probs.astype(attn_ref.dtype)

    ctx = jnp.einsum('hnm,hmj->hnj', probs.astype(cdt), v_h,
                     preferred_element_type=f32)                             # (H, TN, d)

    # ---- attention output: merge heads along lanes, ONE (TN,C)x(C,C) matmul ----
    ctx_cat = jnp.concatenate([ctx[h].astype(cdt) for h in range(H)], axis=-1)  # (TN, C)
    h1 = jnp.dot(ctx_cat, wo_ref[...], preferred_element_type=f32) + bo_ref[...]

    x1 = _layer_norm(h1 + x.astype(f32), ln1_ref[0], ln1_ref[1], eps)

    # ---- AttentionOutput FFN: expand -> GELU(tanh, EUP) -> squeeze -> residual + LN ----
    ff = jnp.dot(x1.astype(cdt), we_ref[...], preferred_element_type=f32) + be_ref[...]
    ff = jax.nn.gelu(ff, approximate=True)
    ff = jnp.dot(ff.astype(cdt), ws_ref[...], preferred_element_type=f32) + bs_ref[...]
    out = _layer_norm(x1 + ff, ln2_ref[0], ln2_ref[1], eps)
    out_ref[0] = out.astype(out_ref.dtype)


def _vmem_limit_bytes():
    """VMEM limit with headroom, derived per chip generation when possible."""
    cap = 64 * 1024 * 1024                      # conservative default (v7x-sized)
    try:
        info = pltpu.get_tpu_info()
        cap = int(getattr(info, 'vmem_capacity_bytes', cap))
    except Exception:
        pass
    # Leave ~8 MiB headroom; never ask for more than ~100 MiB even on 128 MiB parts.
    return max(32 * 1024 * 1024, min(cap - 8 * 1024 * 1024, 100 * 1024 * 1024))


def _pick_tile_n(N, M, C, H, vmem_limit, *, pos_itemsize, attn_itemsize):
    """Largest N tile (dividing N) whose working set fits the VMEM budget."""
    cands = [N] + [t for t in (1024, 512, 256, 128, 64, 32, 16, 8)
                   if t < N and N % t == 0]
    budget = 0.6 * vmem_limit                   # keep headroom for weights/spills
    for t in cands:
        pos_stream = 2 * t * M * C * pos_itemsize          # double-buffered pos tiles
        score_live = 4 * H * t * M * 4                     # score/prob f32 temporaries
        attn_out = 2 * H * t * M * attn_itemsize           # double-buffered attn tiles
        io = 4 * t * C * pos_itemsize + 2 * M * C * pos_itemsize
        if pos_stream + score_live + attn_out + io <= budget:
            return t
    return cands[-1]                            # smallest divisor; may still be tight


def rpe_transformer_layer(input_states, memory_states, position_states, params,
                          memory_masks=None, num_head=4,
                          compute_dtype=jnp.bfloat16, out_dtype=None,
                          attn_dtype=None, tile_n=None,
                          return_attention=False):
    B, N, C = input_states.shape
    M = memory_states.shape[1]
    assert C % num_head == 0
    H = num_head
    d = C // H
    cdt = compute_dtype
    f32 = jnp.float32
    out_dtype = cdt if out_dtype is None else out_dtype
    attn_dtype = cdt if attn_dtype is None else attn_dtype

    vmem_limit = _vmem_limit_bytes()
    if tile_n is None:
        TN = _pick_tile_n(
            N, M, C, H, vmem_limit,
            pos_itemsize=jnp.dtype(cdt).itemsize,
            attn_itemsize=jnp.dtype(attn_dtype).itemsize if return_attention else 0)
    else:
        TN = tile_n
    assert N % TN == 0
    n_blocks = N // TN

    # Hoist the mask to a single additive bias (finite, no -inf NaN hazard;
    # fully-masked rows give uniform attention instead of the reference's NaN).
    if memory_masks is None:
        mask_bias = jnp.zeros((B, 1, M), f32)
    else:
        mask_bias = jnp.where(memory_masks.reshape(B, 1, M), -1e30, 0.0).astype(f32)

    Wq, Wk, Wv, Wp = (params['w_qkvp'][i] for i in range(4))
    bq, bk, bv, _bp = (params['b_qkvp'][i] for i in range(4))   # b_p dropped (softmax-invariant)

    w_qkv = jnp.stack([Wq, Wk, Wv]).astype(cdt)                 # (3, C, C)
    b_qkv = jnp.stack([bq, bk, bv]).astype(f32)                 # (3, 1, C)
    # wp_h[h, c, j] = Wp[c, h*d + j]  -> r[h] = q_h[h] @ wp_h[h]^T (contract j)
    wp_h = Wp.reshape(C, H, d).transpose(1, 0, 2).astype(cdt)   # (H, C, d)
    w_o = params['w_o'].astype(cdt)                             # (C, C)

    x = input_states.astype(cdt)
    mem = memory_states.astype(cdt)
    pos = position_states.astype(cdt)        # dominant HBM stream -> bf16 halves traffic
    w_e = params['w_e'].astype(cdt)
    w_s = params['w_s'].astype(cdt)
    b_o = params['b_o'].astype(f32)
    b_e = params['b_e'].astype(f32)
    b_s = params['b_s'].astype(f32)
    ln1 = params['ln1'].astype(f32)
    ln2 = params['ln2'].astype(f32)

    kernel = functools.partial(_rpe_layer_kernel, num_head=H, d_head=d, eps=1e-5)

    def rep_spec(arr):
        nd = arr.ndim
        # Grid-invariant weights/biases (full block each step).
        return pl.BlockSpec(arr.shape, lambda b, i, nd=nd: (0,) * nd)

    in_specs = [
        pl.BlockSpec((1, TN, C), lambda b, i: (b, i, 0)),         # input_states tile
        pl.BlockSpec((1, M, C), lambda b, i: (b, 0, 0)),          # memory_states (full per batch)
        pl.BlockSpec((1, TN, M, C), lambda b, i: (b, i, 0, 0)),   # position_states tile
        pl.BlockSpec((1, 1, M), lambda b, i: (b, 0, 0)),          # mask bias
        rep_spec(w_qkv), rep_spec(b_qkv), rep_spec(wp_h),
        rep_spec(w_o), rep_spec(b_o), rep_spec(ln1),
        rep_spec(w_e), rep_spec(b_e), rep_spec(w_s), rep_spec(b_s), rep_spec(ln2),
    ]

    out_shapes = [jax.ShapeDtypeStruct((B, N, C), out_dtype)]
    out_specs = [pl.BlockSpec((1, TN, C), lambda b, i: (b, i, 0))]
    if return_attention:
        out_shapes.append(jax.ShapeDtypeStruct((B, H, N, M), attn_dtype))
        out_specs.append(pl.BlockSpec((1, H, TN, M), lambda b, i: (b, 0, i, 0)))

    results = pl.pallas_call(
        kernel,
        out_shape=tuple(out_shapes),
        grid_spec=pltpu.PrefetchScalarGridSpec(
            num_scalar_prefetch=0,
            grid=(B, n_blocks),                # both independent; megacore splits either axis
            in_specs=in_specs,
            out_specs=out_specs),
        compiler_params=pltpu.CompilerParams(
            dimension_semantics=("parallel", "parallel"),
            vmem_limit_bytes=vmem_limit),
    )(x, mem, pos, mask_bias,
      w_qkv, b_qkv, wp_h,
      w_o, b_o, ln1,
      w_e, b_e, w_s, b_s, ln2)

    if return_attention:
        out, attn = results
        return out, attn
    return results[0], None


def init_params(key, C):
    ks = jax.random.split(key, 8)

    def lin(k, fan_in, shape):
        return jax.random.normal(k, shape, jnp.float32) / np.sqrt(fan_in).astype(np.float32)

    return {
        'w_qkvp': lin(ks[0], C, (4, C, C)),                              # q, k, v, p projections
        'b_qkvp': 0.01 * jax.random.normal(ks[1], (4, 1, C), jnp.float32),
        'w_o': lin(ks[2], C, (C, C)),                                    # attention output linear
        'b_o': 0.01 * jax.random.normal(ks[3], (1, C), jnp.float32),
        'ln1': jnp.stack([jnp.ones((1, C), jnp.float32),                 # LayerNorm gamma/beta
                          jnp.zeros((1, C), jnp.float32)]),
        'w_e': lin(ks[4], C, (C, 2 * C)),                                # FFN expand
        'b_e': 0.01 * jax.random.normal(ks[5], (1, 2 * C), jnp.float32),
        'w_s': lin(ks[6], 2 * C, (2 * C, C)),                            # FFN squeeze
        'b_s': 0.01 * jax.random.normal(ks[7], (1, C), jnp.float32),
        'ln2': jnp.stack([jnp.ones((1, C), jnp.float32),
                          jnp.zeros((1, C), jnp.float32)]),
    }


def ref_forward(x, mem, pos, mask_bool, p, H):
    # Pure-JAX mirror of the PyTorch forward (eval mode, dropout = identity, exact GELU).
    B, N, C = x.shape
    M = mem.shape[1]
    d = C // H
    q = x @ p['w_qkvp'][0] + p['b_qkvp'][0]
    k = mem @ p['w_qkvp'][1] + p['b_qkvp'][1]
    v = mem @ p['w_qkvp'][2] + p['b_qkvp'][2]
    pe = pos @ p['w_qkvp'][3] + p['b_qkvp'][3]
    q = q.reshape(B, N, H, d).transpose(0, 2, 1, 3)
    k = k.reshape(B, M, H, d).transpose(0, 2, 1, 3)
    v = v.reshape(B, M, H, d).transpose(0, 2, 1, 3)
    pe = pe.reshape(B, N, M, H, d).transpose(0, 3, 1, 2, 4)
    se = jnp.einsum('bhnd,bhmd->bhnm', q, k)
    sp = jnp.einsum('bhnd,bhnmd->bhnm', q, pe)
    s = (se + sp) / (d ** 0.5)
    if mask_bool is not None:
        s = jnp.where(mask_bool[:, None, None, :], -jnp.inf, s)
    a = jax.nn.softmax(s, axis=-1)
    h = jnp.einsum('bhnm,bhmd->bhnd', a, v)
    h = h.transpose(0, 2, 1, 3).reshape(B, N, C)
    h = h @ p['w_o'] + p['b_o']
    x1 = _layer_norm(h + x, p['ln1'][0], p['ln1'][1])
    ff = _gelu_exact(x1 @ p['w_e'] + p['b_e'])
    ff = ff @ p['w_s'] + p['b_s']
    out = _layer_norm(x1 + ff, p['ln2'][0], p['ln2'][1])
    return out, a


if __name__ == "__main__":
    B, N, M, C, H = 2, 8, 12, 32, 4
    key = jax.random.PRNGKey(0)
    k_in, k_mem, k_pos, k_par = jax.random.split(key, 4)

    input_states = jax.random.normal(k_in, (B, N, C), jnp.float32)
    memory_states = jax.random.normal(k_mem, (B, M, C), jnp.float32)
    position_states = jax.random.normal(k_pos, (B, N, M, C), jnp.float32)
    memory_masks = jnp.zeros((B, M), bool).at[1, M - 2:].set(True)
    params = init_params(k_par, C)

    # Production path: no attention map returned.
    out, _ = rpe_transformer_layer(
        input_states, memory_states, position_states, params,
        memory_masks=memory_masks, num_head=H, compute_dtype=jnp.bfloat16,
        return_attention=False)
    out = jax.block_until_ready(out)

    # Debug path: also emit the attention map (bf16).
    out2, attn = rpe_transformer_layer(
        input_states, memory_states, position_states, params,
        memory_masks=memory_masks, num_head=H, compute_dtype=jnp.bfloat16,
        return_attention=True)
    out2 = jax.block_until_ready(out2)
    attn = jax.block_until_ready(attn)

    ref_out, ref_attn = ref_forward(
        input_states, memory_states, position_states, memory_masks, params, H)

    out_f32 = np.asarray(out.astype(jnp.float32))
    out2_f32 = np.asarray(out2.astype(jnp.float32))
    attn_f32 = np.asarray(attn.astype(jnp.float32))
    np.testing.assert_allclose(out_f32, np.asarray(ref_out), atol=5e-2, rtol=5e-2)
    np.testing.assert_allclose(out2_f32, np.asarray(ref_out), atol=5e-2, rtol=5e-2)
    np.testing.assert_allclose(attn_f32, np.asarray(ref_attn), atol=5e-2, rtol=5e-2)
    assert out.shape == (B, N, C) and attn.shape == (B, H, N, M)

    print("KERNEL_OK")
</pallas_src>

<mosaic_0001>
module attributes {stable_mosaic.version = 11 : i64} {
  func.func @_rpe_layer_kernel(%arg0: i32, %arg1: i32, %arg2: memref<1x8x32xbf16, #tpu.memory_space<vmem>>, %arg3: memref<1x12x32xbf16, #tpu.memory_space<vmem>>, %arg4: memref<1x8x12x32xbf16, #tpu.memory_space<vmem>>, %arg5: memref<1x1x12xf32, #tpu.memory_space<vmem>>, %arg6: memref<3x32x32xbf16, #tpu.memory_space<vmem>>, %arg7: memref<3x1x32xf32, #tpu.memory_space<vmem>>, %arg8: memref<4x32x8xbf16, #tpu.memory_space<vmem>>, %arg9: memref<32x32xbf16, #tpu.memory_space<vmem>>, %arg10: memref<1x32xf32, #tpu.memory_space<vmem>>, %arg11: memref<2x1x32xf32, #tpu.memory_space<vmem>>, %arg12: memref<32x64xbf16, #tpu.memory_space<vmem>>, %arg13: memref<1x64xf32, #tpu.memory_space<vmem>>, %arg14: memref<64x32xbf16, #tpu.memory_space<vmem>>, %arg15: memref<1x32xf32, #tpu.memory_space<vmem>>, %arg16: memref<2x1x32xf32, #tpu.memory_space<vmem>>, %arg17: memref<1x8x32xbf16, #tpu.memory_space<vmem>>) attributes {dimension_semantics = [#tpu.dimension_semantics<parallel>, #tpu.dimension_semantics<parallel>], iteration_bounds = array<i64: 2, 1>, scalar_prefetch = 0 : i64, scratch_operands = 0 : i64, tpu.core_type = #tpu.core_type<tc>, window_params = [{transform_indices = @transform_0, window_bounds = array<i64: 1, 8, 32>}, {transform_indices = @transform_1, window_bounds = array<i64: 1, 12, 32>}, {transform_indices = @transform_2, window_bounds = array<i64: 1, 8, 12, 32>}, {transform_indices = @transform_3, window_bounds = array<i64: 1, 1, 12>}, {pipeline_mode = #tpu.pipeline_mode<synchronous>, transform_indices = @transform_4, window_bounds = array<i64: 3, 32, 32>}, {pipeline_mode = #tpu.pipeline_mode<synchronous>, transform_indices = @transform_5, window_bounds = array<i64: 3, 1, 32>}, {pipeline_mode = #tpu.pipeline_mode<synchronous>, transform_indices = @transform_6, window_bounds = array<i64: 4, 32, 8>}, {pipeline_mode = #tpu.pipeline_mode<synchronous>, transform_indices = @transform_7, window_bounds = array<i64: 32, 32>}, {pipeline_mode = #tpu.pipeline_mode<synchronous>, transform_indices = @transform_8, window_bounds = array<i64: 1, 32>}, {pipeline_mode = #tpu.pipeline_mode<synchronous>, transform_indices = @transform_9, window_bounds = array<i64: 2, 1, 32>}, {pipeline_mode = #tpu.pipeline_mode<synchronous>, transform_indices = @transform_10, window_bounds = array<i64: 32, 64>}, {pipeline_mode = #tpu.pipeline_mode<synchronous>, transform_indices = @transform_11, window_bounds = array<i64: 1, 64>}, {pipeline_mode = #tpu.pipeline_mode<synchronous>, transform_indices = @transform_12, window_bounds = array<i64: 64, 32>}, {pipeline_mode = #tpu.pipeline_mode<synchronous>, transform_indices = @transform_13, window_bounds = array<i64: 1, 32>}, {pipeline_mode = #tpu.pipeline_mode<synchronous>, transform_indices = @transform_14, window_bounds = array<i64: 2, 1, 32>}, {transform_indices = @transform_15, window_bounds = array<i64: 1, 8, 32>}]} {
    %c0 = arith.constant 0 : index
    %c0_0 = arith.constant 0 : index
    %c0_1 = arith.constant 0 : index
    %0 = vector.load %arg2[%c0, %c0_0, %c0_1] : memref<1x8x32xbf16, #tpu.memory_space<vmem>>, vector<1x8x32xbf16>
    %1 = vector.shape_cast %0 : vector<1x8x32xbf16> to vector<8x32xbf16>
    %c0_2 = arith.constant 0 : index
    %c0_3 = arith.constant 0 : index
    %c0_4 = arith.constant 0 : index
    %2 = vector.load %arg3[%c0_2, %c0_3, %c0_4] : memref<1x12x32xbf16, #tpu.memory_space<vmem>>, vector<1x12x32xbf16>
    %3 = vector.shape_cast %2 : vector<1x12x32xbf16> to vector<12x32xbf16>
    %c0_5 = arith.constant 0 : index
    %c0_6 = arith.constant 0 : index
    %c0_7 = arith.constant 0 : index
    %c0_8 = arith.constant 0 : index
    %4 = vector.load %arg4[%c0_5, %c0_6, %c0_7, %c0_8] : memref<1x8x12x32xbf16, #tpu.memory_space<vmem>>, vector<1x8x12x32xbf16>
    %5 = vector.shape_cast %4 : vector<1x8x12x32xbf16> to vector<8x12x32xbf16>
    %c0_9 = arith.constant 0 : index
    %c0_10 = arith.constant 0 : index
    %c0_11 = arith.constant 0 : index
    %6 = vector.load %arg5[%c0_9, %c0_10, %c0_11] : memref<1x1x12xf32, #tpu.memory_space<vmem>>, vector<1x1x12xf32>
    %7 = vector.shape_cast %6 : vector<1x1x12xf32> to vector<1x12xf32>
    %c0_12 = arith.constant 0 : index
    %c0_13 = arith.constant 0 : index
    %c0_14 = arith.constant 0 : index
    %8 = vector.load %arg6[%c0_12, %c0_13, %c0_14] : memref<3x32x32xbf16, #tpu.memory_space<vmem>>, vector<1x32x32xbf16>
    %9 = vector.shape_cast %8 : vector<1x32x32xbf16> to vector<32x32xbf16>
    %cst = arith.constant dense<0.000000e+00> : vector<8x32xf32>
    %10 = tpu.matmul %1, %9, %cst {dimension_numbers = #tpu.dot_dimension_numbers<[1], [0], [0], [1], [0, 0, 1, 1], [], []>} : vector<8x32xbf16>, vector<32x32xbf16>, vector<8x32xf32> -> vector<8x32xf32>
    %c0_15 = arith.constant 0 : index
    %c0_16 = arith.constant 0 : index
    %c0_17 = arith.constant 0 : index
    %11 = vector.load %arg7[%c0_15, %c0_16, %c0_17] : memref<3x1x32xf32, #tpu.memory_space<vmem>>, vector<1x1x32xf32>
    %12 = vector.shape_cast %11 : vector<1x1x32xf32> to vector<1x32xf32>
    %13 = vector.broadcast %12 : vector<1x32xf32> to vector<8x32xf32>
    %14 = arith.addf %10, %13 : vector<8x32xf32>
    %c1 = arith.constant 1 : index
    %c0_18 = arith.constant 0 : index
    %c0_19 = arith.constant 0 : index
    %15 = vector.load %arg6[%c1, %c0_18, %c0_19] : memref<3x32x32xbf16, #tpu.memory_space<vmem>>, vector<1x32x32xbf16>
    %16 = vector.shape_cast %15 : vector<1x32x32xbf16> to vector<32x32xbf16>
    %cst_20 = arith.constant dense<0.000000e+00> : vector<12x32xf32>
    %17 = tpu.matmul %3, %16, %cst_20 {dimension_numbers = #tpu.dot_dimension_numbers<[1], [0], [0], [1], [0, 0, 1, 1], [], []>} : vector<12x32xbf16>, vector<32x32xbf16>, vector<12x32xf32> -> vector<12x32xf32>
    %c1_21 = arith.constant 1 : index
    %c0_22 = arith.constant 0 : index
    %c0_23 = arith.constant 0 : index
    %18 = vector.load %arg7[%c1_21, %c0_22, %c0_23] : memref<3x1x32xf32, #tpu.memory_space<vmem>>, vector<1x1x32xf32>
    %19 = vector.shape_cast %18 : vector<1x1x32xf32> to vector<1x32xf32>
    %20 = vector.broadcast %19 : vector<1x32xf32> to vector<12x32xf32>
    %21 = arith.addf %17, %20 : vector<12x32xf32>
    %c2 = arith.constant 2 : index
    %c0_24 = arith.constant 0 : index
    %c0_25 = arith.constant 0 : index
    %22 = vector.load %arg6[%c2, %c0_24, %c0_25] : memref<3x32x32xbf16, #tpu.memory_space<vmem>>, vector<1x32x32xbf16>
    %23 = vector.shape_cast %22 : vector<1x32x32xbf16> to vector<32x32xbf16>
    %cst_26 = arith.constant dense<0.000000e+00> : vector<12x32xf32>
    %24 = tpu.matmul %3, %23, %cst_26 {dimension_numbers = #tpu.dot_dimension_numbers<[1], [0], [0], [1], [0, 0, 1, 1], [], []>} : vector<12x32xbf16>, vector<32x32xbf16>, vector<12x32xf32> -> vector<12x32xf32>
    %c2_27 = arith.constant 2 : index
    %c0_28 = arith.constant 0 : index
    %c0_29 = arith.constant 0 : index
    %25 = vector.load %arg7[%c2_27, %c0_28, %c0_29] : memref<3x1x32xf32, #tpu.memory_space<vmem>>, vector<1x1x32xf32>
    %26 = vector.shape_cast %25 : vector<1x1x32xf32> to vector<1x32xf32>
    %27 = vector.broadcast %26 : vector<1x32xf32> to vector<12x32xf32>
    %28 = arith.addf %24, %27 : vector<12x32xf32>
    %29 = arith.truncf %14 : vector<8x32xf32> to vector<8x32xbf16>
    %30 = arith.truncf %21 : vector<12x32xf32> to vector<12x32xbf16>
    %31 = arith.truncf %28 : vector<12x32xf32> to vector<12x32xbf16>
    %32 = vector.extract_strided_slice %29 {offsets = [0, 0], sizes = [8, 8], strides = [1, 1]} : vector<8x32xbf16> to vector<8x8xbf16>
    %33 = vector.extract_strided_slice %29 {offsets = [0, 8], sizes = [8, 8], strides = [1, 1]} : vector<8x32xbf16> to vector<8x8xbf16>
    %34 = vector.extract_strided_slice %29 {offsets = [0, 16], sizes = [8, 8], strides = [1, 1]} : vector<8x32xbf16> to vector<8x8xbf16>
    %35 = vector.extract_strided_slice %29 {offsets = [0, 24], sizes = [8, 8], strides = [1, 1]} : vector<8x32xbf16> to vector<8x8xbf16>
    %36 = vector.shape_cast %32 : vector<8x8xbf16> to vector<1x8x8xbf16>
    %37 = vector.shape_cast %33 : vector<8x8xbf16> to vector<1x8x8xbf16>
    %38 = vector.shape_cast %34 : vector<8x8xbf16> to vector<1x8x8xbf16>
    %39 = vector.shape_cast %35 : vector<8x8xbf16> to vector<1x8x8xbf16>
    %40 = tpu.concatenate %36, %37, %38, %39 in 0 : vector<1x8x8xbf16>, vector<1x8x8xbf16>, vector<1x8x8xbf16>, vector<1x8x8xbf16> -> vector<4x8x8xbf16>
    %41 = vector.extract_strided_slice %30 {offsets = [0, 0], sizes = [12, 8], strides = [1, 1]} : vector<12x32xbf16> to vector<12x8xbf16>
    %42 = vector.extract_strided_slice %30 {offsets = [0, 8], sizes = [12, 8], strides = [1, 1]} : vector<12x32xbf16> to vector<12x8xbf16>
    %43 = vector.extract_strided_slice %30 {offsets = [0, 16], sizes = [12, 8], strides = [1, 1]} : vector<12x32xbf16> to vector<12x8xbf16>
    %44 = vector.extract_strided_slice %30 {offsets = [0, 24], sizes = [12, 8], strides = [1, 1]} : vector<12x32xbf16> to vector<12x8xbf16>
    %45 = vector.shape_cast %41 : vector<12x8xbf16> to vector<1x12x8xbf16>
    %46 = vector.shape_cast %42 : vector<12x8xbf16> to vector<1x12x8xbf16>
    %47 = vector.shape_cast %43 : vector<12x8xbf16> to vector<1x12x8xbf16>
    %48 = vector.shape_cast %44 : vector<12x8xbf16> to vector<1x12x8xbf16>
    %49 = tpu.concatenate %45, %46, %47, %48 in 0 : vector<1x12x8xbf16>, vector<1x12x8xbf16>, vector<1x12x8xbf16>, vector<1x12x8xbf16> -> vector<4x12x8xbf16>
    %50 = vector.extract_strided_slice %31 {offsets = [0, 0], sizes = [12, 8], strides = [1, 1]} : vector<12x32xbf16> to vector<12x8xbf16>
    %51 = vector.extract_strided_slice %31 {offsets = [0, 8], sizes = [12, 8], strides = [1, 1]} : vector<12x32xbf16> to vector<12x8xbf16>
    %52 = vector.extract_strided_slice %31 {offsets = [0, 16], sizes = [12, 8], strides = [1, 1]} : vector<12x32xbf16> to vector<12x8xbf16>
    %53 = vector.extract_strided_slice %31 {offsets = [0, 24], sizes = [12, 8], strides = [1, 1]} : vector<12x32xbf16> to vector<12x8xbf16>
    %54 = vector.shape_cast %50 : vector<12x8xbf16> to vector<1x12x8xbf16>
    %55 = vector.shape_cast %51 : vector<12x8xbf16> to vector<1x12x8xbf16>
    %56 = vector.shape_cast %52 : vector<12x8xbf16> to vector<1x12x8xbf16>
    %57 = vector.shape_cast %53 : vector<12x8xbf16> to vector<1x12x8xbf16>
    %58 = tpu.concatenate %54, %55, %56, %57 in 0 : vector<1x12x8xbf16>, vector<1x12x8xbf16>, vector<1x12x8xbf16>, vector<1x12x8xbf16> -> vector<4x12x8xbf16>
    "tpu.trace_start"() <{level = 10 : i32, message = "hnj,hmj->hnm"}> : () -> ()
    %cst_30 = arith.constant dense<0.000000e+00> : vector<4x8x12xf32>
    %59 = tpu.matmul %40, %49, %cst_30 {dimension_numbers = #tpu.dot_dimension_numbers<[2], [2], [1], [1], [0, 0, 0, 1, 1, 1], [0], [0]>} : vector<4x8x8xbf16>, vector<4x12x8xbf16>, vector<4x8x12xf32> -> vector<4x8x12xf32>
    "tpu.trace_stop"() : () -> ()
    %c0_31 = arith.constant 0 : index
    %c0_32 = arith.constant 0 : index
    %c0_33 = arith.constant 0 : index
    %60 = vector.load %arg8[%c0_31, %c0_32, %c0_33] : memref<4x32x8xbf16, #tpu.memory_space<vmem>>, vector<4x32x8xbf16>
    "tpu.trace_start"() <{level = 10 : i32, message = "hnj,hcj->hnc"}> : () -> ()
    %cst_34 = arith.constant dense<0.000000e+00> : vector<4x8x32xf32>
    %61 = tpu.matmul %40, %60, %cst_34 {dimension_numbers = #tpu.dot_dimension_numbers<[2], [2], [1], [1], [0, 0, 0, 1, 1, 1], [0], [0]>} : vector<4x8x8xbf16>, vector<4x32x8xbf16>, vector<4x8x32xf32> -> vector<4x8x32xf32>
    "tpu.trace_stop"() : () -> ()
    %62 = arith.truncf %61 : vector<4x8x32xf32> to vector<4x8x32xbf16>
    "tpu.trace_start"() <{level = 10 : i32, message = "hnc,nmc->hnm"}> : () -> ()
    %cst_35 = arith.constant dense<0.000000e+00> : vector<8x12x4xf32>
    %63 = tpu.matmul %5, %62, %cst_35 {dimension_numbers = #tpu.dot_dimension_numbers<[2], [2], [1], [0], [0, 0, 0, 1, 1, 0], [0], [1]>} : vector<8x12x32xbf16>, vector<4x8x32xbf16>, vector<8x12x4xf32> -> vector<8x12x4xf32>
    %64 = tpu.transpose %63, [2, 0, 1] : vector<8x12x4xf32> -> vector<4x8x12xf32>
    "tpu.trace_stop"() : () -> ()
    %65 = arith.addf %59, %64 : vector<4x8x12xf32>
    %cst_36 = arith.constant 0.353553385 : f32
    %66 = vector.broadcast %cst_36 : f32 to vector<4x8x12xf32>
    %67 = arith.mulf %65, %66 : vector<4x8x12xf32>
    %68 = vector.shape_cast %7 : vector<1x12xf32> to vector<1x1x12xf32>
    %69 = vector.broadcast %68 : vector<1x1x12xf32> to vector<4x8x12xf32>
    %70 = arith.addf %67, %69 : vector<4x8x12xf32>
    %cst_37 = arith.constant dense<0xFF800000> : vector<4x8xf32>
    %71 = vector.multi_reduction <maximumf>, %70, %cst_37 [2] : vector<4x8x12xf32> to vector<4x8xf32>
    %72 = vector.shape_cast %71 : vector<4x8xf32> to vector<4x8x1xf32>
    %73 = vector.broadcast %72 : vector<4x8x1xf32> to vector<4x8x12xf32>
    %74 = arith.subf %70, %73 : vector<4x8x12xf32>
    %75 = math.exp %74 : vector<4x8x12xf32>
    %cst_38 = arith.constant dense<0.000000e+00> : vector<4x8xf32>
    %76 = vector.multi_reduction <add>, %75, %cst_38 [2] : vector<4x8x12xf32> to vector<4x8xf32>
    %77 = vector.shape_cast %76 : vector<4x8xf32> to vector<4x8x1xf32>
    %78 = tpu.reciprocal %77 {approx = true} : vector<4x8x1xf32> -> vector<4x8x1xf32>
    %79 = vector.broadcast %78 : vector<4x8x1xf32> to vector<4x8x12xf32>
    %80 = arith.mulf %75, %79 : vector<4x8x12xf32>
    %81 = arith.truncf %80 : vector<4x8x12xf32> to vector<4x8x12xbf16>
    "tpu.trace_start"() <{level = 10 : i32, message = "hnm,hmj->hnj"}> : () -> ()
    %cst_39 = arith.constant dense<0.000000e+00> : vector<4x8x8xf32>
    %82 = tpu.matmul %81, %58, %cst_39 {dimension_numbers = #tpu.dot_dimension_numbers<[2], [1], [1], [2], [0, 0, 0, 1, 1, 2], [0], [0]>} : vector<4x8x12xbf16>, vector<4x12x8xbf16>, vector<4x8x8xf32> -> vector<4x8x8xf32>
    "tpu.trace_stop"() : () -> ()
    %83 = vector.extract_strided_slice %82 {offsets = [0, 0, 0], sizes = [1, 8, 8], strides = [1, 1, 1]} : vector<4x8x8xf32> to vector<1x8x8xf32>
    %84 = vector.shape_cast %83 : vector<1x8x8xf32> to vector<8x8xf32>
    %85 = arith.truncf %84 : vector<8x8xf32> to vector<8x8xbf16>
    %86 = vector.extract_strided_slice %82 {offsets = [1, 0, 0], sizes = [1, 8, 8], strides = [1, 1, 1]} : vector<4x8x8xf32> to vector<1x8x8xf32>
    %87 = vector.shape_cast %86 : vector<1x8x8xf32> to vector<8x8xf32>
    %88 = arith.truncf %87 : vector<8x8xf32> to vector<8x8xbf16>
    %89 = vector.extract_strided_slice %82 {offsets = [2, 0, 0], sizes = [1, 8, 8], strides = [1, 1, 1]} : vector<4x8x8xf32> to vector<1x8x8xf32>
    %90 = vector.shape_cast %89 : vector<1x8x8xf32> to vector<8x8xf32>
    %91 = arith.truncf %90 : vector<8x8xf32> to vector<8x8xbf16>
    %92 = vector.extract_strided_slice %82 {offsets = [3, 0, 0], sizes = [1, 8, 8], strides = [1, 1, 1]} : vector<4x8x8xf32> to vector<1x8x8xf32>
    %93 = vector.shape_cast %92 : vector<1x8x8xf32> to vector<8x8xf32>
    %94 = arith.truncf %93 : vector<8x8xf32> to vector<8x8xbf16>
    %95 = tpu.concatenate %85, %88, %91, %94 in 1 : vector<8x8xbf16>, vector<8x8xbf16>, vector<8x8xbf16>, vector<8x8xbf16> -> vector<8x32xbf16>
    %c0_40 = arith.constant 0 : index
    %c0_41 = arith.constant 0 : index
    %96 = vector.load %arg9[%c0_40, %c0_41] : memref<32x32xbf16, #tpu.memory_space<vmem>>, vector<32x32xbf16>
    %cst_42 = arith.constant dense<0.000000e+00> : vector<8x32xf32>
    %97 = tpu.matmul %95, %96, %cst_42 {dimension_numbers = #tpu.dot_dimension_numbers<[1], [0], [0], [1], [0, 0, 1, 1], [], []>} : vector<8x32xbf16>, vector<32x32xbf16>, vector<8x32xf32> -> vector<8x32xf32>
    %c0_43 = arith.constant 0 : index
    %c0_44 = arith.constant 0 : index
    %98 = vector.load %arg10[%c0_43, %c0_44] : memref<1x32xf32, #tpu.memory_space<vmem>>, vector<1x32xf32>
    %99 = vector.broadcast %98 : vector<1x32xf32> to vector<8x32xf32>
    %100 = arith.addf %97, %99 : vector<8x32xf32>
    %101 = arith.extf %1 : vector<8x32xbf16> to vector<8x32xf32>
    %102 = arith.addf %100, %101 : vector<8x32xf32>
    %c0_45 = arith.constant 0 : index
    %c0_46 = arith.constant 0 : index
    %c0_47 = arith.constant 0 : index
    %103 = vector.load %arg11[%c0_45, %c0_46, %c0_47] : memref<2x1x32xf32, #tpu.memory_space<vmem>>, vector<1x1x32xf32>
    %104 = vector.shape_cast %103 : vector<1x1x32xf32> to vector<1x32xf32>
    %c1_48 = arith.constant 1 : index
    %c0_49 = arith.constant 0 : index
    %c0_50 = arith.constant 0 : index
    %105 = vector.load %arg11[%c1_48, %c0_49, %c0_50] : memref<2x1x32xf32, #tpu.memory_space<vmem>>, vector<1x1x32xf32>
    %106 = vector.shape_cast %105 : vector<1x1x32xf32> to vector<1x32xf32>
    %cst_51 = arith.constant dense<0.000000e+00> : vector<8xf32>
    %107 = vector.multi_reduction <add>, %102, %cst_51 [1] : vector<8x32xf32> to vector<8xf32>
    %108 = vector.shape_cast %107 : vector<8xf32> to vector<8x1xf32>
    %cst_52 = arith.constant 3.200000e+01 : f32
    %109 = vector.broadcast %cst_52 : f32 to vector<8x1xf32>
    %110 = arith.divf %108, %109 : vector<8x1xf32>
    %111 = vector.broadcast %110 : vector<8x1xf32> to vector<8x32xf32>
    %112 = arith.subf %102, %111 : vector<8x32xf32>
    %113 = arith.mulf %112, %112 : vector<8x32xf32>
    %cst_53 = arith.constant dense<0.000000e+00> : vector<8xf32>
    %114 = vector.multi_reduction <add>, %113, %cst_53 [1] : vector<8x32xf32> to vector<8xf32>
    %115 = vector.shape_cast %114 : vector<8xf32> to vector<8x1xf32>
    %cst_54 = arith.constant 3.200000e+01 : f32
    %116 = vector.broadcast %cst_54 : f32 to vector<8x1xf32>
    %117 = arith.divf %115, %116 : vector<8x1xf32>
    %118 = vector.broadcast %110 : vector<8x1xf32> to vector<8x32xf32>
    %119 = arith.subf %102, %118 : vector<8x32xf32>
    %cst_55 = arith.constant 9.99999974E-6 : f32
    %120 = vector.broadcast %cst_55 : f32 to vector<8x1xf32>
    %121 = arith.addf %117, %120 : vector<8x1xf32>
    %122 = math.rsqrt %121 : vector<8x1xf32>
    %123 = vector.broadcast %122 : vector<8x1xf32> to vector<8x32xf32>
    %124 = arith.mulf %119, %123 : vector<8x32xf32>
    %125 = vector.broadcast %104 : vector<1x32xf32> to vector<8x32xf32>
    %126 = arith.mulf %124, %125 : vector<8x32xf32>
    %127 = vector.broadcast %106 : vector<1x32xf32> to vector<8x32xf32>
    %128 = arith.addf %126, %127 : vector<8x32xf32>
    %129 = arith.truncf %128 : vector<8x32xf32> to vector<8x32xbf16>
    %c0_56 = arith.constant 0 : index
    %c0_57 = arith.constant 0 : index
    %130 = vector.load %arg12[%c0_56, %c0_57] : memref<32x64xbf16, #tpu.memory_space<vmem>>, vector<32x64xbf16>
    %cst_58 = arith.constant dense<0.000000e+00> : vector<8x64xf32>
    %131 = tpu.matmul %129, %130, %cst_58 {dimension_numbers = #tpu.dot_dimension_numbers<[1], [0], [0], [1], [0, 0, 1, 1], [], []>} : vector<8x32xbf16>, vector<32x64xbf16>, vector<8x64xf32> -> vector<8x64xf32>
    %c0_59 = arith.constant 0 : index
    %c0_60 = arith.constant 0 : index
    %132 = vector.load %arg13[%c0_59, %c0_60] : memref<1x64xf32, #tpu.memory_space<vmem>>, vector<1x64xf32>
    %133 = vector.broadcast %132 : vector<1x64xf32> to vector<8x64xf32>
    %134 = arith.addf %131, %133 : vector<8x64xf32>
    %135 = arith.mulf %134, %134 : vector<8x64xf32>
    %136 = arith.mulf %134, %135 : vector<8x64xf32>
    %cst_61 = arith.constant 4.471500e-02 : f32
    %137 = vector.broadcast %cst_61 : f32 to vector<8x64xf32>
    %138 = arith.mulf %137, %136 : vector<8x64xf32>
    %139 = arith.addf %134, %138 : vector<8x64xf32>
    %cst_62 = arith.constant 0.797884583 : f32
    %140 = vector.broadcast %cst_62 : f32 to vector<8x64xf32>
    %141 = arith.mulf %140, %139 : vector<8x64xf32>
    %142 = math.tanh %141 : vector<8x64xf32>
    %cst_63 = arith.constant 1.000000e+00 : f32
    %143 = vector.broadcast %cst_63 : f32 to vector<8x64xf32>
    %144 = arith.addf %143, %142 : vector<8x64xf32>
    %cst_64 = arith.constant 5.000000e-01 : f32
    %145 = vector.broadcast %cst_64 : f32 to vector<8x64xf32>
    %146 = arith.mulf %145, %144 : vector<8x64xf32>
    %147 = arith.mulf %134, %146 : vector<8x64xf32>
    %148 = arith.truncf %147 : vector<8x64xf32> to vector<8x64xbf16>
    %c0_65 = arith.constant 0 : index
    %c0_66 = arith.constant 0 : index
    %149 = vector.load %arg14[%c0_65, %c0_66] : memref<64x32xbf16, #tpu.memory_space<vmem>>, vector<64x32xbf16>
    %cst_67 = arith.constant dense<0.000000e+00> : vector<8x32xf32>
    %150 = tpu.matmul %148, %149, %cst_67 {dimension_numbers = #tpu.dot_dimension_numbers<[1], [0], [0], [1], [0, 0, 1, 1], [], []>} : vector<8x64xbf16>, vector<64x32xbf16>, vector<8x32xf32> -> vector<8x32xf32>
    %c0_68 = arith.constant 0 : index
    %c0_69 = arith.constant 0 : index
    %151 = vector.load %arg15[%c0_68, %c0_69] : memref<1x32xf32, #tpu.memory_space<vmem>>, vector<1x32xf32>
    %152 = vector.broadcast %151 : vector<1x32xf32> to vector<8x32xf32>
    %153 = arith.addf %150, %152 : vector<8x32xf32>
    %154 = arith.addf %128, %153 : vector<8x32xf32>
    %c0_70 = arith.constant 0 : index
    %c0_71 = arith.constant 0 : index
    %c0_72 = arith.constant 0 : index
    %155 = vector.load %arg16[%c0_70, %c0_71, %c0_72] : memref<2x1x32xf32, #tpu.memory_space<vmem>>, vector<1x1x32xf32>
    %156 = vector.shape_cast %155 : vector<1x1x32xf32> to vector<1x32xf32>
    %c1_73 = arith.constant 1 : index
    %c0_74 = arith.constant 0 : index
    %c0_75 = arith.constant 0 : index
    %157 = vector.load %arg16[%c1_73, %c0_74, %c0_75] : memref<2x1x32xf32, #tpu.memory_space<vmem>>, vector<1x1x32xf32>
    %158 = vector.shape_cast %157 : vector<1x1x32xf32> to vector<1x32xf32>
    %cst_76 = arith.constant dense<0.000000e+00> : vector<8xf32>
    %159 = vector.multi_reduction <add>, %154, %cst_76 [1] : vector<8x32xf32> to vector<8xf32>
    %160 = vector.shape_cast %159 : vector<8xf32> to vector<8x1xf32>
    %cst_77 = arith.constant 3.200000e+01 : f32
    %161 = vector.broadcast %cst_77 : f32 to vector<8x1xf32>
    %162 = arith.divf %160, %161 : vector<8x1xf32>
    %163 = vector.broadcast %162 : vector<8x1xf32> to vector<8x32xf32>
    %164 = arith.subf %154, %163 : vector<8x32xf32>
    %165 = arith.mulf %164, %164 : vector<8x32xf32>
    %cst_78 = arith.constant dense<0.000000e+00> : vector<8xf32>
    %166 = vector.multi_reduction <add>, %165, %cst_78 [1] : vector<8x32xf32> to vector<8xf32>
    %167 = vector.shape_cast %166 : vector<8xf32> to vector<8x1xf32>
    %cst_79 = arith.constant 3.200000e+01 : f32
    %168 = vector.broadcast %cst_79 : f32 to vector<8x1xf32>
    %169 = arith.divf %167, %168 : vector<8x1xf32>
    %170 = vector.broadcast %162 : vector<8x1xf32> to vector<8x32xf32>
    %171 = arith.subf %154, %170 : vector<8x32xf32>
    %cst_80 = arith.constant 9.99999974E-6 : f32
    %172 = vector.broadcast %cst_80 : f32 to vector<8x1xf32>
    %173 = arith.addf %169, %172 : vector<8x1xf32>
    %174 = math.rsqrt %173 : vector<8x1xf32>
    %175 = vector.broadcast %174 : vector<8x1xf32> to vector<8x32xf32>
    %176 = arith.mulf %171, %175 : vector<8x32xf32>
    %177 = vector.broadcast %156 : vector<1x32xf32> to vector<8x32xf32>
    %178 = arith.mulf %176, %177 : vector<8x32xf32>
    %179 = vector.broadcast %158 : vector<1x32xf32> to vector<8x32xf32>
    %180 = arith.addf %178, %179 : vector<8x32xf32>
    %181 = arith.truncf %180 : vector<8x32xf32> to vector<8x32xbf16>
    %c0_81 = arith.constant 0 : index
    %c0_82 = arith.constant 0 : index
    %c0_83 = arith.constant 0 : index
    %182 = vector.load %arg17[%c0_81, %c0_82, %c0_83] : memref<1x8x32xbf16, #tpu.memory_space<vmem>>, vector<1x8x32xbf16>
    %183 = vector.shape_cast %182 : vector<1x8x32xbf16> to vector<8x32xbf16>
    %184 = vector.shape_cast %181 : vector<8x32xbf16> to vector<1x8x32xbf16>
    tpu.vector_store %arg17[%c0_81, %c0_82, %c0_83], %184 {strides = array<i32>} : memref<1x8x32xbf16, #tpu.memory_space<vmem>>, vector<1x8x32xbf16>,
    return
  }
  func.func @transform_0(%arg0: i32, %arg1: i32) -> (i32, i32, i32) {
    %c0_i32 = arith.constant 0 : i32
    %c0_i32_0 = arith.constant 0 : i32
    return %arg0, %arg1, %c0_i32 : i32, i32, i32
  }
  func.func @transform_1(%arg0: i32, %arg1: i32) -> (i32, i32, i32) {
    %c0_i32 = arith.constant 0 : i32
    %c0_i32_0 = arith.constant 0 : i32
    %c0_i32_1 = arith.constant 0 : i32
    return %arg0, %c0_i32, %c0_i32_0 : i32, i32, i32
  }
  func.func @transform_2(%arg0: i32, %arg1: i32) -> (i32, i32, i32, i32) {
    %c0_i32 = arith.constant 0 : i32
    %c0_i32_0 = arith.constant 0 : i32
    %c0_i32_1 = arith.constant 0 : i32
    return %arg0, %arg1, %c0_i32, %c0_i32_0 : i32, i32, i32, i32
  }
  func.func @transform_3(%arg0: i32, %arg1: i32) -> (i32, i32, i32) {
    %c0_i32 = arith.constant 0 : i32
    %c0_i32_0 = arith.constant 0 : i32
    %c0_i32_1 = arith.constant 0 : i32
    return %arg0, %c0_i32, %c0_i32_0 : i32, i32, i32
  }
  func.func @transform_4(%arg0: i32, %arg1: i32) -> (i32, i32, i32) {
    %c0_i32 = arith.constant 0 : i32
    %c0_i32_0 = arith.constant 0 : i32
    %c0_i32_1 = arith.constant 0 : i32
    %c0_i32_2 = arith.constant 0 : i32
    return %c0_i32, %c0_i32_0, %c0_i32_1 : i32, i32, i32
  }
  func.func @transform_5(%arg0: i32, %arg1: i32) -> (i32, i32, i32) {
    %c0_i32 = arith.constant 0 : i32
    %c0_i32_0 = arith.constant 0 : i32
    %c0_i32_1 = arith.constant 0 : i32
    %c0_i32_2 = arith.constant 0 : i32
    return %c0_i32, %c0_i32_0, %c0_i32_1 : i32, i32, i32
  }
  func.func @transform_6(%arg0: i32, %arg1: i32) -> (i32, i32, i32) {
    %c0_i32 = arith.constant 0 : i32
    %c0_i32_0 = arith.constant 0 : i32
    %c0_i32_1 = arith.constant 0 : i32
    %c0_i32_2 = arith.constant 0 : i32
    return %c0_i32, %c0_i32_0, %c0_i32_1 : i32, i32, i32
  }
  func.func @transform_7(%arg0: i32, %arg1: i32) -> (i32, i32) {
    %c0_i32 = arith.constant 0 : i32
    %c0_i32_0 = arith.constant 0 : i32
    %c0_i32_1 = arith.constant 0 : i32
    return %c0_i32, %c0_i32_0 : i32, i32
  }
  func.func @transform_8(%arg0: i32, %arg1: i32) -> (i32, i32) {
    %c0_i32 = arith.constant 0 : i32
    %c0_i32_0 = arith.constant 0 : i32
    %c0_i32_1 = arith.constant 0 : i32
    return %c0_i32, %c0_i32_0 : i32, i32
  }
  func.func @transform_9(%arg0: i32, %arg1: i32) -> (i32, i32, i32) {
    %c0_i32 = arith.constant 0 : i32
    %c0_i32_0 = arith.constant 0 : i32
    %c0_i32_1 = arith.constant 0 : i32
    %c0_i32_2 = arith.constant 0 : i32
    return %c0_i32, %c0_i32_0, %c0_i32_1 : i32, i32, i32
  }
  func.func @transform_10(%arg0: i32, %arg1: i32) -> (i32, i32) {
    %c0_i32 = arith.constant 0 : i32
    %c0_i32_0 = arith.constant 0 : i32
    %c0_i32_1 = arith.constant 0 : i32
    return %c0_i32, %c0_i32_0 : i32, i32
  }
  func.func @transform_11(%arg0: i32, %arg1: i32) -> (i32, i32) {
    %c0_i32 = arith.constant 0 : i32
    %c0_i32_0 = arith.constant 0 : i32
    %c0_i32_1 = arith.constant 0 : i32
    return %c0_i32, %c0_i32_0 : i32, i32
  }
  func.func @transform_12(%arg0: i32, %arg1: i32) -> (i32, i32) {
    %c0_i32 = arith.constant 0 : i32
    %c0_i32_0 = arith.constant 0 : i32
    %c0_i32_1 = arith.constant 0 : i32
    return %c0_i32, %c0_i32_0 : i32, i32
  }
  func.func @transform_13(%arg0: i32, %arg1: i32) -> (i32, i32) {
    %c0_i32 = arith.constant 0 : i32
    %c0_i32_0 = arith.constant 0 : i32
    %c0_i32_1 = arith.constant 0 : i32
    return %c0_i32, %c0_i32_0 : i32, i32
  }
  func.func @transform_14(%arg0: i32, %arg1: i32) -> (i32, i32, i32) {
    %c0_i32 = arith.constant 0 : i32
    %c0_i32_0 = arith.constant 0 : i32
    %c0_i32_1 = arith.constant 0 : i32
    %c0_i32_2 = arith.constant 0 : i32
    return %c0_i32, %c0_i32_0, %c0_i32_1 : i32, i32, i32
  }
  func.func @transform_15(%arg0: i32, %arg1: i32) -> (i32, i32, i32) {
    %c0_i32 = arith.constant 0 : i32
    %c0_i32_0 = arith.constant 0 : i32
    return %arg0, %arg1, %c0_i32 : i32, i32, i32
  }
}

</mosaic_0001>

<llo_original>
// kernel: tpu_custom_call.1
$region0: #{tpu_custom_call.1}
  #allocation0 [shape = 'u32[]', space=smem, size = 0x4, offset = 0x4, fixed_abs, tag = 'smem constant byte address 0x4 - core index']
  #allocation1 [shape = 'u32[144,128]{1,0:T(1,128)}', space=vmem, size = 0x12000, scoped, tag = 'internal scratch']
  %s0 = inlined_call_operand.vmem [shape: bf16[2,8,32], index: 0, kind: input, shape index: {}]
  %s1 = inlined_call_operand.vmem [shape: bf16[2,12,32], index: 1, kind: input, shape index: {}]
  %s2 = inlined_call_operand.vmem [shape: bf16[2,8,12,32], index: 2, kind: input, shape index: {}]
  %s3 = inlined_call_operand.vmem [shape: f32[2,1,12], index: 3, kind: input, shape index: {}]
  %s4 = inlined_call_operand.vmem [shape: bf16[3,32,32], index: 4, kind: input, shape index: {}]
  %s5 = inlined_call_operand.vmem [shape: f32[3,1,32], index: 5, kind: input, shape index: {}]
  %s6 = inlined_call_operand.vmem [shape: bf16[4,32,8], index: 6, kind: input, shape index: {}]
  %s7 = inlined_call_operand.vmem [shape: bf16[32,32], index: 7, kind: input, shape index: {}]
  %s8 = inlined_call_operand.vmem [shape: f32[1,32], index: 8, kind: input, shape index: {}]
  %s9 = inlined_call_operand.vmem [shape: f32[2,1,32], index: 9, kind: input, shape index: {}]
  %s10 = inlined_call_operand.vmem [shape: bf16[32,64], index: 10, kind: input, shape index: {}]
  %s11 = inlined_call_operand.vmem [shape: f32[1,64], index: 11, kind: input, shape index: {}]
  %s12 = inlined_call_operand.vmem [shape: bf16[64,32], index: 12, kind: input, shape index: {}]
  %s13 = inlined_call_operand.vmem [shape: f32[1,32], index: 13, kind: input, shape index: {}]
  %s14 = inlined_call_operand.vmem [shape: f32[2,1,32], index: 14, kind: input, shape index: {}]
  %s15 = inlined_call_operand.hbm [shape: bf16[2,8,32], index: 15, kind: output, shape index: {}]
  %s16 = sld [smem:[#allocation0]]
  $region93: #{tpu_custom_call.1} parent=0
    _
  %s18 = ssub.s32 1, %s16
  %s19 = scalar_select 0, %s18, %s16
  $region1: #{tpu_custom_call.1} parent=0
    #allocation2 [shape = 'u8[4096]{0}', space=vmem, size = 0x1000, scoped, tag = 'output window, operand 0']
    #allocation3 [shape = 's32[2]{0}', space=sflag, size = 0x8, scoped, tag = 'scoped memory for tpu_custom_call.1']
    %20 = vsyncpa [#allocation3], 0
    %s21 = scalar_lea.sflag [#allocation3], 1
    %22 = vsyncpa %s21, 0
    loop: start=0, step=1, limit=4
    $region2: #{tpu_custom_call.1} parent=1 // loop_pre_header
      _
    $region3: #{tpu_custom_call.1} parent=1 // loop_header
      %s24 = sphi 0, %s28
      %p25 = scmp.ge.s32.totalorder %s24, 4
      %s31 = sphi 0, %s43
      %s32 = sphi 0, %s39
      %s33 = sphi 0, %s31
      %s34 = sphi 0, %s32
      %s35 = sphi 0, %s33
      %s36 = sphi 0, %s34
      %s48 = sphi 0, %s50
      %s51 = sphi 0, %s48
      %s52 = sphi 0, %s51
      %s68 = sphi 0, %s52
      %s74 = sphi 0, %s76
      %s77 = sphi 0, %s74
      %s78 = sphi 0, %s77
      %s94 = sphi 0, %s78
      %s102 = sphi 0, %s104
      %s105 = sphi 0, %s102
      %s106 = sphi 0, %s105
      %s122 = sphi 0, %s106
      %s128 = sphi 0, %s130
      %s131 = sphi 0, %s128
      %s132 = sphi 0, %s131
      %s148 = sphi 0, %s132
      %s152 = sphi 0, %s152
      %s154 = sphi 0, %s152
      %s155 = sphi 0, %s154
      %s169 = sphi 0, %s155
      %s173 = sphi 0, %s173
      %s175 = sphi 0, %s173
      %s176 = sphi 0, %s175
      %s190 = sphi 0, %s176
      %s194 = sphi 0, %s194
      %s196 = sphi 0, %s194
      %s197 = sphi 0, %s196
      %s211 = sphi 0, %s197
      %s215 = sphi 0, %s215
      %s217 = sphi 0, %s215
      %s218 = sphi 0, %s217
      %s232 = sphi 0, %s218
      %s236 = sphi 0, %s236
      %s238 = sphi 0, %s236
      %s239 = sphi 0, %s238
      %s253 = sphi 0, %s239
      %s257 = sphi 0, %s257
      %s259 = sphi 0, %s257
      %s260 = sphi 0, %s259
      %s274 = sphi 0, %s260
      %s278 = sphi 0, %s278
      %s280 = sphi 0, %s278
      %s281 = sphi 0, %s280
      %s295 = sphi 0, %s281
      %s299 = sphi 0, %s299
      %s301 = sphi 0, %s299
      %s302 = sphi 0, %s301
      %s316 = sphi 0, %s302
      %s320 = sphi 0, %s320
      %s322 = sphi 0, %s320
      %s323 = sphi 0, %s322
      %s337 = sphi 0, %s323
      %s341 = sphi 0, %s341
      %s343 = sphi 0, %s341
      %s344 = sphi 0, %s343
      %s358 = sphi 0, %s344
      %s362 = sphi 0, %s362
      %s364 = sphi 0, %s362
      %s365 = sphi 0, %s364
      %s379 = sphi 0, %s365
      %s387 = sphi 0, %s389
      %s390 = sphi 0, %s387
      %s391 = sphi 0, %s390
      %s407 = sphi 0, %s391
    $region4: #{tpu_custom_call.1} parent=1 // loop_header_branch
      %27 = sbr.rel (%p25) target = $region8
    $region5: #{tpu_custom_call.1} parent=1 // loop_body
      %s29 = ssub.s32 %s24, 1
      %s30 = ssub.s32 %s24, 2
      %s37 = sadd.s32 1, %s32
      %p38 = scmp.ge.s32.totalorder %s37, 1
      %s39 = scalar_select %p38, 0, %s37
      %s40 = sadd.s32 1, %s31
      %s41 = scalar_select %p38, %s40, %s31
      %p42 = scmp.ge.s32.totalorder %s41, 2
      %s43 = scalar_select %p42, 0, %s41
      %s44 = ssub.s32 %s31, %s43
      %s45 = ssub.s32 %s32, %s39
      %s46 = sor.u32 %s44, %s45
      %p47 = scmp.eq.s32.totalorder %s46, 0
      %s49 = sadd.s32 %s48, 1
      %s50 = scalar_select %p47, %s48, %s49
      %p53 = pneg %p47
      %p54 = scmp.eq.s32.totalorder %s24, 1
      %p55 = por %p53, %p54
      %p56 = scmp.ne.s32.totalorder %s48, %s51
      %p57 = scmp.eq.s32.totalorder %s24, 0
      %p58 = por %p56, %p57
      %p59 = scmp.ne.s32.totalorder %s48, %s51
      %p60 = scmp.eq.s32.totalorder %s29, 1
      %p61 = por %p59, %p60
      %p62 = scmp.ne.s32.totalorder %s51, %s52
      %p63 = scmp.eq.s32.totalorder %s29, 0
      %p64 = por %p62, %p63
      %p65 = scmp.ne.s32.totalorder %s51, %s52
      %p66 = scmp.eq.s32.totalorder %s30, 1
      %p67 = por %p65, %p66
      %p69 = scmp.ne.s32.totalorder %s52, %s68
      %p70 = scmp.eq.s32.totalorder %s30, 0
      %p71 = por %p69, %p70
      %s72 = ssub.s32 %s31, %s43
      %p73 = scmp.eq.s32.totalorder %s72, 0
      %s75 = sadd.s32 %s74, 1
      %s76 = scalar_select %p73, %s74, %s75
      %p79 = pneg %p73
      %p80 = scmp.eq.s32.totalorder %s24, 1
      %p81 = por %p79, %p80
      %p82 = scmp.ne.s32.totalorder %s74, %s77
      %p83 = scmp.eq.s32.totalorder %s24, 0
      %p84 = por %p82, %p83
      %p85 = scmp.ne.s32.totalorder %s74, %s77
      %p86 = scmp.eq.s32.totalorder %s29, 1
      %p87 = por %p85, %p86
      %p88 = scmp.ne.s32.totalorder %s77, %s78
      %p89 = scmp.eq.s32.totalorder %s29, 0
      %p90 = por %p88, %p89
      %p91 = scmp.ne.s32.totalorder %s77, %s78
      %p92 = scmp.eq.s32.totalorder %s30, 1
      %p93 = por %p91, %p92
      %p95 = scmp.ne.s32.totalorder %s78, %s94
      %p96 = scmp.eq.s32.totalorder %s30, 0
      %p97 = por %p95, %p96
      %s98 = ssub.s32 %s31, %s43
      %s99 = ssub.s32 %s32, %s39
      %s100 = sor.u32 %s98, %s99
      %p101 = scmp.eq.s32.totalorder %s100, 0
      %s103 = sadd.s32 %s102, 1
      %s104 = scalar_select %p101, %s102, %s103
      %p107 = pneg %p101
      %p108 = scmp.eq.s32.totalorder %s24, 1
      %p109 = por %p107, %p108
      %p110 = scmp.ne.s32.totalorder %s102, %s105
      %p111 = scmp.eq.s32.totalorder %s24, 0
      %p112 = por %p110, %p111
      %p113 = scmp.ne.s32.totalorder %s102, %s105
      %p114 = scmp.eq.s32.totalorder %s29, 1
      %p115 = por %p113, %p114
      %p116 = scmp.ne.s32.totalorder %s105, %s106
      %p117 = scmp.eq.s32.totalorder %s29, 0
      %p118 = por %p116, %p117
      %p119 = scmp.ne.s32.totalorder %s105, %s106
      %p120 = scmp.eq.s32.totalorder %s30, 1
      %p121 = por %p119, %p120
      %p123 = scmp.ne.s32.totalorder %s106, %s122
      %p124 = scmp.eq.s32.totalorder %s30, 0
      %p125 = por %p123, %p124
      %s126 = ssub.s32 %s31, %s43
      %p127 = scmp.eq.s32.totalorder %s126, 0
      %s129 = sadd.s32 %s128, 1
      %s130 = scalar_select %p127, %s128, %s129
      %p133 = pneg %p127
      %p134 = scmp.eq.s32.totalorder %s24, 1
      %p135 = por %p133, %p134
      %p136 = scmp.ne.s32.totalorder %s128, %s131
      %p137 = scmp.eq.s32.totalorder %s24, 0
      %p138 = por %p136, %p137
      %p139 = scmp.ne.s32.totalorder %s128, %s131
      %p140 = scmp.eq.s32.totalorder %s29, 1
      %p141 = por %p139, %p140
      %p142 = scmp.ne.s32.totalorder %s131, %s132
      %p143 = scmp.eq.s32.totalorder %s29, 0
      %p144 = por %p142, %p143
      %p145 = scmp.ne.s32.totalorder %s131, %s132
      %p146 = scmp.eq.s32.totalorder %s30, 1
      %p147 = por %p145, %p146
      %p149 = scmp.ne.s32.totalorder %s132, %s148
      %p150 = scmp.eq.s32.totalorder %s30, 0
      %p151 = por %p149, %p150
      %s153 = sadd.s32 %s152, 1
      %p156 = scmp.eq.s32.totalorder %s24, 1
      %p157 = scmp.ne.s32.totalorder %s152, %s154
      %p158 = scmp.eq.s32.totalorder %s24, 0
      %p159 = por %p157, %p158
      %p160 = scmp.ne.s32.totalorder %s152, %s154
      %p161 = scmp.eq.s32.totalorder %s29, 1
      %p162 = por %p160, %p161
      %p163 = scmp.ne.s32.totalorder %s154, %s155
      %p164 = scmp.eq.s32.totalorder %s29, 0
      %p165 = por %p163, %p164
      %p166 = scmp.ne.s32.totalorder %s154, %s155
      %p167 = scmp.eq.s32.totalorder %s30, 1
      %p168 = por %p166, %p167
      %p170 = scmp.ne.s32.totalorder %s155, %s169
      %p171 = scmp.eq.s32.totalorder %s30, 0
      %p172 = por %p170, %p171
      %s174 = sadd.s32 %s173, 1
      %p177 = scmp.eq.s32.totalorder %s24, 1
      %p178 = scmp.ne.s32.totalorder %s173, %s175
      %p179 = scmp.eq.s32.totalorder %s24, 0
      %p180 = por %p178, %p179
      %p181 = scmp.ne.s32.totalorder %s173, %s175
      %p182 = scmp.eq.s32.totalorder %s29, 1
      %p183 = por %p181, %p182
      %p184 = scmp.ne.s32.totalorder %s175, %s176
      %p185 = scmp.eq.s32.totalorder %s29, 0
      %p186 = por %p184, %p185
      %p187 = scmp.ne.s32.totalorder %s175, %s176
      %p188 = scmp.eq.s32.totalorder %s30, 1
      %p189 = por %p187, %p188
      %p191 = scmp.ne.s32.totalorder %s176, %s190
      %p192 = scmp.eq.s32.totalorder %s30, 0
      %p193 = por %p191, %p192
      %s195 = sadd.s32 %s194, 1
      %p198 = scmp.eq.s32.totalorder %s24, 1
      %p199 = scmp.ne.s32.totalorder %s194, %s196
      %p200 = scmp.eq.s32.totalorder %s24, 0
      %p201 = por %p199, %p200
      %p202 = scmp.ne.s32.totalorder %s194, %s196
      %p203 = scmp.eq.s32.totalorder %s29, 1
      %p204 = por %p202, %p203
      %p205 = scmp.ne.s32.totalorder %s196, %s197
      %p206 = scmp.eq.s32.totalorder %s29, 0
      %p207 = por %p205, %p206
      %p208 = scmp.ne.s32.totalorder %s196, %s197
      %p209 = scmp.eq.s32.totalorder %s30, 1
      %p210 = por %p208, %p209
      %p212 = scmp.ne.s32.totalorder %s197, %s211
      %p213 = scmp.eq.s32.totalorder %s30, 0
      %p214 = por %p212, %p213
      %s216 = sadd.s32 %s215, 1
      %p219 = scmp.eq.s32.totalorder %s24, 1
      %p220 = scmp.ne.s32.totalorder %s215, %s217
      %p221 = scmp.eq.s32.totalorder %s24, 0
      %p222 = por %p220, %p221
      %p223 = scmp.ne.s32.totalorder %s215, %s217
      %p224 = scmp.eq.s32.totalorder %s29, 1
      %p225 = por %p223, %p224
      %p226 = scmp.ne.s32.totalorder %s217, %s218
      %p227 = scmp.eq.s32.totalorder %s29, 0
      %p228 = por %p226, %p227
      %p229 = scmp.ne.s32.totalorder %s217, %s218
      %p230 = scmp.eq.s32.totalorder %s30, 1
      %p231 = por %p229, %p230
      %p233 = scmp.ne.s32.totalorder %s218, %s232
      %p234 = scmp.eq.s32.totalorder %s30, 0
      %p235 = por %p233, %p234
      %s237 = sadd.s32 %s236, 1
      %p240 = scmp.eq.s32.totalorder %s24, 1
      %p241 = scmp.ne.s32.totalorder %s236, %s238
      %p242 = scmp.eq.s32.totalorder %s24, 0
      %p243 = por %p241, %p242
      %p244 = scmp.ne.s32.totalorder %s236, %s238
      %p245 = scmp.eq.s32.totalorder %s29, 1
      %p246 = por %p244, %p245
      %p247 = scmp.ne.s32.totalorder %s238, %s239
      %p248 = scmp.eq.s32.totalorder %s29, 0
      %p249 = por %p247, %p248
      %p250 = scmp.ne.s32.totalorder %s238, %s239
      %p251 = scmp.eq.s32.totalorder %s30, 1
      %p252 = por %p250, %p251
      %p254 = scmp.ne.s32.totalorder %s239, %s253
      %p255 = scmp.eq.s32.totalorder %s30, 0
      %p256 = por %p254, %p255
      %s258 = sadd.s32 %s257, 1
      %p261 = scmp.eq.s32.totalorder %s24, 1
      %p262 = scmp.ne.s32.totalorder %s257, %s259
      %p263 = scmp.eq.s32.totalorder %s24, 0
      %p264 = por %p262, %p263
      %p265 = scmp.ne.s32.totalorder %s257, %s259
      %p266 = scmp.eq.s32.totalorder %s29, 1
      %p267 = por %p265, %p266
      %p268 = scmp.ne.s32.totalorder %s259, %s260
      %p269 = scmp.eq.s32.totalorder %s29, 0
      %p270 = por %p268, %p269
      %p271 = scmp.ne.s32.totalorder %s259, %s260
      %p272 = scmp.eq.s32.totalorder %s30, 1
      %p273 = por %p271, %p272
      %p275 = scmp.ne.s32.totalorder %s260, %s274
      %p276 = scmp.eq.s32.totalorder %s30, 0
      %p277 = por %p275, %p276
      %s279 = sadd.s32 %s278, 1
      %p282 = scmp.eq.s32.totalorder %s24, 1
      %p283 = scmp.ne.s32.totalorder %s278, %s280
      %p284 = scmp.eq.s32.totalorder %s24, 0
      %p285 = por %p283, %p284
      %p286 = scmp.ne.s32.totalorder %s278, %s280
      %p287 = scmp.eq.s32.totalorder %s29, 1
      %p288 = por %p286, %p287
      %p289 = scmp.ne.s32.totalorder %s280, %s281
      %p290 = scmp.eq.s32.totalorder %s29, 0
      %p291 = por %p289, %p290
      %p292 = scmp.ne.s32.totalorder %s280, %s281
      %p293 = scmp.eq.s32.totalorder %s30, 1
      %p294 = por %p292, %p293
      %p296 = scmp.ne.s32.totalorder %s281, %s295
      %p297 = scmp.eq.s32.totalorder %s30, 0
      %p298 = por %p296, %p297
      %s300 = sadd.s32 %s299, 1
      %p303 = scmp.eq.s32.totalorder %s24, 1
      %p304 = scmp.ne.s32.totalorder %s299, %s301
      %p305 = scmp.eq.s32.totalorder %s24, 0
      %p306 = por %p304, %p305
      %p307 = scmp.ne.s32.totalorder %s299, %s301
      %p308 = scmp.eq.s32.totalorder %s29, 1
      %p309 = por %p307, %p308
      %p310 = scmp.ne.s32.totalorder %s301, %s302
      %p311 = scmp.eq.s32.totalorder %s29, 0
      %p312 = por %p310, %p311
      %p313 = scmp.ne.s32.totalorder %s301, %s302
      %p314 = scmp.eq.s32.totalorder %s30, 1
      %p315 = por %p313, %p314
      %p317 = scmp.ne.s32.totalorder %s302, %s316
      %p318 = scmp.eq.s32.totalorder %s30, 0
      %p319 = por %p317, %p318
      %s321 = sadd.s32 %s320, 1
      %p324 = scmp.eq.s32.totalorder %s24, 1
      %p325 = scmp.ne.s32.totalorder %s320, %s322
      %p326 = scmp.eq.s32.totalorder %s24, 0
      %p327 = por %p325, %p326
      %p328 = scmp.ne.s32.totalorder %s320, %s322
      %p329 = scmp.eq.s32.totalorder %s29, 1
      %p330 = por %p328, %p329
      %p331 = scmp.ne.s32.totalorder %s322, %s323
      %p332 = scmp.eq.s32.totalorder %s29, 0
      %p333 = por %p331, %p332
      %p334 = scmp.ne.s32.totalorder %s322, %s323
      %p335 = scmp.eq.s32.totalorder %s30, 1
      %p336 = por %p334, %p335
      %p338 = scmp.ne.s32.totalorder %s323, %s337
      %p339 = scmp.eq.s32.totalorder %s30, 0
      %p340 = por %p338, %p339
      %s342 = sadd.s32 %s341, 1
      %p345 = scmp.eq.s32.totalorder %s24, 1
      %p346 = scmp.ne.s32.totalorder %s341, %s343
      %p347 = scmp.eq.s32.totalorder %s24, 0
      %p348 = por %p346, %p347
      %p349 = scmp.ne.s32.totalorder %s341, %s343
      %p350 = scmp.eq.s32.totalorder %s29, 1
      %p351 = por %p349, %p350
      %p352 = scmp.ne.s32.totalorder %s343, %s344
      %p353 = scmp.eq.s32.totalorder %s29, 0
      %p354 = por %p352, %p353
      %p355 = scmp.ne.s32.totalorder %s343, %s344
      %p356 = scmp.eq.s32.totalorder %s30, 1
      %p357 = por %p355, %p356
      %p359 = scmp.ne.s32.totalorder %s344, %s358
      %p360 = scmp.eq.s32.totalorder %s30, 0
      %p361 = por %p359, %p360
      %s363 = sadd.s32 %s362, 1
      %p366 = scmp.eq.s32.totalorder %s24, 1
      %p367 = scmp.ne.s32.totalorder %s362, %s364
      %p368 = scmp.eq.s32.totalorder %s24, 0
      %p369 = por %p367, %p368
      %p370 = scmp.ne.s32.totalorder %s362, %s364
      %p371 = scmp.eq.s32.totalorder %s29, 1
      %p372 = por %p370, %p371
      %p373 = scmp.ne.s32.totalorder %s364, %s365
      %p374 = scmp.eq.s32.totalorder %s29, 0
      %p375 = por %p373, %p374
      %p376 = scmp.ne.s32.totalorder %s364, %s365
      %p377 = scmp.eq.s32.totalorder %s30, 1
      %p378 = por %p376, %p377
      %p380 = scmp.ne.s32.totalorder %s365, %s379
      %p381 = scmp.eq.s32.totalorder %s30, 0
      %p382 = por %p380, %p381
      %s383 = ssub.s32 %s31, %s43
      %s384 = ssub.s32 %s32, %s39
      %s385 = sor.u32 %s383, %s384
      %p386 = scmp.eq.s32.totalorder %s385, 0
      %s388 = sadd.s32 %s387, 1
      %s389 = scalar_select %p386, %s387, %s388
      %p392 = pneg %p386
      %p393 = scmp.eq.s32.totalorder %s24, 1
      %p394 = por %p392, %p393
      %p395 = scmp.ne.s32.totalorder %s387, %s390
      %p396 = scmp.eq.s32.totalorder %s24, 0
      %p397 = por %p395, %p396
      %p398 = scmp.ne.s32.totalorder %s387, %s390
      %p399 = scmp.eq.s32.totalorder %s29, 1
      %p400 = por %p398, %p399
      %p401 = scmp.ne.s32.totalorder %s390, %s391
      %p402 = scmp.eq.s32.totalorder %s29, 0
      %p403 = por %p401, %p402
      %p404 = scmp.ne.s32.totalorder %s390, %s391
      %p405 = scmp.eq.s32.totalorder %s30, 1
      %p406 = por %p404, %p405
      %p408 = scmp.ne.s32.totalorder %s391, %s407
      %p409 = scmp.eq.s32.totalorder %s30, 0
      %p410 = por %p408, %p409
      %p411 = scmp.le.s32.totalorder 1, %s24
      %p412 = scmp.lt.s32.totalorder %s24, 3
      %p413 = pnand %p411, %p412
      %p414 = pneg %p413
      // Predicated region
      $region9: #{tpu_custom_call.1} parent=5 // pred_check
        _
      $region10: #{tpu_custom_call.1} parent=5 // pred_check_branch
        %416 = sbr.rel (%p413) target = $region12
      $region11: #{tpu_custom_call.1} parent=5 // pred_region
        %s417 = ssub.s32 %s24, 1
        // Predicated region
        $region13: #{tpu_custom_call.1} parent=11 // pred_check
          %p418 = pneg %p165
        $region14: #{tpu_custom_call.1} parent=11 // pred_check_branch
          %420 = sbr.rel (%p418) target = $region16
        $region15: #{tpu_custom_call.1} parent=11 // pred_region
          _
        $region16: #{tpu_custom_call.1} parent=11 // pred_fallthru
          _
        // Predicated region
        $region17: #{tpu_custom_call.1} parent=11 // pred_check
          %p421 = pneg %p186
        $region18: #{tpu_custom_call.1} parent=11 // pred_check_branch
          %423 = sbr.rel (%p421) target = $region20
        $region19: #{tpu_custom_call.1} parent=11 // pred_region
          _
        $region20: #{tpu_custom_call.1} parent=11 // pred_fallthru
          _
        // Predicated region
        $region21: #{tpu_custom_call.1} parent=11 // pred_check
          %p424 = pneg %p207
        $region22: #{tpu_custom_call.1} parent=11 // pred_check_branch
          %426 = sbr.rel (%p424) target = $region24
        $region23: #{tpu_custom_call.1} parent=11 // pred_region
          _
        $region24: #{tpu_custom_call.1} parent=11 // pred_fallthru
          _
        // Predicated region
        $region25: #{tpu_custom_call.1} parent=11 // pred_check
          %p427 = pneg %p228
        $region26: #{tpu_custom_call.1} parent=11 // pred_check_branch
          %429 = sbr.rel (%p427) target = $region28
        $region27: #{tpu_custom_call.1} parent=11 // pred_region
          _
        $region28: #{tpu_custom_call.1} parent=11 // pred_fallthru
          _
        // Predicated region
        $region29: #{tpu_custom_call.1} parent=11 // pred_check
          %p430 = pneg %p249
        $region30: #{tpu_custom_call.1} parent=11 // pred_check_branch
          %432 = sbr.rel (%p430) target = $region32
        $region31: #{tpu_custom_call.1} parent=11 // pred_region
          _
        $region32: #{tpu_custom_call.1} parent=11 // pred_fallthru
          _
        // Predicated region
        $region33: #{tpu_custom_call.1} parent=11 // pred_check
          %p433 = pneg %p270
        $region34: #{tpu_custom_call.1} parent=11 // pred_check_branch
          %435 = sbr.rel (%p433) target = $region36
        $region35: #{tpu_custom_call.1} parent=11 // pred_region
          _
        $region36: #{tpu_custom_call.1} parent=11 // pred_fallthru
          _
        // Predicated region
        $region37: #{tpu_custom_call.1} parent=11 // pred_check
          %p436 = pneg %p291
        $region38: #{tpu_custom_call.1} parent=11 // pred_check_branch
          %438 = sbr.rel (%p436) target = $region40
        $region39: #{tpu_custom_call.1} parent=11 // pred_region
          _
        $region40: #{tpu_custom_call.1} parent=11 // pred_fallthru
          _
        // Predicated region
        $region41: #{tpu_custom_call.1} parent=11 // pred_check
          %p439 = pneg %p312
        $region42: #{tpu_custom_call.1} parent=11 // pred_check_branch
          %441 = sbr.rel (%p439) target = $region44
        $region43: #{tpu_custom_call.1} parent=11 // pred_region
          _
        $region44: #{tpu_custom_call.1} parent=11 // pred_fallthru
          _
        // Predicated region
        $region45: #{tpu_custom_call.1} parent=11 // pred_check
          %p442 = pneg %p333
        $region46: #{tpu_custom_call.1} parent=11 // pred_check_branch
          %444 = sbr.rel (%p442) target = $region48
        $region47: #{tpu_custom_call.1} parent=11 // pred_region
          _
        $region48: #{tpu_custom_call.1} parent=11 // pred_fallthru
          _
        // Predicated region
        $region49: #{tpu_custom_call.1} parent=11 // pred_check
          %p445 = pneg %p354
        $region50: #{tpu_custom_call.1} parent=11 // pred_check_branch
          %447 = sbr.rel (%p445) target = $region52
        $region51: #{tpu_custom_call.1} parent=11 // pred_region
          _
        $region52: #{tpu_custom_call.1} parent=11 // pred_fallthru
          _
        // Predicated region
        $region53: #{tpu_custom_call.1} parent=11 // pred_check
          %p448 = pneg %p375
        $region54: #{tpu_custom_call.1} parent=11 // pred_check_branch
          %450 = sbr.rel (%p448) target = $region56
        $region55: #{tpu_custom_call.1} parent=11 // pred_region
          _
        $region56: #{tpu_custom_call.1} parent=11 // pred_fallthru
          _
      $region12: #{tpu_custom_call.1} parent=5 // pred_fallthru
        _
      %p451 = scmp.lt.s32.totalorder %s24, 2
      // Predicated region
      $region57: #{tpu_custom_call.1} parent=5 // pred_check
        %p452 = pneg %p451
      $region58: #{tpu_custom_call.1} parent=5 // pred_check_branch
        %454 = sbr.rel (%p452) target = $region60
      $region59: #{tpu_custom_call.1} parent=5 // pred_region
        // Predicated region
        $region61: #{tpu_custom_call.1} parent=59 // pred_check
          %p455 = pneg %p58
        $region62: #{tpu_custom_call.1} parent=59 // pred_check_branch
          %457 = sbr.rel (%p455) target = $region64
        $region63: #{tpu_custom_call.1} parent=59 // pred_region
          %p458 = scmp.lt.s32.totalorder %s31, 1
          %s459 = scalar_select %p458, %s31, 1
          %p460 = scmp.lt.s32.totalorder %s32, 0
          %s461 = scalar_select %p460, %s32, 0
          %s462 = sadd.s32 %s461, %s459
          %s463 = smul.addr %s462, 4
          %s464 = scalar_lea.vmem %s0, %s463
        $region64: #{tpu_custom_call.1} parent=59 // pred_fallthru
          _
        // Predicated region
        $region65: #{tpu_custom_call.1} parent=59 // pred_check
          %p465 = pneg %p84
        $region66: #{tpu_custom_call.1} parent=59 // pred_check_branch
          %467 = sbr.rel (%p465) target = $region68
        $region67: #{tpu_custom_call.1} parent=59 // pred_region
          %p468 = scmp.lt.s32.totalorder %s31, 1
          %s469 = scalar_select %p468, %s31, 1
          %s470 = smul.addr %s469, 2
          %s471 = smul.addr %s470, 4
          %s472 = scalar_lea.vmem %s1, %s471
        $region68: #{tpu_custom_call.1} parent=59 // pred_fallthru
          _
        // Predicated region
        $region69: #{tpu_custom_call.1} parent=59 // pred_check
          %p473 = pneg %p112
        $region70: #{tpu_custom_call.1} parent=59 // pred_check_branch
          %475 = sbr.rel (%p473) target = $region72
        $region71: #{tpu_custom_call.1} parent=59 // pred_region
          %s476 = smul.u32 8, %s32
          %p477 = scmp.lt.s32.totalorder %s31, 1
          %s478 = scalar_select %p477, %s31, 1
          %p479 = scmp.lt.s32.totalorder %s476, 7
          %s480 = scalar_select %p479, %s476, 7
          %s481 = smul.addr %s480, 2
          %s482 = smul.addr %s478, 16
          %s483 = sadd.s32 %s481, %s482
          %s484 = smul.addr %s483, 4
          %s485 = scalar_lea.vmem %s2, %s484
          %s486 = smul.u32 8, %s32
        $region72: #{tpu_custom_call.1} parent=59 // pred_fallthru
          _
        // Predicated region
        $region73: #{tpu_custom_call.1} parent=59 // pred_check
          %p487 = pneg %p138
        $region74: #{tpu_custom_call.1} parent=59 // pred_check_branch
          %489 = sbr.rel (%p487) target = $region76
        $region75: #{tpu_custom_call.1} parent=59 // pred_region
          %p490 = scmp.lt.s32.totalorder %s31, 1
          %s491 = scalar_select %p490, %s31, 1
          %s492 = scalar_lea.vmem %s3, %s491
        $region76: #{tpu_custom_call.1} parent=59 // pred_fallthru
          _
      $region60: #{tpu_custom_call.1} parent=5 // pred_fallthru
        _
      %p493 = scmp.le.s32.totalorder 1, %s24
      %p494 = scmp.lt.s32.totalorder %s24, 3
      %p495 = pnand %p493, %p494
      %p496 = pneg %p495
      // Predicated region
      $region77: #{tpu_custom_call.1} parent=5 // pred_check
        _
      $region78: #{tpu_custom_call.1} parent=5 // pred_check_branch
        %498 = sbr.rel (%p495) target = $region80
      $region79: #{tpu_custom_call.1} parent=5 // pred_region
        %s499 = ssub.s32 %s24, 1
        %p500 = scmp.lt.s32.totalorder %s33, 1
        %s501 = scalar_select %p500, %s33, 1
        %p502 = scmp.lt.s32.totalorder %s34, 0
        %s503 = scalar_select %p502, %s34, 0
        %s504 = sadd.s32 %s503, %s501
        %s505 = smul.addr %s504, 4
        %s506 = scalar_lea.vmem %s0, %s505
        %p507 = pneg %p64
        %p508 = pneg %p61
        %p509 = scmp.lt.s32.totalorder %s33, 1
        %s510 = scalar_select %p509, %s33, 1
        %s511 = smul.addr %s510, 2
        %s512 = smul.addr %s511, 4
        %s513 = scalar_lea.vmem %s1, %s512
        %p514 = pneg %p90
        %p515 = pneg %p87
        %s516 = smul.u32 8, %s34
        %p517 = scmp.lt.s32.totalorder %s33, 1
        %s518 = scalar_select %p517, %s33, 1
        %p519 = scmp.lt.s32.totalorder %s516, 7
        %s520 = scalar_select %p519, %s516, 7
        %s521 = smul.addr %s520, 2
        %s522 = smul.addr %s518, 16
        %s523 = sadd.s32 %s521, %s522
        %s524 = smul.addr %s523, 4
        %s525 = scalar_lea.vmem %s2, %s524
        %p526 = pneg %p118
        %p527 = pneg %p115
        %p528 = scmp.lt.s32.totalorder %s33, 1
        %s529 = scalar_select %p528, %s33, 1
        %s530 = scalar_lea.vmem %s3, %s529
        %p531 = pneg %p144
        %p532 = pneg %p141
        %p533 = pneg %p165
        %p534 = pneg %p162
        %p535 = pneg %p186
        %p536 = pneg %p183
        %p537 = pneg %p207
        %p538 = pneg %p204
        %p539 = pneg %p228
        %p540 = pneg %p225
        %p541 = pneg %p249
        %p542 = pneg %p246
        %p543 = pneg %p270
        %p544 = pneg %p267
        %p545 = pneg %p291
        %p546 = pneg %p288
        %p547 = pneg %p312
        %p548 = pneg %p309
        %p549 = pneg %p333
        %p550 = pneg %p330
        %p551 = pneg %p354
        %p552 = pneg %p351
        %p553 = pneg %p375
        %p554 = pneg %p372
        %p555 = pneg %p403
        %p556 = pneg %p400
        %s557 = sand.u32 %s390, 1
        %s558 = scalar_lea.sflag [#allocation3], %s557
        %s559 = sand.u32 %s390, 1
        %s560 = smul.addr %s559, 4
        %s561 = scalar_lea.vmem [#allocation2], %s560
        %p562 = scmp.lt.s32.totalorder %s33, 1
        %s563 = scalar_select %p562, %s33, 1
        %p564 = scmp.lt.s32.totalorder %s34, 0
        %s565 = scalar_select %p564, %s34, 0
        %s566 = sadd.s32 %s565, %s563
        %s567 = smul.addr %s566, 4
        %s568 = scalar_lea.vmem %s0, %s567
        %p569 = scmp.lt.s32.totalorder %s33, 1
        %s570 = scalar_select %p569, %s33, 1
        %s571 = smul.addr %s570, 2
        %s572 = smul.addr %s571, 4
        %s573 = scalar_lea.vmem %s1, %s572
        %s574 = smul.u32 8, %s34
        %p575 = scmp.lt.s32.totalorder %s33, 1
        %s576 = scalar_select %p575, %s33, 1
        %p577 = scmp.lt.s32.totalorder %s574, 7
        %s578 = scalar_select %p577, %s574, 7
        %s579 = smul.addr %s578, 2
        %s580 = smul.addr %s576, 16
        %s581 = sadd.s32 %s579, %s580
        %s582 = smul.addr %s581, 4
        %s583 = scalar_lea.vmem %s2, %s582
        %s584 = smul.u32 8, %s34
        %p585 = scmp.lt.s32.totalorder %s33, 1
        %s586 = scalar_select %p585, %s33, 1
        %s587 = scalar_lea.vmem %s3, %s586
        %v589 = vld [vmem:[%s568] sm:$0xf]
        %v590 = vld [vmem:[%s573] sm:$0xf]
        %v591 = vld [vmem:[%s573 + $0x4] sm:$0x3]
        %v592 = vld [vmem:[%s583] sm:$0xf]
        %v593 = vld [vmem:[%s583 + $0x4] sm:$0x3]
        %v594 = vld [vmem:[%s583 + $0x8] sm:$0xf]
        %v595 = vld [vmem:[%s583 + $0xc] sm:$0x3]
        %v596 = vld [vmem:[%s583 + $0x10] sm:$0xf]
        %v597 = vld [vmem:[%s583 + $0x14] sm:$0x3]
        %v598 = vld [vmem:[%s583 + $0x18] sm:$0xf]
        %v599 = vld [vmem:[%s583 + $0x1c] sm:$0x3]
        %v600 = vld [vmem:[%s583 + $0x20] sm:$0xf]
        %v601 = vld [vmem:[%s583 + $0x24] sm:$0x3]
        %v602 = vld [vmem:[%s583 + $0x28] sm:$0xf]
        %v603 = vld [vmem:[%s583 + $0x2c] sm:$0x3]
        %v604 = vld [vmem:[%s583 + $0x30] sm:$0xf]
        %v605 = vld [vmem:[%s583 + $0x34] sm:$0x3]
        %v606 = vld [vmem:[%s583 + $0x38] sm:$0xf]
        %v607 = vld [vmem:[%s583 + $0x3c] sm:$0x3]
        %v608 = vld [vmem:[%s587] sm:$0x1]
        %v609 = vld [vmem:[%s4] sm:$0xf]
        %v610 = vld [vmem:[%s4 + $0x4] sm:$0xf]
        %v611 = vld [vmem:[%s4 + $0x8] sm:$0xf]
        %v612 = vld [vmem:[%s4 + $0xc] sm:$0xf]
        %v613 = vld [vmem:[%s5] sm:$0x1]
        %v615 = vlaneseq
        %v616 = vshrl.u32 %v615, 7
        %v617 = vsub.s32 0, %v616
        %v618 = vrot.slane %v613, %v617
        %v624 = vunpack.c.l.b16 %v609
        %v625 = vunpack.c.l.b16 %v610
        %v626 = vunpack.c.l.b16 %v611
        %v627 = vunpack.c.l.b16 %v612
        %v628 = vpack.c.b16 %v625, %v624
        %v629 = vpack.c.b16 %v627, %v626
        %vm632 = vcmask 261120
        %v634 = vsel %vm632, %v589, 0
        %636 = vmatprep.subr.bf16.mxu0 0
        %637 = vmatpush1.bf16.msra.mxu0 %v628
        %638 = vmatprep.subr.bf16.mxu0 0
        %639 = vmatpush1.bf16.msra.mxu0 %v629
        %640 = vmatprep.subr.bf16.mxu0 0
        %641 = vmatpush1.bf16.msra.mxu0 0
        %642 = vmatprep.subr.bf16.mxu0 0
        %643 = vmatpush1.bf16.msra.mxu0 0
        %644 = vmatprep.subr.bf16.mxu0 0
        %645 = vmatpush1.bf16.msra.mxu0 0
        %646 = vmatprep.subr.bf16.mxu0 0
        %647 = vmatpush1.bf16.msra.mxu0 0
        %648 = vmatprep.subr.bf16.mxu0 0
        %649 = vmatpush1.bf16.msra.mxu0 0
        %650 = vmatprep.subr.bf16.mxu0 0
        %651 = vmatpush1.bf16.msra.mxu0 0
        %652 = vmatprep.subr.bf16.mxu0 0
        %653 = vmatpush1.bf16.msra.mxu0 0
        %654 = vmatprep.subr.bf16.mxu0 0
        %655 = vmatpush1.bf16.msra.mxu0 0
        %656 = vmatprep.subr.bf16.mxu0 0
        %657 = vmatpush1.bf16.msra.mxu0 0
        %658 = vmatprep.subr.bf16.mxu0 0
        %659 = vmatpush1.bf16.msra.mxu0 0
        %660 = vmatprep.subr.bf16.mxu0 0
        %661 = vmatpush1.bf16.msra.mxu0 0
        %662 = vmatprep.subr.bf16.mxu0 0
        %663 = vmatpush1.bf16.msra.mxu0 0
        %664 = vmatprep.subr.bf16.mxu0 0
        %665 = vmatpush1.bf16.msra.mxu0 0
        %666 = vmatprep.subr.bf16.mxu0 0
        %667 = vmatpush1.bf16.msra.mxu0 0
        %668 = vmatprep.mubr.bf16.mxu0 0
        %669 = vmatmul.mubr.bf16.gmra.mrb[0].mxu0 %v634
        %v670 = vpop.f32.mrb[0].mxu0
        %v671 = vadd.f32 %v618, %v670
        %v672 = vpop.f32.mrb[0].mxu0
        %v673 = vpop.f32.mrb[0].mxu0
        %v674 = vpop.f32.mrb[0].mxu0
        %675 = vdwg.mxu0
        %s676 = scalar_lea.vmem %s4, 16
        %v677 = vld [vmem:[%s676] sm:$0xf]
        %v678 = vld [vmem:[%s676 + $0x4] sm:$0xf]
        %v679 = vld [vmem:[%s676 + $0x8] sm:$0xf]
        %v680 = vld [vmem:[%s676 + $0xc] sm:$0xf]
        %s681 = scalar_lea.vmem %s5, 1
        %v682 = vld [vmem:[%s681] sm:$0x1]
        %v684 = vlaneseq
        %v685 = vshrl.u32 %v684, 7
        %v686 = vsub.s32 0, %v685
        %v687 = vrot.slane %v682, %v686
        %v691 = vunpack.c.l.b16 %v590
        %v692 = vunpack.c.l.b16 %v591
        %v693 = vpack.c.b16 %v692, %v691
        %v698 = vunpack.c.l.b16 %v677
        %v699 = vunpack.c.l.b16 %v678
        %v700 = vunpack.c.l.b16 %v679
        %v701 = vunpack.c.l.b16 %v680
        %v702 = vpack.c.b16 %v699, %v698
        %v703 = vpack.c.b16 %v701, %v700
        %v707 = vsel %vm632, %v693, 0
        %709 = vmatprep.subr.bf16.mxu0 0
        %710 = vmatpush1.bf16.msra.mxu0 %v702
        %711 = vmatprep.subr.bf16.mxu0 0
        %712 = vmatpush1.bf16.msra.mxu0 %v703
        %713 = vmatprep.subr.bf16.mxu0 0
        %714 = vmatpush1.bf16.msra.mxu0 0
        %715 = vmatprep.subr.bf16.mxu0 0
        %716 = vmatpush1.bf16.msra.mxu0 0
        %717 = vmatprep.subr.bf16.mxu0 0
        %718 = vmatpush1.bf16.msra.mxu0 0
        %719 = vmatprep.subr.bf16.mxu0 0
        %720 = vmatpush1.bf16.msra.mxu0 0
        %721 = vmatprep.subr.bf16.mxu0 0
        %722 = vmatpush1.bf16.msra.mxu0 0
        %723 = vmatprep.subr.bf16.mxu0 0
        %724 = vmatpush1.bf16.msra.mxu0 0
        %725 = vmatprep.subr.bf16.mxu0 0
        %726 = vmatpush1.bf16.msra.mxu0 0
        %727 = vmatprep.subr.bf16.mxu0 0
        %728 = vmatpush1.bf16.msra.mxu0 0
        %729 = vmatprep.subr.bf16.mxu0 0
        %730 = vmatpush1.bf16.msra.mxu0 0
        %731 = vmatprep.subr.bf16.mxu0 0
        %732 = vmatpush1.bf16.msra.mxu0 0
        %733 = vmatprep.subr.bf16.mxu0 0
        %734 = vmatpush1.bf16.msra.mxu0 0
        %735 = vmatprep.subr.bf16.mxu0 0
        %736 = vmatpush1.bf16.msra.mxu0 0
        %737 = vmatprep.subr.bf16.mxu0 0
        %738 = vmatpush1.bf16.msra.mxu0 0
        %739 = vmatprep.subr.bf16.mxu0 0
        %740 = vmatpush1.bf16.msra.mxu0 0
        %741 = vmatprep.mubr.bf16.mxu0 0
        %742 = vmatmul.mubr.bf16.gmra.mrb[0].mxu0 %v707
        %v743 = vpop.f32.mrb[0].mxu0
        %v744 = vadd.f32 %v687, %v743
        %v745 = vpop.f32.mrb[0].mxu0
        %v746 = vpop.f32.mrb[0].mxu0
        %v747 = vadd.f32 %v687, %v746
        %v748 = vpop.f32.mrb[0].mxu0
        %749 = vdwg.mxu0
        %s750 = scalar_lea.vmem %s4, 32
        %v751 = vld [vmem:[%s750] sm:$0xf]
        %v752 = vld [vmem:[%s750 + $0x4] sm:$0xf]
        %v753 = vld [vmem:[%s750 + $0x8] sm:$0xf]
        %v754 = vld [vmem:[%s750 + $0xc] sm:$0xf]
        %s755 = scalar_lea.vmem %s5, 2
        %v756 = vld [vmem:[%s755] sm:$0x1]
        %v758 = vlaneseq
        %v759 = vshrl.u32 %v758, 7
        %v760 = vsub.s32 0, %v759
        %v761 = vrot.slane %v756, %v760
        %v767 = vunpack.c.l.b16 %v751
        %v768 = vunpack.c.l.b16 %v752
        %v769 = vunpack.c.l.b16 %v753
        %v770 = vunpack.c.l.b16 %v754
        %v771 = vpack.c.b16 %v768, %v767
        %v772 = vpack.c.b16 %v770, %v769
        %775 = vmatprep.subr.bf16.mxu0 0
        %776 = vmatpush1.bf16.msra.mxu0 %v771
        %777 = vmatprep.subr.bf16.mxu0 0
        %778 = vmatpush1.bf16.msra.mxu0 %v772
        %779 = vmatprep.subr.bf16.mxu0 0
        %780 = vmatpush1.bf16.msra.mxu0 0
        %781 = vmatprep.subr.bf16.mxu0 0
        %782 = vmatpush1.bf16.msra.mxu0 0
        %783 = vmatprep.subr.bf16.mxu0 0
        %784 = vmatpush1.bf16.msra.mxu0 0
        %785 = vmatprep.subr.bf16.mxu0 0
        %786 = vmatpush1.bf16.msra.mxu0 0
        %787 = vmatprep.subr.bf16.mxu0 0
        %788 = vmatpush1.bf16.msra.mxu0 0
        %789 = vmatprep.subr.bf16.mxu0 0
        %790 = vmatpush1.bf16.msra.mxu0 0
        %791 = vmatprep.subr.bf16.mxu0 0
        %792 = vmatpush1.bf16.msra.mxu0 0
        %793 = vmatprep.subr.bf16.mxu0 0
        %794 = vmatpush1.bf16.msra.mxu0 0
        %795 = vmatprep.subr.bf16.mxu0 0
        %796 = vmatpush1.bf16.msra.mxu0 0
        %797 = vmatprep.subr.bf16.mxu0 0
        %798 = vmatpush1.bf16.msra.mxu0 0
        %799 = vmatprep.subr.bf16.mxu0 0
        %800 = vmatpush1.bf16.msra.mxu0 0
        %801 = vmatprep.subr.bf16.mxu0 0
        %802 = vmatpush1.bf16.msra.mxu0 0
        %803 = vmatprep.subr.bf16.mxu0 0
        %804 = vmatpush1.bf16.msra.mxu0 0
        %805 = vmatprep.subr.bf16.mxu0 0
        %806 = vmatpush1.bf16.msra.mxu0 0
        %807 = vmatprep.mubr.bf16.mxu0 0
        %808 = vmatmul.mubr.bf16.gmra.mrb[0].mxu0 %v707
        %v809 = vpop.f32.mrb[0].mxu0
        %v810 = vadd.f32 %v761, %v809
        %v811 = vpop.f32.mrb[0].mxu0
        %v812 = vpop.f32.mrb[0].mxu0
        %v813 = vadd.f32 %v761, %v812
        %v814 = vpop.f32.mrb[0].mxu0
        %815 = vdwg.mxu0
        %v816 = vpack.c.bf16 %v671, %v671
        %v817 = vpack.c.bf16 %v747, %v744
        %v818 = vpack.c.bf16 %v813, %v810
        %820 = vrot.lane.b32.xlu0 %v816, 120
        %v821 = vpop.permute.xlu0 %820
        %822 = vrot.lane.b32.xlu0 %v816, 112
        %v823 = vpop.permute.xlu0 %822
        %824 = vrot.lane.b32.xlu0 %v816, 104
        %v825 = vpop.permute.xlu0 %824
        %827 = vrot.lane.b32.xlu0 %v817, 120
        %v828 = vpop.permute.xlu0 %827
        %829 = vrot.lane.b32.xlu0 %v817, 112
        %v830 = vpop.permute.xlu0 %829
        %831 = vrot.lane.b32.xlu0 %v817, 104
        %v832 = vpop.permute.xlu0 %831
        %834 = vrot.lane.b32.xlu0 %v818, 120
        %v835 = vpop.permute.xlu0 %834
        %836 = vrot.lane.b32.xlu0 %v818, 112
        %v837 = vpop.permute.xlu0 %836
        %838 = vrot.lane.b32.xlu0 %v818, 104
        %v839 = vpop.permute.xlu0 %838
        %v840 = vld [vmem:[%s6] sm:$0xf]
        %v841 = vld [vmem:[%s6 + $0x4] sm:$0xf]
        %v842 = vld [vmem:[%s6 + $0x8] sm:$0xf]
        %v843 = vld [vmem:[%s6 + $0xc] sm:$0xf]
        %v844 = vld [vmem:[%s6 + $0x10] sm:$0xf]
        %v845 = vld [vmem:[%s6 + $0x14] sm:$0xf]
        %v846 = vld [vmem:[%s6 + $0x18] sm:$0xf]
        %v847 = vld [vmem:[%s6 + $0x1c] sm:$0xf]
        %v848 = vld [vmem:[%s6 + $0x20] sm:$0xf]
        %v849 = vld [vmem:[%s6 + $0x24] sm:$0xf]
        %v850 = vld [vmem:[%s6 + $0x28] sm:$0xf]
        %v851 = vld [vmem:[%s6 + $0x2c] sm:$0xf]
        %v852 = vld [vmem:[%s6 + $0x30] sm:$0xf]
        %v853 = vld [vmem:[%s6 + $0x34] sm:$0xf]
        %v854 = vld [vmem:[%s6 + $0x38] sm:$0xf]
        %v855 = vld [vmem:[%s6 + $0x3c] sm:$0xf]
        %v860 = vunpack.c.l.b16 %v840
        %v861 = vunpack.c.l.b16 %v841
        %v862 = vunpack.c.l.b16 %v842
        %v863 = vunpack.c.l.b16 %v843
        %v864 = vpack.c.b16 %v861, %v860
        %v865 = vpack.c.b16 %v863, %v862
        %vm866 = vcmask 64512
        %v868 = vsel %vm866, %v816, 0
        %v871 = vsel %vm866, %v864, 0
        %v874 = vsel %vm866, %v865, 0
        %876 = vmatprep.subr.bf16.mxu0 0
        %877 = vmatpush1.bf16.xpose.msra.mxu0 %v871
        %878 = vmatprep.subr.bf16.mxu0 0
        %879 = vmatpush1.bf16.xpose.msra.mxu0 %v874
        %880 = vmatprep.subr.bf16.mxu0 0
        %881 = vmatpush1.bf16.xpose.msra.mxu0 0
        %882 = vmatprep.subr.bf16.mxu0 0
        %883 = vmatpush1.bf16.xpose.msra.mxu0 0
        %884 = vmatprep.subr.bf16.mxu0 0
        %885 = vmatpush1.bf16.xpose.msra.mxu0 0
        %886 = vmatprep.subr.bf16.mxu0 0
        %887 = vmatpush1.bf16.xpose.msra.mxu0 0
        %888 = vmatprep.subr.bf16.mxu0 0
        %889 = vmatpush1.bf16.xpose.msra.mxu0 0
        %890 = vmatprep.subr.bf16.mxu0 0
        %891 = vmatpush1.bf16.xpose.msra.mxu0 0
        %892 = vmatprep.subr.bf16.mxu0 0
        %893 = vmatpush1.bf16.xpose.msra.mxu0 0
        %894 = vmatprep.subr.bf16.mxu0 0
        %895 = vmatpush1.bf16.xpose.msra.mxu0 0
        %896 = vmatprep.subr.bf16.mxu0 0
        %897 = vmatpush1.bf16.xpose.msra.mxu0 0
        %898 = vmatprep.subr.bf16.mxu0 0
        %899 = vmatpush1.bf16.xpose.msra.mxu0 0
        %900 = vmatprep.subr.bf16.mxu0 0
        %901 = vmatpush1.bf16.xpose.msra.mxu0 0
        %902 = vmatprep.subr.bf16.mxu0 0
        %903 = vmatpush1.bf16.xpose.msra.mxu0 0
        %904 = vmatprep.subr.bf16.mxu0 0
        %905 = vmatpush1.bf16.xpose.msra.mxu0 0
        %906 = vmatprep.subr.bf16.mxu0 0
        %907 = vmatpush1.bf16.xpose.msra.mxu0 0
        %908 = vmatprep.mubr.bf16.mxu0 0
        %909 = vmatmul.mubr.bf16.gmra.mrb[0].mxu0 %v868
        %v910 = vpop.f32.mrb[0].mxu0
        %v911 = vadd.f32 0.0, %v910
        %v912 = vpop.f32.mrb[0].mxu0
        %v913 = vpop.f32.mrb[0].mxu0
        %v914 = vpop.f32.mrb[0].mxu0
        %915 = vdwg.mxu0
        %v920 = vunpack.c.l.b16 %v844
        %v921 = vunpack.c.l.b16 %v845
        %v922 = vunpack.c.l.b16 %v846
        %v923 = vunpack.c.l.b16 %v847
        %v924 = vpack.c.b16 %v921, %v920
        %v925 = vpack.c.b16 %v923, %v922
        %v927 = vsel %vm866, %v821, 0
        %v930 = vsel %vm866, %v924, 0
        %v933 = vsel %vm866, %v925, 0
        %935 = vmatprep.subr.bf16.mxu0 0
        %936 = vmatpush1.bf16.xpose.msra.mxu0 %v930
        %937 = vmatprep.subr.bf16.mxu0 0
        %938 = vmatpush1.bf16.xpose.msra.mxu0 %v933
        %939 = vmatprep.subr.bf16.mxu0 0
        %940 = vmatpush1.bf16.xpose.msra.mxu0 0
        %941 = vmatprep.subr.bf16.mxu0 0
        %942 = vmatpush1.bf16.xpose.msra.mxu0 0
        %943 = vmatprep.subr.bf16.mxu0 0
        %944 = vmatpush1.bf16.xpose.msra.mxu0 0
        %945 = vmatprep.subr.bf16.mxu0 0
        %946 = vmatpush1.bf16.xpose.msra.mxu0 0
        %947 = vmatprep.subr.bf16.mxu0 0
        %948 = vmatpush1.bf16.xpose.msra.mxu0 0
        %949 = vmatprep.subr.bf16.mxu0 0
        %950 = vmatpush1.bf16.xpose.msra.mxu0 0
        %951 = vmatprep.subr.bf16.mxu0 0
        %952 = vmatpush1.bf16.xpose.msra.mxu0 0
        %953 = vmatprep.subr.bf16.mxu0 0
        %954 = vmatpush1.bf16.xpose.msra.mxu0 0
        %955 = vmatprep.subr.bf16.mxu0 0
        %956 = vmatpush1.bf16.xpose.msra.mxu0 0
        %957 = vmatprep.subr.bf16.mxu0 0
        %958 = vmatpush1.bf16.xpose.msra.mxu0 0
        %959 = vmatprep.subr.bf16.mxu0 0
        %960 = vmatpush1.bf16.xpose.msra.mxu0 0
        %961 = vmatprep.subr.bf16.mxu0 0
        %962 = vmatpush1.bf16.xpose.msra.mxu0 0
        %963 = vmatprep.subr.bf16.mxu0 0
        %964 = vmatpush1.bf16.xpose.msra.mxu0 0
        %965 = vmatprep.subr.bf16.mxu0 0
        %966 = vmatpush1.bf16.xpose.msra.mxu0 0
        %967 = vmatprep.mubr.bf16.mxu0 0
        %968 = vmatmul.mubr.bf16.gmra.mrb[0].mxu0 %v927
        %v969 = vpop.f32.mrb[0].mxu0
        %v970 = vadd.f32 0.0, %v969
        %v971 = vpop.f32.mrb[0].mxu0
        %v972 = vpop.f32.mrb[0].mxu0
        %v973 = vpop.f32.mrb[0].mxu0
        %974 = vdwg.mxu0
        %v979 = vunpack.c.l.b16 %v848
        %v980 = vunpack.c.l.b16 %v849
        %v981 = vunpack.c.l.b16 %v850
        %v982 = vunpack.c.l.b16 %v851
        %v983 = vpack.c.b16 %v980, %v979
        %v984 = vpack.c.b16 %v982, %v981
        %v986 = vsel %vm866, %v823, 0
        %v989 = vsel %vm866, %v983, 0
        %v992 = vsel %vm866, %v984, 0
        %994 = vmatprep.subr.bf16.mxu0 0
        %995 = vmatpush1.bf16.xpose.msra.mxu0 %v989
        %996 = vmatprep.subr.bf16.mxu0 0
        %997 = vmatpush1.bf16.xpose.msra.mxu0 %v992
        %998 = vmatprep.subr.bf16.mxu0 0
        %999 = vmatpush1.bf16.xpose.msra.mxu0 0
        %1000 = vmatprep.subr.bf16.mxu0 0
        %1001 = vmatpush1.bf16.xpose.msra.mxu0 0
        %1002 = vmatprep.subr.bf16.mxu0 0
        %1003 = vmatpush1.bf16.xpose.msra.mxu0 0
        %1004 = vmatprep.subr.bf16.mxu0 0
        %1005 = vmatpush1.bf16.xpose.msra.mxu0 0
        %1006 = vmatprep.subr.bf16.mxu0 0
        %1007 = vmatpush1.bf16.xpose.msra.mxu0 0
        %1008 = vmatprep.subr.bf16.mxu0 0
        %1009 = vmatpush1.bf16.xpose.msra.mxu0 0
        %1010 = vmatprep.subr.bf16.mxu0 0
        %1011 = vmatpush1.bf16.xpose.msra.mxu0 0
        %1012 = vmatprep.subr.bf16.mxu0 0
        %1013 = vmatpush1.bf16.xpose.msra.mxu0 0
        %1014 = vmatprep.subr.bf16.mxu0 0
        %1015 = vmatpush1.bf16.xpose.msra.mxu0 0
        %1016 = vmatprep.subr.bf16.mxu0 0
        %1017 = vmatpush1.bf16.xpose.msra.mxu0 0
        %1018 = vmatprep.subr.bf16.mxu0 0
        %1019 = vmatpush1.bf16.xpose.msra.mxu0 0
        %1020 = vmatprep.subr.bf16.mxu0 0
        %1021 = vmatpush1.bf16.xpose.msra.mxu0 0
        %1022 = vmatprep.subr.bf16.mxu0 0
        %1023 = vmatpush1.bf16.xpose.msra.mxu0 0
        %1024 = vmatprep.subr.bf16.mxu0 0
        %1025 = vmatpush1.bf16.xpose.msra.mxu0 0
        %1026 = vmatprep.mubr.bf16.mxu0 0
        %1027 = vmatmul.mubr.bf16.gmra.mrb[0].mxu0 %v986
        %v1028 = vpop.f32.mrb[0].mxu0
        %v1029 = vadd.f32 0.0, %v1028
        %v1030 = vpop.f32.mrb[0].mxu0
        %v1031 = vpop.f32.mrb[0].mxu0
        %v1032 = vpop.f32.mrb[0].mxu0
        %1033 = vdwg.mxu0
        %v1038 = vunpack.c.l.b16 %v852
        %v1039 = vunpack.c.l.b16 %v853
        %v1040 = vunpack.c.l.b16 %v854
        %v1041 = vunpack.c.l.b16 %v855
        %v1042 = vpack.c.b16 %v1039, %v1038
        %v1043 = vpack.c.b16 %v1041, %v1040
        %v1045 = vsel %vm866, %v825, 0
        %v1048 = vsel %vm866, %v1042, 0
        %v1051 = vsel %vm866, %v1043, 0
        %1053 = vmatprep.subr.bf16.mxu0 0
        %1054 = vmatpush1.bf16.xpose.msra.mxu0 %v1048
        %1055 = vmatprep.subr.bf16.mxu0 0
        %1056 = vmatpush1.bf16.xpose.msra.mxu0 %v1051
        %1057 = vmatprep.subr.bf16.mxu0 0
        %1058 = vmatpush1.bf16.xpose.msra.mxu0 0
        %1059 = vmatprep.subr.bf16.mxu0 0
        %1060 = vmatpush1.bf16.xpose.msra.mxu0 0
        %1061 = vmatprep.subr.bf16.mxu0 0
        %1062 = vmatpush1.bf16.xpose.msra.mxu0 0
        %1063 = vmatprep.subr.bf16.mxu0 0
        %1064 = vmatpush1.bf16.xpose.msra.mxu0 0
        %1065 = vmatprep.subr.bf16.mxu0 0
        %1066 = vmatpush1.bf16.xpose.msra.mxu0 0
        %1067 = vmatprep.subr.bf16.mxu0 0
        %1068 = vmatpush1.bf16.xpose.msra.mxu0 0
        %1069 = vmatprep.subr.bf16.mxu0 0
        %1070 = vmatpush1.bf16.xpose.msra.mxu0 0
        %1071 = vmatprep.subr.bf16.mxu0 0
        %1072 = vmatpush1.bf16.xpose.msra.mxu0 0
        %1073 = vmatprep.subr.bf16.mxu0 0
        %1074 = vmatpush1.bf16.xpose.msra.mxu0 0
        %1075 = vmatprep.subr.bf16.mxu0 0
        %1076 = vmatpush1.bf16.xpose.msra.mxu0 0
        %1077 = vmatprep.subr.bf16.mxu0 0
        %1078 = vmatpush1.bf16.xpose.msra.mxu0 0
        %1079 = vmatprep.subr.bf16.mxu0 0
        %1080 = vmatpush1.bf16.xpose.msra.mxu0 0
        %1081 = vmatprep.subr.bf16.mxu0 0
        %1082 = vmatpush1.bf16.xpose.msra.mxu0 0
        %1083 = vmatprep.subr.bf16.mxu0 0
        %1084 = vmatpush1.bf16.xpose.msra.mxu0 0
        %1085 = vmatprep.mubr.bf16.mxu0 0
        %1086 = vmatmul.mubr.bf16.gmra.mrb[0].mxu0 %v1045
        %v1087 = vpop.f32.mrb[0].mxu0
        %v1088 = vadd.f32 0.0, %v1087
        %v1089 = vpop.f32.mrb[0].mxu0
        %v1090 = vpop.f32.mrb[0].mxu0
        %v1091 = vpop.f32.mrb[0].mxu0
        %1092 = vdwg.mxu0
        %v1093 = vpack.c.bf16 %v911, %v911
        %v1094 = vpack.c.bf16 %v970, %v970
        %v1095 = vpack.c.bf16 %v1029, %v1029
        %v1096 = vpack.c.bf16 %v1088, %v1088
        %1097 = vxpose.xlu0.c.b16.start [1/8] %v1093, 128
        %1098 = vxpose.xlu0.c.b16.cont [2/8] 0, 128
        %1099 = vxpose.xlu0.c.b16.cont [3/8] 0, 128
        %1100 = vxpose.xlu0.c.b16.cont [4/8] 0, 128
        %1101 = vxpose.xlu0.c.b16.cont [5/8] 0, 128
        %1102 = vxpose.xlu0.c.b16.cont [6/8] 0, 128
        %1103 = vxpose.xlu0.c.b16.cont [7/8] 0, 128
        %1104 = vxpose.xlu0.c.b16.end [8/8] 0, 128
        %v1105 = vpop.trf.xlu0
        %v1106 = vpop.trf.xlu0
        %v1107 = vpop.trf.xlu0
        %v1108 = vpop.trf.xlu0
        %v1109 = vpop.trf.xlu0
        %v1110 = vpop.trf.xlu0
        %v1111 = vpop.trf.xlu0
        %v1112 = vpop.trf.xlu0
        %1113 = vxpose.xlu0.c.b16.start [1/8] %v1094, 128
        %1114 = vxpose.xlu0.c.b16.cont [2/8] 0, 128
        %1115 = vxpose.xlu0.c.b16.cont [3/8] 0, 128
        %1116 = vxpose.xlu0.c.b16.cont [4/8] 0, 128
        %1117 = vxpose.xlu0.c.b16.cont [5/8] 0, 128
        %1118 = vxpose.xlu0.c.b16.cont [6/8] 0, 128
        %1119 = vxpose.xlu0.c.b16.cont [7/8] 0, 128
        %1120 = vxpose.xlu0.c.b16.end [8/8] 0, 128
        %v1121 = vpop.trf.xlu0
        %v1122 = vpop.trf.xlu0
        %v1123 = vpop.trf.xlu0
        %v1124 = vpop.trf.xlu0
        %v1125 = vpop.trf.xlu0
        %v1126 = vpop.trf.xlu0
        %v1127 = vpop.trf.xlu0
        %v1128 = vpop.trf.xlu0
        %1129 = vxpose.xlu0.c.b16.start [1/8] %v1095, 128
        %1130 = vxpose.xlu0.c.b16.cont [2/8] 0, 128
        %1131 = vxpose.xlu0.c.b16.cont [3/8] 0, 128
        %1132 = vxpose.xlu0.c.b16.cont [4/8] 0, 128
        %1133 = vxpose.xlu0.c.b16.cont [5/8] 0, 128
        %1134 = vxpose.xlu0.c.b16.cont [6/8] 0, 128
        %1135 = vxpose.xlu0.c.b16.cont [7/8] 0, 128
        %1136 = vxpose.xlu0.c.b16.end [8/8] 0, 128
        %v1137 = vpop.trf.xlu0
        %v1138 = vpop.trf.xlu0
        %v1139 = vpop.trf.xlu0
        %v1140 = vpop.trf.xlu0
        %v1141 = vpop.trf.xlu0
        %v1142 = vpop.trf.xlu0
        %v1143 = vpop.trf.xlu0
        %v1144 = vpop.trf.xlu0
        %1145 = vxpose.xlu0.c.b16.start [1/8] %v1096, 128
        %1146 = vxpose.xlu0.c.b16.cont [2/8] 0, 128
        %1147 = vxpose.xlu0.c.b16.cont [3/8] 0, 128
        %1148 = vxpose.xlu0.c.b16.cont [4/8] 0, 128
        %1149 = vxpose.xlu0.c.b16.cont [5/8] 0, 128
        %1150 = vxpose.xlu0.c.b16.cont [6/8] 0, 128
        %1151 = vxpose.xlu0.c.b16.cont [7/8] 0, 128
        %1152 = vxpose.xlu0.c.b16.end [8/8] 0, 128
        %v1153 = vpop.trf.xlu0
        %v1154 = vpop.trf.xlu0
        %v1155 = vpop.trf.xlu0
        %v1156 = vpop.trf.xlu0
        %v1157 = vpop.trf.xlu0
        %v1158 = vpop.trf.xlu0
        %v1159 = vpop.trf.xlu0
        %v1160 = vpop.trf.xlu0
        %v1163 = vpack.i.b16 %v1121, %v1105
        %v1165 = vshrl.u32 %v1105, 16
        %v1166 = vshrl.u32 %v1121, 16
        %v1167 = vpack.i.b16 %v1166, %v1165
        %v1171 = vpack.i.b16 %v1153, %v1137
        %v1173 = vshrl.u32 %v1137, 16
        %v1174 = vshrl.u32 %v1153, 16
        %v1175 = vpack.i.b16 %v1174, %v1173
        %v1178 = vpack.i.b16 0, 0
        %v1180 = vshrl.u32 0, 16
        %v1181 = vpack.i.b16 %v1180, %v1180
        %v1185 = vpack.i.b16 %v1122, %v1106
        %v1187 = vshrl.u32 %v1106, 16
        %v1188 = vshrl.u32 %v1122, 16
        %v1189 = vpack.i.b16 %v1188, %v1187
        %v1193 = vpack.i.b16 %v1154, %v1138
        %v1195 = vshrl.u32 %v1138, 16
        %v1196 = vshrl.u32 %v1154, 16
        %v1197 = vpack.i.b16 %v1196, %v1195
        %v1199 = vcombine.high %v1163, %v1178
        %v1201 = vunpack.c.l.s4 1983009808
        %v1202 = vunpack.c.0.s8 %v1201
        %v1203 = vlaneseq
        %v1204 = vshrl.u32 %v1203, 7
        %v1205 = vsub.s32 %v1202, %v1204
        %v1206 = vrot.slane %v1163, %v1205
        %v1208 = vunpack.c.l.s4 1983009808
        %v1209 = vunpack.c.0.s8 %v1208
        %v1210 = vlaneseq
        %v1211 = vshrl.u32 %v1210, 7
        %v1212 = vsub.s32 %v1209, %v1211
        %v1213 = vrot.slane %v1199, %v1212
        %v1214 = vcombine.high %v1171, %v1178
        %v1216 = vunpack.c.l.s4 1983009808
        %v1217 = vunpack.c.0.s8 %v1216
        %v1218 = vlaneseq
        %v1219 = vshrl.u32 %v1218, 7
        %v1220 = vsub.s32 %v1217, %v1219
        %v1221 = vrot.slane %v1171, %v1220
        %v1223 = vunpack.c.l.s4 1983009808
        %v1224 = vunpack.c.0.s8 %v1223
        %v1225 = vlaneseq
        %v1226 = vshrl.u32 %v1225, 7
        %v1227 = vsub.s32 %v1224, %v1226
        %v1228 = vrot.slane %v1214, %v1227
        %v1229 = vcombine.low %v1206, %v1221
        %v1230 = vcombine.high %v1206, %v1221
        %v1232 = vunpack.c.l.s4 1934713408
        %v1233 = vunpack.c.0.s8 %v1232
        %v1234 = vlaneseq
        %v1235 = vshrl.u32 %v1234, 7
        %v1236 = vsub.s32 %v1233, %v1235
        %v1237 = vrot.slane %v1229, %v1236
        %v1239 = vunpack.c.l.s4 1934713408
        %v1240 = vunpack.c.0.s8 %v1239
        %v1241 = vlaneseq
        %v1242 = vshrl.u32 %v1241, 7
        %v1243 = vsub.s32 %v1240, %v1242
        %v1244 = vrot.slane %v1230, %v1243
        %v1245 = vcombine.low %v1213, %v1228
        %v1246 = vcombine.high %v1213, %v1228
        %v1248 = vunpack.c.l.s4 1934713408
        %v1249 = vunpack.c.0.s8 %v1248
        %v1250 = vlaneseq
        %v1251 = vshrl.u32 %v1250, 7
        %v1252 = vsub.s32 %v1249, %v1251
        %v1253 = vrot.slane %v1245, %v1252
        %v1255 = vunpack.c.l.s4 1934713408
        %v1256 = vunpack.c.0.s8 %v1255
        %v1257 = vlaneseq
        %v1258 = vshrl.u32 %v1257, 7
        %v1259 = vsub.s32 %v1256, %v1258
        %v1260 = vrot.slane %v1246, %v1259
        %v1261 = vcombine.high %v1237, 0
        %v1262 = vcombine.high %v1244, 0
        %v1263 = vcombine.high %v1253, 0
        %v1264 = vcombine.high %v1260, 0
        %v1265 = vcombine.high %v1167, %v1181
        %v1267 = vunpack.c.l.s4 1983009808
        %v1268 = vunpack.c.0.s8 %v1267
        %v1269 = vlaneseq
        %v1270 = vshrl.u32 %v1269, 7
        %v1271 = vsub.s32 %v1268, %v1270
        %v1272 = vrot.slane %v1167, %v1271
        %v1274 = vunpack.c.l.s4 1983009808
        %v1275 = vunpack.c.0.s8 %v1274
        %v1276 = vlaneseq
        %v1277 = vshrl.u32 %v1276, 7
        %v1278 = vsub.s32 %v1275, %v1277
        %v1279 = vrot.slane %v1265, %v1278
        %v1280 = vcombine.high %v1175, %v1181
        %v1282 = vunpack.c.l.s4 1983009808
        %v1283 = vunpack.c.0.s8 %v1282
        %v1284 = vlaneseq
        %v1285 = vshrl.u32 %v1284, 7
        %v1286 = vsub.s32 %v1283, %v1285
        %v1287 = vrot.slane %v1175, %v1286
        %v1289 = vunpack.c.l.s4 1983009808
        %v1290 = vunpack.c.0.s8 %v1289
        %v1291 = vlaneseq
        %v1292 = vshrl.u32 %v1291, 7
        %v1293 = vsub.s32 %v1290, %v1292
        %v1294 = vrot.slane %v1280, %v1293
        %v1295 = vcombine.low %v1272, %v1287
        %v1296 = vcombine.high %v1272, %v1287
        %v1298 = vunpack.c.l.s4 1934713408
        %v1299 = vunpack.c.0.s8 %v1298
        %v1300 = vlaneseq
        %v1301 = vshrl.u32 %v1300, 7
        %v1302 = vsub.s32 %v1299, %v1301
        %v1303 = vrot.slane %v1295, %v1302
        %v1305 = vunpack.c.l.s4 1934713408
        %v1306 = vunpack.c.0.s8 %v1305
        %v1307 = vlaneseq
        %v1308 = vshrl.u32 %v1307, 7
        %v1309 = vsub.s32 %v1306, %v1308
        %v1310 = vrot.slane %v1296, %v1309
        %v1311 = vcombine.low %v1279, %v1294
        %v1312 = vcombine.high %v1279, %v1294
        %v1314 = vunpack.c.l.s4 1934713408
        %v1315 = vunpack.c.0.s8 %v1314
        %v1316 = vlaneseq
        %v1317 = vshrl.u32 %v1316, 7
        %v1318 = vsub.s32 %v1315, %v1317
        %v1319 = vrot.slane %v1311, %v1318
        %v1321 = vunpack.c.l.s4 1934713408
        %v1322 = vunpack.c.0.s8 %v1321
        %v1323 = vlaneseq
        %v1324 = vshrl.u32 %v1323, 7
        %v1325 = vsub.s32 %v1322, %v1324
        %v1326 = vrot.slane %v1312, %v1325
        %v1327 = vcombine.high %v1303, 0
        %v1328 = vcombine.high %v1310, 0
        %v1329 = vcombine.high %v1319, 0
        %v1330 = vcombine.high %v1326, 0
        %v1331 = vcombine.high %v1185, %v1178
        %v1333 = vunpack.c.l.s4 1983009808
        %v1334 = vunpack.c.0.s8 %v1333
        %v1335 = vlaneseq
        %v1336 = vshrl.u32 %v1335, 7
        %v1337 = vsub.s32 %v1334, %v1336
        %v1338 = vrot.slane %v1185, %v1337
        %v1340 = vunpack.c.l.s4 1983009808
        %v1341 = vunpack.c.0.s8 %v1340
        %v1342 = vlaneseq
        %v1343 = vshrl.u32 %v1342, 7
        %v1344 = vsub.s32 %v1341, %v1343
        %v1345 = vrot.slane %v1331, %v1344
        %v1346 = vcombine.high %v1193, %v1178
        %v1348 = vunpack.c.l.s4 1983009808
        %v1349 = vunpack.c.0.s8 %v1348
        %v1350 = vlaneseq
        %v1351 = vshrl.u32 %v1350, 7
        %v1352 = vsub.s32 %v1349, %v1351
        %v1353 = vrot.slane %v1193, %v1352
        %v1355 = vunpack.c.l.s4 1983009808
        %v1356 = vunpack.c.0.s8 %v1355
        %v1357 = vlaneseq
        %v1358 = vshrl.u32 %v1357, 7
        %v1359 = vsub.s32 %v1356, %v1358
        %v1360 = vrot.slane %v1346, %v1359
        %v1361 = vcombine.low %v1338, %v1353
        %v1362 = vcombine.high %v1338, %v1353
        %v1364 = vunpack.c.l.s4 1934713408
        %v1365 = vunpack.c.0.s8 %v1364
        %v1366 = vlaneseq
        %v1367 = vshrl.u32 %v1366, 7
        %v1368 = vsub.s32 %v1365, %v1367
        %v1369 = vrot.slane %v1361, %v1368
        %v1371 = vunpack.c.l.s4 1934713408
        %v1372 = vunpack.c.0.s8 %v1371
        %v1373 = vlaneseq
        %v1374 = vshrl.u32 %v1373, 7
        %v1375 = vsub.s32 %v1372, %v1374
        %v1376 = vrot.slane %v1362, %v1375
        %v1377 = vcombine.low %v1345, %v1360
        %v1378 = vcombine.high %v1345, %v1360
        %v1380 = vunpack.c.l.s4 1934713408
        %v1381 = vunpack.c.0.s8 %v1380
        %v1382 = vlaneseq
        %v1383 = vshrl.u32 %v1382, 7
        %v1384 = vsub.s32 %v1381, %v1383
        %v1385 = vrot.slane %v1377, %v1384
        %v1387 = vunpack.c.l.s4 1934713408
        %v1388 = vunpack.c.0.s8 %v1387
        %v1389 = vlaneseq
        %v1390 = vshrl.u32 %v1389, 7
        %v1391 = vsub.s32 %v1388, %v1390
        %v1392 = vrot.slane %v1378, %v1391
        %v1393 = vcombine.high %v1369, 0
        %v1394 = vcombine.high %v1376, 0
        %v1395 = vcombine.high %v1385, 0
        %v1396 = vcombine.high %v1392, 0
        %v1397 = vcombine.high %v1189, %v1181
        %v1399 = vunpack.c.l.s4 1983009808
        %v1400 = vunpack.c.0.s8 %v1399
        %v1401 = vlaneseq
        %v1402 = vshrl.u32 %v1401, 7
        %v1403 = vsub.s32 %v1400, %v1402
        %v1404 = vrot.slane %v1189, %v1403
        %v1406 = vunpack.c.l.s4 1983009808
        %v1407 = vunpack.c.0.s8 %v1406
        %v1408 = vlaneseq
        %v1409 = vshrl.u32 %v1408, 7
        %v1410 = vsub.s32 %v1407, %v1409
        %v1411 = vrot.slane %v1397, %v1410
        %v1412 = vcombine.high %v1197, %v1181
        %v1414 = vunpack.c.l.s4 1983009808
        %v1415 = vunpack.c.0.s8 %v1414
        %v1416 = vlaneseq
        %v1417 = vshrl.u32 %v1416, 7
        %v1418 = vsub.s32 %v1415, %v1417
        %v1419 = vrot.slane %v1197, %v1418
        %v1421 = vunpack.c.l.s4 1983009808
        %v1422 = vunpack.c.0.s8 %v1421
        %v1423 = vlaneseq
        %v1424 = vshrl.u32 %v1423, 7
        %v1425 = vsub.s32 %v1422, %v1424
        %v1426 = vrot.slane %v1412, %v1425
        %v1427 = vcombine.low %v1404, %v1419
        %v1428 = vcombine.high %v1404, %v1419
        %v1430 = vunpack.c.l.s4 1934713408
        %v1431 = vunpack.c.0.s8 %v1430
        %v1432 = vlaneseq
        %v1433 = vshrl.u32 %v1432, 7
        %v1434 = vsub.s32 %v1431, %v1433
        %v1435 = vrot.slane %v1427, %v1434
        %v1437 = vunpack.c.l.s4 1934713408
        %v1438 = vunpack.c.0.s8 %v1437
        %v1439 = vlaneseq
        %v1440 = vshrl.u32 %v1439, 7
        %v1441 = vsub.s32 %v1438, %v1440
        %v1442 = vrot.slane %v1428, %v1441
        %v1443 = vcombine.low %v1411, %v1426
        %v1444 = vcombine.high %v1411, %v1426
        %v1446 = vunpack.c.l.s4 1934713408
        %v1447 = vunpack.c.0.s8 %v1446
        %v1448 = vlaneseq
        %v1449 = vshrl.u32 %v1448, 7
        %v1450 = vsub.s32 %v1447, %v1449
        %v1451 = vrot.slane %v1443, %v1450
        %v1453 = vunpack.c.l.s4 1934713408
        %v1454 = vunpack.c.0.s8 %v1453
        %v1455 = vlaneseq
        %v1456 = vshrl.u32 %v1455, 7
        %v1457 = vsub.s32 %v1454, %v1456
        %v1458 = vrot.slane %v1444, %v1457
        %v1459 = vcombine.high %v1435, 0
        %v1460 = vcombine.high %v1442, 0
        %v1461 = vcombine.high %v1451, 0
        %v1462 = vcombine.high %v1458, 0
        %1463 = vxpose.xlu0.c.b16.start [1/8] %v1237, 128
        %1464 = vxpose.xlu0.c.b16.cont [2/8] 0, 128
        %1465 = vxpose.xlu0.c.b16.cont [3/8] 0, 128
        %1466 = vxpose.xlu0.c.b16.cont [4/8] 0, 128
        %1467 = vxpose.xlu0.c.b16.cont [5/8] 0, 128
        %1468 = vxpose.xlu0.c.b16.cont [6/8] 0, 128
        %1469 = vxpose.xlu0.c.b16.cont [7/8] 0, 128
        %1470 = vxpose.xlu0.c.b16.end [8/8] 0, 128
        %v1471 = vpop.trf.xlu0
        %v1472 = vpop.trf.xlu0
        %v1473 = vpop.trf.xlu0
        %v1474 = vpop.trf.xlu0
        %v1475 = vpop.trf.xlu0
        %v1476 = vpop.trf.xlu0
        %v1477 = vpop.trf.xlu0
        %v1478 = vpop.trf.xlu0
        %1479 = vxpose.xlu0.c.b16.start [1/8] %v1303, 128
        %1480 = vxpose.xlu0.c.b16.cont [2/8] 0, 128
        %1481 = vxpose.xlu0.c.b16.cont [3/8] 0, 128
        %1482 = vxpose.xlu0.c.b16.cont [4/8] 0, 128
        %1483 = vxpose.xlu0.c.b16.cont [5/8] 0, 128
        %1484 = vxpose.xlu0.c.b16.cont [6/8] 0, 128
        %1485 = vxpose.xlu0.c.b16.cont [7/8] 0, 128
        %1486 = vxpose.xlu0.c.b16.end [8/8] 0, 128
        %v1487 = vpop.trf.xlu0
        %v1488 = vpop.trf.xlu0
        %v1489 = vpop.trf.xlu0
        %v1490 = vpop.trf.xlu0
        %v1491 = vpop.trf.xlu0
        %v1492 = vpop.trf.xlu0
        %v1493 = vpop.trf.xlu0
        %v1494 = vpop.trf.xlu0
        %1495 = vxpose.xlu0.c.b16.start [1/8] %v1261, 128
        %1496 = vxpose.xlu0.c.b16.cont [2/8] 0, 128
        %1497 = vxpose.xlu0.c.b16.cont [3/8] 0, 128
        %1498 = vxpose.xlu0.c.b16.cont [4/8] 0, 128
        %1499 = vxpose.xlu0.c.b16.cont [5/8] 0, 128
        %1500 = vxpose.xlu0.c.b16.cont [6/8] 0, 128
        %1501 = vxpose.xlu0.c.b16.cont [7/8] 0, 128
        %1502 = vxpose.xlu0.c.b16.end [8/8] 0, 128
        %v1503 = vpop.trf.xlu0
        %v1504 = vpop.trf.xlu0
        %v1505 = vpop.trf.xlu0
        %v1506 = vpop.trf.xlu0
        %v1507 = vpop.trf.xlu0
        %v1508 = vpop.trf.xlu0
        %v1509 = vpop.trf.xlu0
        %v1510 = vpop.trf.xlu0
        %1511 = vxpose.xlu0.c.b16.start [1/8] %v1327, 128
        %1512 = vxpose.xlu0.c.b16.cont [2/8] 0, 128
        %1513 = vxpose.xlu0.c.b16.cont [3/8] 0, 128
        %1514 = vxpose.xlu0.c.b16.cont [4/8] 0, 128
        %1515 = vxpose.xlu0.c.b16.cont [5/8] 0, 128
        %1516 = vxpose.xlu0.c.b16.cont [6/8] 0, 128
        %1517 = vxpose.xlu0.c.b16.cont [7/8] 0, 128
        %1518 = vxpose.xlu0.c.b16.end [8/8] 0, 128
        %v1519 = vpop.trf.xlu0
        %v1520 = vpop.trf.xlu0
        %v1521 = vpop.trf.xlu0
        %v1522 = vpop.trf.xlu0
        %v1523 = vpop.trf.xlu0
        %v1524 = vpop.trf.xlu0
        %v1525 = vpop.trf.xlu0
        %v1526 = vpop.trf.xlu0
        %1527 = vxpose.xlu0.c.b16.start [1/8] %v1244, 128
        %1528 = vxpose.xlu0.c.b16.cont [2/8] 0, 128
        %1529 = vxpose.xlu0.c.b16.cont [3/8] 0, 128
        %1530 = vxpose.xlu0.c.b16.cont [4/8] 0, 128
        %1531 = vxpose.xlu0.c.b16.cont [5/8] 0, 128
        %1532 = vxpose.xlu0.c.b16.cont [6/8] 0, 128
        %1533 = vxpose.xlu0.c.b16.cont [7/8] 0, 128
        %1534 = vxpose.xlu0.c.b16.end [8/8] 0, 128
        %v1535 = vpop.trf.xlu0
        %v1536 = vpop.trf.xlu0
        %v1537 = vpop.trf.xlu0
        %v1538 = vpop.trf.xlu0
        %v1539 = vpop.trf.xlu0
        %v1540 = vpop.trf.xlu0
        %v1541 = vpop.trf.xlu0
        %v1542 = vpop.trf.xlu0
        %1543 = vxpose.xlu0.c.b16.start [1/8] %v1310, 128
        %1544 = vxpose.xlu0.c.b16.cont [2/8] 0, 128
        %1545 = vxpose.xlu0.c.b16.cont [3/8] 0, 128
        %1546 = vxpose.xlu0.c.b16.cont [4/8] 0, 128
        %1547 = vxpose.xlu0.c.b16.cont [5/8] 0, 128
        %1548 = vxpose.xlu0.c.b16.cont [6/8] 0, 128
        %1549 = vxpose.xlu0.c.b16.cont [7/8] 0, 128
        %1550 = vxpose.xlu0.c.b16.end [8/8] 0, 128
        %v1551 = vpop.trf.xlu0
        %v1552 = vpop.trf.xlu0
        %v1553 = vpop.trf.xlu0
        %v1554 = vpop.trf.xlu0
        %v1555 = vpop.trf.xlu0
        %v1556 = vpop.trf.xlu0
        %v1557 = vpop.trf.xlu0
        %v1558 = vpop.trf.xlu0
        %1559 = vxpose.xlu0.c.b16.start [1/8] %v1262, 128
        %1560 = vxpose.xlu0.c.b16.cont [2/8] 0, 128
        %1561 = vxpose.xlu0.c.b16.cont [3/8] 0, 128
        %1562 = vxpose.xlu0.c.b16.cont [4/8] 0, 128
        %1563 = vxpose.xlu0.c.b16.cont [5/8] 0, 128
        %1564 = vxpose.xlu0.c.b16.cont [6/8] 0, 128
        %1565 = vxpose.xlu0.c.b16.cont [7/8] 0, 128
        %1566 = vxpose.xlu0.c.b16.end [8/8] 0, 128
        %v1567 = vpop.trf.xlu0
        %v1568 = vpop.trf.xlu0
        %v1569 = vpop.trf.xlu0
        %v1570 = vpop.trf.xlu0
        %v1571 = vpop.trf.xlu0
        %v1572 = vpop.trf.xlu0
        %v1573 = vpop.trf.xlu0
        %v1574 = vpop.trf.xlu0
        %1575 = vxpose.xlu0.c.b16.start [1/8] %v1328, 128
        %1576 = vxpose.xlu0.c.b16.cont [2/8] 0, 128
        %1577 = vxpose.xlu0.c.b16.cont [3/8] 0, 128
        %1578 = vxpose.xlu0.c.b16.cont [4/8] 0, 128
        %1579 = vxpose.xlu0.c.b16.cont [5/8] 0, 128
        %1580 = vxpose.xlu0.c.b16.cont [6/8] 0, 128
        %1581 = vxpose.xlu0.c.b16.cont [7/8] 0, 128
        %1582 = vxpose.xlu0.c.b16.end [8/8] 0, 128
        %v1583 = vpop.trf.xlu0
        %v1584 = vpop.trf.xlu0
        %v1585 = vpop.trf.xlu0
        %v1586 = vpop.trf.xlu0
        %v1587 = vpop.trf.xlu0
        %v1588 = vpop.trf.xlu0
        %v1589 = vpop.trf.xlu0
        %v1590 = vpop.trf.xlu0
        %1591 = vxpose.xlu0.c.b16.start [1/8] %v1253, 128
        %1592 = vxpose.xlu0.c.b16.cont [2/8] 0, 128
        %1593 = vxpose.xlu0.c.b16.cont [3/8] 0, 128
        %1594 = vxpose.xlu0.c.b16.cont [4/8] 0, 128
        %1595 = vxpose.xlu0.c.b16.cont [5/8] 0, 128
        %1596 = vxpose.xlu0.c.b16.cont [6/8] 0, 128
        %1597 = vxpose.xlu0.c.b16.cont [7/8] 0, 128
        %1598 = vxpose.xlu0.c.b16.end [8/8] 0, 128
        %v1599 = vpop.trf.xlu0
        %v1600 = vpop.trf.xlu0
        %v1601 = vpop.trf.xlu0
        %v1602 = vpop.trf.xlu0
        %v1603 = vpop.trf.xlu0
        %v1604 = vpop.trf.xlu0
        %v1605 = vpop.trf.xlu0
        %v1606 = vpop.trf.xlu0
        %1607 = vxpose.xlu0.c.b16.start [1/8] %v1319, 128
        %1608 = vxpose.xlu0.c.b16.cont [2/8] 0, 128
        %1609 = vxpose.xlu0.c.b16.cont [3/8] 0, 128
        %1610 = vxpose.xlu0.c.b16.cont [4/8] 0, 128
        %1611 = vxpose.xlu0.c.b16.cont [5/8] 0, 128
        %1612 = vxpose.xlu0.c.b16.cont [6/8] 0, 128
        %1613 = vxpose.xlu0.c.b16.cont [7/8] 0, 128
        %1614 = vxpose.xlu0.c.b16.end [8/8] 0, 128
        %v1615 = vpop.trf.xlu0
        %v1616 = vpop.trf.xlu0
        %v1617 = vpop.trf.xlu0
        %v1618 = vpop.trf.xlu0
        %v1619 = vpop.trf.xlu0
        %v1620 = vpop.trf.xlu0
        %v1621 = vpop.trf.xlu0
        %v1622 = vpop.trf.xlu0
        %1623 = vxpose.xlu0.c.b16.start [1/8] %v1263, 128
        %1624 = vxpose.xlu0.c.b16.cont [2/8] 0, 128
        %1625 = vxpose.xlu0.c.b16.cont [3/8] 0, 128
        %1626 = vxpose.xlu0.c.b16.cont [4/8] 0, 128
        %1627 = vxpose.xlu0.c.b16.cont [5/8] 0, 128
        %1628 = vxpose.xlu0.c.b16.cont [6/8] 0, 128
        %1629 = vxpose.xlu0.c.b16.cont [7/8] 0, 128
        %1630 = vxpose.xlu0.c.b16.end [8/8] 0, 128
        %v1631 = vpop.trf.xlu0
        %v1632 = vpop.trf.xlu0
        %v1633 = vpop.trf.xlu0
        %v1634 = vpop.trf.xlu0
        %v1635 = vpop.trf.xlu0
        %v1636 = vpop.trf.xlu0
        %v1637 = vpop.trf.xlu0
        %v1638 = vpop.trf.xlu0
        %1639 = vxpose.xlu0.c.b16.start [1/8] %v1329, 128
        %1640 = vxpose.xlu0.c.b16.cont [2/8] 0, 128
        %1641 = vxpose.xlu0.c.b16.cont [3/8] 0, 128
        %1642 = vxpose.xlu0.c.b16.cont [4/8] 0, 128
        %1643 = vxpose.xlu0.c.b16.cont [5/8] 0, 128
        %1644 = vxpose.xlu0.c.b16.cont [6/8] 0, 128
        %1645 = vxpose.xlu0.c.b16.cont [7/8] 0, 128
        %1646 = vxpose.xlu0.c.b16.end [8/8] 0, 128
        %v1647 = vpop.trf.xlu0
        %v1648 = vpop.trf.xlu0
        %v1649 = vpop.trf.xlu0
        %v1650 = vpop.trf.xlu0
        %v1651 = vpop.trf.xlu0
        %v1652 = vpop.trf.xlu0
        %v1653 = vpop.trf.xlu0
        %v1654 = vpop.trf.xlu0
        %1655 = vxpose.xlu0.c.b16.start [1/8] %v1260, 128
        %1656 = vxpose.xlu0.c.b16.cont [2/8] 0, 128
        %1657 = vxpose.xlu0.c.b16.cont [3/8] 0, 128
        %1658 = vxpose.xlu0.c.b16.cont [4/8] 0, 128
        %1659 = vxpose.xlu0.c.b16.cont [5/8] 0, 128
        %1660 = vxpose.xlu0.c.b16.cont [6/8] 0, 128
        %1661 = vxpose.xlu0.c.b16.cont [7/8] 0, 128
        %1662 = vxpose.xlu0.c.b16.end [8/8] 0, 128
        %v1663 = vpop.trf.xlu0
        %v1664 = vpop.trf.xlu0
        %v1665 = vpop.trf.xlu0
        %v1666 = vpop.trf.xlu0
        %v1667 = vpop.trf.xlu0
        %v1668 = vpop.trf.xlu0
        %v1669 = vpop.trf.xlu0
        %v1670 = vpop.trf.xlu0
        %1671 = vxpose.xlu0.c.b16.start [1/8] %v1326, 128
        %1672 = vxpose.xlu0.c.b16.cont [2/8] 0, 128
        %1673 = vxpose.xlu0.c.b16.cont [3/8] 0, 128
        %1674 = vxpose.xlu0.c.b16.cont [4/8] 0, 128
        %1675 = vxpose.xlu0.c.b16.cont [5/8] 0, 128
        %1676 = vxpose.xlu0.c.b16.cont [6/8] 0, 128
        %1677 = vxpose.xlu0.c.b16.cont [7/8] 0, 128
        %1678 = vxpose.xlu0.c.b16.end [8/8] 0, 128
        %v1679 = vpop.trf.xlu0
        %v1680 = vpop.trf.xlu0
        %v1681 = vpop.trf.xlu0
        %v1682 = vpop.trf.xlu0
        %v1683 = vpop.trf.xlu0
        %v1684 = vpop.trf.xlu0
        %v1685 = vpop.trf.xlu0
        %v1686 = vpop.trf.xlu0
        %1687 = vxpose.xlu0.c.b16.start [1/8] %v1264, 128
        %1688 = vxpose.xlu0.c.b16.cont [2/8] 0, 128
        %1689 = vxpose.xlu0.c.b16.cont [3/8] 0, 128
        %1690 = vxpose.xlu0.c.b16.cont [4/8] 0, 128
        %1691 = vxpose.xlu0.c.b16.cont [5/8] 0, 128
        %1692 = vxpose.xlu0.c.b16.cont [6/8] 0, 128
        %1693 = vxpose.xlu0.c.b16.cont [7/8] 0, 128
        %1694 = vxpose.xlu0.c.b16.end [8/8] 0, 128
        %v1695 = vpop.trf.xlu0
        %v1696 = vpop.trf.xlu0
        %v1697 = vpop.trf.xlu0
        %v1698 = vpop.trf.xlu0
        %v1699 = vpop.trf.xlu0
        %v1700 = vpop.trf.xlu0
        %v1701 = vpop.trf.xlu0
        %v1702 = vpop.trf.xlu0
        %1703 = vxpose.xlu0.c.b16.start [1/8] %v1330, 128
        %1704 = vxpose.xlu0.c.b16.cont [2/8] 0, 128
        %1705 = vxpose.xlu0.c.b16.cont [3/8] 0, 128
        %1706 = vxpose.xlu0.c.b16.cont [4/8] 0, 128
        %1707 = vxpose.xlu0.c.b16.cont [5/8] 0, 128
        %1708 = vxpose.xlu0.c.b16.cont [6/8] 0, 128
        %1709 = vxpose.xlu0.c.b16.cont [7/8] 0, 128
        %1710 = vxpose.xlu0.c.b16.end [8/8] 0, 128
        %v1711 = vpop.trf.xlu0
        %v1712 = vpop.trf.xlu0
        %v1713 = vpop.trf.xlu0
        %v1714 = vpop.trf.xlu0
        %v1715 = vpop.trf.xlu0
        %v1716 = vpop.trf.xlu0
        %v1717 = vpop.trf.xlu0
        %v1718 = vpop.trf.xlu0
        %1719 = vxpose.xlu0.c.b16.start [1/8] %v1369, 128
        %1720 = vxpose.xlu0.c.b16.cont [2/8] 0, 128
        %1721 = vxpose.xlu0.c.b16.cont [3/8] 0, 128
        %1722 = vxpose.xlu0.c.b16.cont [4/8] 0, 128
        %1723 = vxpose.xlu0.c.b16.cont [5/8] 0, 128
        %1724 = vxpose.xlu0.c.b16.cont [6/8] 0, 128
        %1725 = vxpose.xlu0.c.b16.cont [7/8] 0, 128
        %1726 = vxpose.xlu0.c.b16.end [8/8] 0, 128
        %v1727 = vpop.trf.xlu0
        %v1728 = vpop.trf.xlu0
        %v1729 = vpop.trf.xlu0
        %v1730 = vpop.trf.xlu0
        %v1731 = vpop.trf.xlu0
        %v1732 = vpop.trf.xlu0
        %v1733 = vpop.trf.xlu0
        %v1734 = vpop.trf.xlu0
        %1735 = vxpose.xlu0.c.b16.start [1/8] %v1435, 128
        %1736 = vxpose.xlu0.c.b16.cont [2/8] 0, 128
        %1737 = vxpose.xlu0.c.b16.cont [3/8] 0, 128
        %1738 = vxpose.xlu0.c.b16.cont [4/8] 0, 128
        %1739 = vxpose.xlu0.c.b16.cont [5/8] 0, 128
        %1740 = vxpose.xlu0.c.b16.cont [6/8] 0, 128
        %1741 = vxpose.xlu0.c.b16.cont [7/8] 0, 128
        %1742 = vxpose.xlu0.c.b16.end [8/8] 0, 128
        %v1743 = vpop.trf.xlu0
        %v1744 = vpop.trf.xlu0
        %v1745 = vpop.trf.xlu0
        %v1746 = vpop.trf.xlu0
        %v1747 = vpop.trf.xlu0
        %v1748 = vpop.trf.xlu0
        %v1749 = vpop.trf.xlu0
        %v1750 = vpop.trf.xlu0
        %1751 = vxpose.xlu0.c.b16.start [1/8] %v1393, 128
        %1752 = vxpose.xlu0.c.b16.cont [2/8] 0, 128
        %1753 = vxpose.xlu0.c.b16.cont [3/8] 0, 128
        %1754 = vxpose.xlu0.c.b16.cont [4/8] 0, 128
        %1755 = vxpose.xlu0.c.b16.cont [5/8] 0, 128
        %1756 = vxpose.xlu0.c.b16.cont [6/8] 0, 128
        %1757 = vxpose.xlu0.c.b16.cont [7/8] 0, 128
        %1758 = vxpose.xlu0.c.b16.end [8/8] 0, 128
        %v1759 = vpop.trf.xlu0
        %v1760 = vpop.trf.xlu0
        %v1761 = vpop.trf.xlu0
        %v1762 = vpop.trf.xlu0
        %v1763 = vpop.trf.xlu0
        %v1764 = vpop.trf.xlu0
        %v1765 = vpop.trf.xlu0
        %v1766 = vpop.trf.xlu0
        %1767 = vxpose.xlu0.c.b16.start [1/8] %v1459, 128
        %1768 = vxpose.xlu0.c.b16.cont [2/8] 0, 128
        %1769 = vxpose.xlu0.c.b16.cont [3/8] 0, 128
        %1770 = vxpose.xlu0.c.b16.cont [4/8] 0, 128
        %1771 = vxpose.xlu0.c.b16.cont [5/8] 0, 128
        %1772 = vxpose.xlu0.c.b16.cont [6/8] 0, 128
        %1773 = vxpose.xlu0.c.b16.cont [7/8] 0, 128
        %1774 = vxpose.xlu0.c.b16.end [8/8] 0, 128
        %v1775 = vpop.trf.xlu0
        %v1776 = vpop.trf.xlu0
        %v1777 = vpop.trf.xlu0
        %v1778 = vpop.trf.xlu0
        %v1779 = vpop.trf.xlu0
        %v1780 = vpop.trf.xlu0
        %v1781 = vpop.trf.xlu0
        %v1782 = vpop.trf.xlu0
        %1783 = vxpose.xlu0.c.b16.start [1/8] %v1376, 128
        %1784 = vxpose.xlu0.c.b16.cont [2/8] 0, 128
        %1785 = vxpose.xlu0.c.b16.cont [3/8] 0, 128
        %1786 = vxpose.xlu0.c.b16.cont [4/8] 0, 128
        %1787 = vxpose.xlu0.c.b16.cont [5/8] 0, 128
        %1788 = vxpose.xlu0.c.b16.cont [6/8] 0, 128
        %1789 = vxpose.xlu0.c.b16.cont [7/8] 0, 128
        %1790 = vxpose.xlu0.c.b16.end [8/8] 0, 128
        %v1791 = vpop.trf.xlu0
        %v1792 = vpop.trf.xlu0
        %v1793 = vpop.trf.xlu0
        %v1794 = vpop.trf.xlu0
        %v1795 = vpop.trf.xlu0
        %v1796 = vpop.trf.xlu0
        %v1797 = vpop.trf.xlu0
        %v1798 = vpop.trf.xlu0
        %1799 = vxpose.xlu0.c.b16.start [1/8] %v1442, 128
        %1800 = vxpose.xlu0.c.b16.cont [2/8] 0, 128
        %1801 = vxpose.xlu0.c.b16.cont [3/8] 0, 128
        %1802 = vxpose.xlu0.c.b16.cont [4/8] 0, 128
        %1803 = vxpose.xlu0.c.b16.cont [5/8] 0, 128
        %1804 = vxpose.xlu0.c.b16.cont [6/8] 0, 128
        %1805 = vxpose.xlu0.c.b16.cont [7/8] 0, 128
        %1806 = vxpose.xlu0.c.b16.end [8/8] 0, 128
        %v1807 = vpop.trf.xlu0
        %v1808 = vpop.trf.xlu0
        %v1809 = vpop.trf.xlu0
        %v1810 = vpop.trf.xlu0
        %v1811 = vpop.trf.xlu0
        %v1812 = vpop.trf.xlu0
        %v1813 = vpop.trf.xlu0
        %v1814 = vpop.trf.xlu0
        %1815 = vxpose.xlu0.c.b16.start [1/8] %v1394, 128
        %1816 = vxpose.xlu0.c.b16.cont [2/8] 0, 128
        %1817 = vxpose.xlu0.c.b16.cont [3/8] 0, 128
        %1818 = vxpose.xlu0.c.b16.cont [4/8] 0, 128
        %1819 = vxpose.xlu0.c.b16.cont [5/8] 0, 128
        %1820 = vxpose.xlu0.c.b16.cont [6/8] 0, 128
        %1821 = vxpose.xlu0.c.b16.cont [7/8] 0, 128
        %1822 = vxpose.xlu0.c.b16.end [8/8] 0, 128
        %v1823 = vpop.trf.xlu0
        %v1824 = vpop.trf.xlu0
        %v1825 = vpop.trf.xlu0
        %v1826 = vpop.trf.xlu0
        %v1827 = vpop.trf.xlu0
        %v1828 = vpop.trf.xlu0
        %v1829 = vpop.trf.xlu0
        %v1830 = vpop.trf.xlu0
        %1831 = vxpose.xlu0.c.b16.start [1/8] %v1460, 128
        %1832 = vxpose.xlu0.c.b16.cont [2/8] 0, 128
        %1833 = vxpose.xlu0.c.b16.cont [3/8] 0, 128
        %1834 = vxpose.xlu0.c.b16.cont [4/8] 0, 128
        %1835 = vxpose.xlu0.c.b16.cont [5/8] 0, 128
        %1836 = vxpose.xlu0.c.b16.cont [6/8] 0, 128
        %1837 = vxpose.xlu0.c.b16.cont [7/8] 0, 128
        %1838 = vxpose.xlu0.c.b16.end [8/8] 0, 128
        %v1839 = vpop.trf.xlu0
        %v1840 = vpop.trf.xlu0
        %v1841 = vpop.trf.xlu0
        %v1842 = vpop.trf.xlu0
        %v1843 = vpop.trf.xlu0
        %v1844 = vpop.trf.xlu0
        %v1845 = vpop.trf.xlu0
        %v1846 = vpop.trf.xlu0
        %1847 = vxpose.xlu0.c.b16.start [1/8] %v1385, 128
        %1848 = vxpose.xlu0.c.b16.cont [2/8] 0, 128
        %1849 = vxpose.xlu0.c.b16.cont [3/8] 0, 128
        %1850 = vxpose.xlu0.c.b16.cont [4/8] 0, 128
        %1851 = vxpose.xlu0.c.b16.cont [5/8] 0, 128
        %1852 = vxpose.xlu0.c.b16.cont [6/8] 0, 128
        %1853 = vxpose.xlu0.c.b16.cont [7/8] 0, 128
        %1854 = vxpose.xlu0.c.b16.end [8/8] 0, 128
        %v1855 = vpop.trf.xlu0
        %v1856 = vpop.trf.xlu0
        %v1857 = vpop.trf.xlu0
        %v1858 = vpop.trf.xlu0
        %v1859 = vpop.trf.xlu0
        %v1860 = vpop.trf.xlu0
        %v1861 = vpop.trf.xlu0
        %v1862 = vpop.trf.xlu0
        %1863 = vxpose.xlu0.c.b16.start [1/8] %v1451, 128
        %1864 = vxpose.xlu0.c.b16.cont [2/8] 0, 128
        %1865 = vxpose.xlu0.c.b16.cont [3/8] 0, 128
        %1866 = vxpose.xlu0.c.b16.cont [4/8] 0, 128
        %1867 = vxpose.xlu0.c.b16.cont [5/8] 0, 128
        %1868 = vxpose.xlu0.c.b16.cont [6/8] 0, 128
        %1869 = vxpose.xlu0.c.b16.cont [7/8] 0, 128
        %1870 = vxpose.xlu0.c.b16.end [8/8] 0, 128
        %v1871 = vpop.trf.xlu0
        %v1872 = vpop.trf.xlu0
        %v1873 = vpop.trf.xlu0
        %v1874 = vpop.trf.xlu0
        %v1875 = vpop.trf.xlu0
        %v1876 = vpop.trf.xlu0
        %v1877 = vpop.trf.xlu0
        %v1878 = vpop.trf.xlu0
        %1879 = vxpose.xlu0.c.b16.start [1/8] %v1395, 128
        %1880 = vxpose.xlu0.c.b16.cont [2/8] 0, 128
        %1881 = vxpose.xlu0.c.b16.cont [3/8] 0, 128
        %1882 = vxpose.xlu0.c.b16.cont [4/8] 0, 128
        %1883 = vxpose.xlu0.c.b16.cont [5/8] 0, 128
        %1884 = vxpose.xlu0.c.b16.cont [6/8] 0, 128
        %1885 = vxpose.xlu0.c.b16.cont [7/8] 0, 128
        %1886 = vxpose.xlu0.c.b16.end [8/8] 0, 128
        %v1887 = vpop.trf.xlu0
        %v1888 = vpop.trf.xlu0
        %v1889 = vpop.trf.xlu0
        %v1890 = vpop.trf.xlu0
        %v1891 = vpop.trf.xlu0
        %v1892 = vpop.trf.xlu0
        %v1893 = vpop.trf.xlu0
        %v1894 = vpop.trf.xlu0
        %1895 = vxpose.xlu0.c.b16.start [1/8] %v1461, 128
        %1896 = vxpose.xlu0.c.b16.cont [2/8] 0, 128
        %1897 = vxpose.xlu0.c.b16.cont [3/8] 0, 128
        %1898 = vxpose.xlu0.c.b16.cont [4/8] 0, 128
        %1899 = vxpose.xlu0.c.b16.cont [5/8] 0, 128
        %1900 = vxpose.xlu0.c.b16.cont [6/8] 0, 128
        %1901 = vxpose.xlu0.c.b16.cont [7/8] 0, 128
        %1902 = vxpose.xlu0.c.b16.end [8/8] 0, 128
        %v1903 = vpop.trf.xlu0
        %v1904 = vpop.trf.xlu0
        %v1905 = vpop.trf.xlu0
        %v1906 = vpop.trf.xlu0
        %v1907 = vpop.trf.xlu0
        %v1908 = vpop.trf.xlu0
        %v1909 = vpop.trf.xlu0
        %v1910 = vpop.trf.xlu0
        %1911 = vxpose.xlu0.c.b16.start [1/8] %v1392, 128
        %1912 = vxpose.xlu0.c.b16.cont [2/8] 0, 128
        %1913 = vxpose.xlu0.c.b16.cont [3/8] 0, 128
        %1914 = vxpose.xlu0.c.b16.cont [4/8] 0, 128
        %1915 = vxpose.xlu0.c.b16.cont [5/8] 0, 128
        %1916 = vxpose.xlu0.c.b16.cont [6/8] 0, 128
        %1917 = vxpose.xlu0.c.b16.cont [7/8] 0, 128
        %1918 = vxpose.xlu0.c.b16.end [8/8] 0, 128
        %v1919 = vpop.trf.xlu0
        %v1920 = vpop.trf.xlu0
        %v1921 = vpop.trf.xlu0
        %v1922 = vpop.trf.xlu0
        %v1923 = vpop.trf.xlu0
        %v1924 = vpop.trf.xlu0
        %v1925 = vpop.trf.xlu0
        %v1926 = vpop.trf.xlu0
        %1927 = vxpose.xlu0.c.b16.start [1/8] %v1458, 128
        %1928 = vxpose.xlu0.c.b16.cont [2/8] 0, 128
        %1929 = vxpose.xlu0.c.b16.cont [3/8] 0, 128
        %1930 = vxpose.xlu0.c.b16.cont [4/8] 0, 128
        %1931 = vxpose.xlu0.c.b16.cont [5/8] 0, 128
        %1932 = vxpose.xlu0.c.b16.cont [6/8] 0, 128
        %1933 = vxpose.xlu0.c.b16.cont [7/8] 0, 128
        %1934 = vxpose.xlu0.c.b16.end [8/8] 0, 128
        %v1935 = vpop.trf.xlu0
        %v1936 = vpop.trf.xlu0
        %v1937 = vpop.trf.xlu0
        %v1938 = vpop.trf.xlu0
        %v1939 = vpop.trf.xlu0
        %v1940 = vpop.trf.xlu0
        %v1941 = vpop.trf.xlu0
        %v1942 = vpop.trf.xlu0
        %1943 = vxpose.xlu0.c.b16.start [1/8] %v1396, 128
        %1944 = vxpose.xlu0.c.b16.cont [2/8] 0, 128
        %1945 = vxpose.xlu0.c.b16.cont [3/8] 0, 128
        %1946 = vxpose.xlu0.c.b16.cont [4/8] 0, 128
        %1947 = vxpose.xlu0.c.b16.cont [5/8] 0, 128
        %1948 = vxpose.xlu0.c.b16.cont [6/8] 0, 128
        %1949 = vxpose.xlu0.c.b16.cont [7/8] 0, 128
        %1950 = vxpose.xlu0.c.b16.end [8/8] 0, 128
        %v1951 = vpop.trf.xlu0
        %v1952 = vpop.trf.xlu0
        %v1953 = vpop.trf.xlu0
        %v1954 = vpop.trf.xlu0
        %v1955 = vpop.trf.xlu0
        %v1956 = vpop.trf.xlu0
        %v1957 = vpop.trf.xlu0
        %v1958 = vpop.trf.xlu0
        %1959 = vxpose.xlu0.c.b16.start [1/8] %v1462, 128
        %1960 = vxpose.xlu0.c.b16.cont [2/8] 0, 128
        %1961 = vxpose.xlu0.c.b16.cont [3/8] 0, 128
        %1962 = vxpose.xlu0.c.b16.cont [4/8] 0, 128
        %1963 = vxpose.xlu0.c.b16.cont [5/8] 0, 128
        %1964 = vxpose.xlu0.c.b16.cont [6/8] 0, 128
        %1965 = vxpose.xlu0.c.b16.cont [7/8] 0, 128
        %1966 = vxpose.xlu0.c.b16.end [8/8] 0, 128
        %v1967 = vpop.trf.xlu0
        %v1968 = vpop.trf.xlu0
        %v1969 = vpop.trf.xlu0
        %v1970 = vpop.trf.xlu0
        %v1971 = vpop.trf.xlu0
        %v1972 = vpop.trf.xlu0
        %v1973 = vpop.trf.xlu0
        %v1974 = vpop.trf.xlu0
        %v1975 = vcombine.low %v1471, %v1535
        %v1977 = vunpack.c.l.s4 1983009808
        %v1978 = vunpack.c.0.s8 %v1977
        %v1979 = vlaneseq
        %v1980 = vshrl.u32 %v1979, 7
        %v1981 = vsub.s32 %v1978, %v1980
        %v1982 = vrot.slane %v1975, %v1981
        %v1983 = vcombine.low %v1503, %v1567
        %v1985 = vunpack.c.l.s4 1983009808
        %v1986 = vunpack.c.0.s8 %v1985
        %v1987 = vlaneseq
        %v1988 = vshrl.u32 %v1987, 7
        %v1989 = vsub.s32 %v1986, %v1988
        %v1990 = vrot.slane %v1983, %v1989
        %v1991 = vcombine.low %v1599, %v1663
        %v1993 = vunpack.c.l.s4 1983009808
        %v1994 = vunpack.c.0.s8 %v1993
        %v1995 = vlaneseq
        %v1996 = vshrl.u32 %v1995, 7
        %v1997 = vsub.s32 %v1994, %v1996
        %v1998 = vrot.slane %v1991, %v1997
        %v1999 = vcombine.low %v1631, %v1695
        %v2001 = vunpack.c.l.s4 1983009808
        %v2002 = vunpack.c.0.s8 %v2001
        %v2003 = vlaneseq
        %v2004 = vshrl.u32 %v2003, 7
        %v2005 = vsub.s32 %v2002, %v2004
        %v2006 = vrot.slane %v1999, %v2005
        %v2007 = vcombine.low %v1982, %v1990
        %v2008 = vcombine.high %v1982, %v1990
        %v2010 = vunpack.c.l.s4 1934713408
        %v2011 = vunpack.c.0.s8 %v2010
        %v2012 = vlaneseq
        %v2013 = vshrl.u32 %v2012, 7
        %v2014 = vsub.s32 %v2011, %v2013
        %v2015 = vrot.slane %v2007, %v2014
        %v2017 = vunpack.c.l.s4 1934713408
        %v2018 = vunpack.c.0.s8 %v2017
        %v2019 = vlaneseq
        %v2020 = vshrl.u32 %v2019, 7
        %v2021 = vsub.s32 %v2018, %v2020
        %v2022 = vrot.slane %v2008, %v2021
        %v2023 = vcombine.low %v1998, %v2006
        %v2024 = vcombine.high %v1998, %v2006
        %v2026 = vunpack.c.l.s4 1934713408
        %v2027 = vunpack.c.0.s8 %v2026
        %v2028 = vlaneseq
        %v2029 = vshrl.u32 %v2028, 7
        %v2030 = vsub.s32 %v2027, %v2029
        %v2031 = vrot.slane %v2023, %v2030
        %v2033 = vunpack.c.l.s4 1934713408
        %v2034 = vunpack.c.0.s8 %v2033
        %v2035 = vlaneseq
        %v2036 = vshrl.u32 %v2035, 7
        %v2037 = vsub.s32 %v2034, %v2036
        %v2038 = vrot.slane %v2024, %v2037
        %v2039 = vcombine.low %v2015, %v2031
        %v2040 = vcombine.high %v2015, %v2031
        %v2041 = vcombine.low %v2022, %v2038
        %v2042 = vcombine.high %v2022, %v2038
        %v2043 = vcombine.low %v1487, %v1551
        %v2045 = vunpack.c.l.s4 1983009808
        %v2046 = vunpack.c.0.s8 %v2045
        %v2047 = vlaneseq
        %v2048 = vshrl.u32 %v2047, 7
        %v2049 = vsub.s32 %v2046, %v2048
        %v2050 = vrot.slane %v2043, %v2049
        %v2051 = vcombine.low %v1519, %v1583
        %v2053 = vunpack.c.l.s4 1983009808
        %v2054 = vunpack.c.0.s8 %v2053
        %v2055 = vlaneseq
        %v2056 = vshrl.u32 %v2055, 7
        %v2057 = vsub.s32 %v2054, %v2056
        %v2058 = vrot.slane %v2051, %v2057
        %v2059 = vcombine.low %v1615, %v1679
        %v2061 = vunpack.c.l.s4 1983009808
        %v2062 = vunpack.c.0.s8 %v2061
        %v2063 = vlaneseq
        %v2064 = vshrl.u32 %v2063, 7
        %v2065 = vsub.s32 %v2062, %v2064
        %v2066 = vrot.slane %v2059, %v2065
        %v2067 = vcombine.low %v1647, %v1711
        %v2069 = vunpack.c.l.s4 1983009808
        %v2070 = vunpack.c.0.s8 %v2069
        %v2071 = vlaneseq
        %v2072 = vshrl.u32 %v2071, 7
        %v2073 = vsub.s32 %v2070, %v2072
        %v2074 = vrot.slane %v2067, %v2073
        %v2075 = vcombine.low %v2050, %v2058
        %v2076 = vcombine.high %v2050, %v2058
        %v2078 = vunpack.c.l.s4 1934713408
        %v2079 = vunpack.c.0.s8 %v2078
        %v2080 = vlaneseq
        %v2081 = vshrl.u32 %v2080, 7
        %v2082 = vsub.s32 %v2079, %v2081
        %v2083 = vrot.slane %v2075, %v2082
        %v2085 = vunpack.c.l.s4 1934713408
        %v2086 = vunpack.c.0.s8 %v2085
        %v2087 = vlaneseq
        %v2088 = vshrl.u32 %v2087, 7
        %v2089 = vsub.s32 %v2086, %v2088
        %v2090 = vrot.slane %v2076, %v2089
        %v2091 = vcombine.low %v2066, %v2074
        %v2092 = vcombine.high %v2066, %v2074
        %v2094 = vunpack.c.l.s4 1934713408
        %v2095 = vunpack.c.0.s8 %v2094
        %v2096 = vlaneseq
        %v2097 = vshrl.u32 %v2096, 7
        %v2098 = vsub.s32 %v2095, %v2097
        %v2099 = vrot.slane %v2091, %v2098
        %v2101 = vunpack.c.l.s4 1934713408
        %v2102 = vunpack.c.0.s8 %v2101
        %v2103 = vlaneseq
        %v2104 = vshrl.u32 %v2103, 7
        %v2105 = vsub.s32 %v2102, %v2104
        %v2106 = vrot.slane %v2092, %v2105
        %v2107 = vcombine.low %v2083, %v2099
        %v2108 = vcombine.high %v2083, %v2099
        %v2109 = vcombine.low %v2090, %v2106
        %v2110 = vcombine.high %v2090, %v2106
        %v2111 = vcombine.low %v1727, %v1791
        %v2113 = vunpack.c.l.s4 1983009808
        %v2114 = vunpack.c.0.s8 %v2113
        %v2115 = vlaneseq
        %v2116 = vshrl.u32 %v2115, 7
        %v2117 = vsub.s32 %v2114, %v2116
        %v2118 = vrot.slane %v2111, %v2117
        %v2119 = vcombine.low %v1759, %v1823
        %v2121 = vunpack.c.l.s4 1983009808
        %v2122 = vunpack.c.0.s8 %v2121
        %v2123 = vlaneseq
        %v2124 = vshrl.u32 %v2123, 7
        %v2125 = vsub.s32 %v2122, %v2124
        %v2126 = vrot.slane %v2119, %v2125
        %v2127 = vcombine.low %v1855, %v1919
        %v2129 = vunpack.c.l.s4 1983009808
        %v2130 = vunpack.c.0.s8 %v2129
        %v2131 = vlaneseq
        %v2132 = vshrl.u32 %v2131, 7
        %v2133 = vsub.s32 %v2130, %v2132
        %v2134 = vrot.slane %v2127, %v2133
        %v2135 = vcombine.low %v1887, %v1951
        %v2137 = vunpack.c.l.s4 1983009808
        %v2138 = vunpack.c.0.s8 %v2137
        %v2139 = vlaneseq
        %v2140 = vshrl.u32 %v2139, 7
        %v2141 = vsub.s32 %v2138, %v2140
        %v2142 = vrot.slane %v2135, %v2141
        %v2143 = vcombine.low %v2118, %v2126
        %v2144 = vcombine.high %v2118, %v2126
        %v2146 = vunpack.c.l.s4 1934713408
        %v2147 = vunpack.c.0.s8 %v2146
        %v2148 = vlaneseq
        %v2149 = vshrl.u32 %v2148, 7
        %v2150 = vsub.s32 %v2147, %v2149
        %v2151 = vrot.slane %v2143, %v2150
        %v2153 = vunpack.c.l.s4 1934713408
        %v2154 = vunpack.c.0.s8 %v2153
        %v2155 = vlaneseq
        %v2156 = vshrl.u32 %v2155, 7
        %v2157 = vsub.s32 %v2154, %v2156
        %v2158 = vrot.slane %v2144, %v2157
        %v2159 = vcombine.low %v2134, %v2142
        %v2160 = vcombine.high %v2134, %v2142
        %v2162 = vunpack.c.l.s4 1934713408
        %v2163 = vunpack.c.0.s8 %v2162
        %v2164 = vlaneseq
        %v2165 = vshrl.u32 %v2164, 7
        %v2166 = vsub.s32 %v2163, %v2165
        %v2167 = vrot.slane %v2159, %v2166
        %v2169 = vunpack.c.l.s4 1934713408
        %v2170 = vunpack.c.0.s8 %v2169
        %v2171 = vlaneseq
        %v2172 = vshrl.u32 %v2171, 7
        %v2173 = vsub.s32 %v2170, %v2172
        %v2174 = vrot.slane %v2160, %v2173
        %v2175 = vcombine.low %v2151, %v2167
        %v2176 = vcombine.high %v2151, %v2167
        %v2177 = vcombine.low %v2158, %v2174
        %v2178 = vcombine.high %v2158, %v2174
        %v2179 = vcombine.low %v1743, %v1807
        %v2181 = vunpack.c.l.s4 1983009808
        %v2182 = vunpack.c.0.s8 %v2181
        %v2183 = vlaneseq
        %v2184 = vshrl.u32 %v2183, 7
        %v2185 = vsub.s32 %v2182, %v2184
        %v2186 = vrot.slane %v2179, %v2185
        %v2187 = vcombine.low %v1775, %v1839
        %v2189 = vunpack.c.l.s4 1983009808
        %v2190 = vunpack.c.0.s8 %v2189
        %v2191 = vlaneseq
        %v2192 = vshrl.u32 %v2191, 7
        %v2193 = vsub.s32 %v2190, %v2192
        %v2194 = vrot.slane %v2187, %v2193
        %v2195 = vcombine.low %v1871, %v1935
        %v2197 = vunpack.c.l.s4 1983009808
        %v2198 = vunpack.c.0.s8 %v2197
        %v2199 = vlaneseq
        %v2200 = vshrl.u32 %v2199, 7
        %v2201 = vsub.s32 %v2198, %v2200
        %v2202 = vrot.slane %v2195, %v2201
        %v2203 = vcombine.low %v1903, %v1967
        %v2205 = vunpack.c.l.s4 1983009808
        %v2206 = vunpack.c.0.s8 %v2205
        %v2207 = vlaneseq
        %v2208 = vshrl.u32 %v2207, 7
        %v2209 = vsub.s32 %v2206, %v2208
        %v2210 = vrot.slane %v2203, %v2209
        %v2211 = vcombine.low %v2186, %v2194
        %v2212 = vcombine.high %v2186, %v2194
        %v2214 = vunpack.c.l.s4 1934713408
        %v2215 = vunpack.c.0.s8 %v2214
        %v2216 = vlaneseq
        %v2217 = vshrl.u32 %v2216, 7
        %v2218 = vsub.s32 %v2215, %v2217
        %v2219 = vrot.slane %v2211, %v2218
        %v2221 = vunpack.c.l.s4 1934713408
        %v2222 = vunpack.c.0.s8 %v2221
        %v2223 = vlaneseq
        %v2224 = vshrl.u32 %v2223, 7
        %v2225 = vsub.s32 %v2222, %v2224
        %v2226 = vrot.slane %v2212, %v2225
        %v2227 = vcombine.low %v2202, %v2210
        %v2228 = vcombine.high %v2202, %v2210
        %v2230 = vunpack.c.l.s4 1934713408
        %v2231 = vunpack.c.0.s8 %v2230
        %v2232 = vlaneseq
        %v2233 = vshrl.u32 %v2232, 7
        %v2234 = vsub.s32 %v2231, %v2233
        %v2235 = vrot.slane %v2227, %v2234
        %v2237 = vunpack.c.l.s4 1934713408
        %v2238 = vunpack.c.0.s8 %v2237
        %v2239 = vlaneseq
        %v2240 = vshrl.u32 %v2239, 7
        %v2241 = vsub.s32 %v2238, %v2240
        %v2242 = vrot.slane %v2228, %v2241
        %v2243 = vcombine.low %v2219, %v2235
        %v2244 = vcombine.high %v2219, %v2235
        %v2245 = vcombine.low %v2226, %v2242
        %v2246 = vcombine.high %v2226, %v2242
        %v2249 = vpack.i.b16 %v2107, %v2039
        %v2251 = vshrl.u32 %v2039, 16
        %v2252 = vshrl.u32 %v2107, 16
        %v2253 = vpack.i.b16 %v2252, %v2251
        %v2257 = vpack.i.b16 %v2108, %v2040
        %v2259 = vshrl.u32 %v2040, 16
        %v2260 = vshrl.u32 %v2108, 16
        %v2261 = vpack.i.b16 %v2260, %v2259
        %v2265 = vpack.i.b16 %v2109, %v2041
        %v2267 = vshrl.u32 %v2041, 16
        %v2268 = vshrl.u32 %v2109, 16
        %v2269 = vpack.i.b16 %v2268, %v2267
        %v2273 = vpack.i.b16 %v2110, %v2042
        %v2275 = vshrl.u32 %v2042, 16
        %v2276 = vshrl.u32 %v2110, 16
        %v2277 = vpack.i.b16 %v2276, %v2275
        %v2281 = vpack.i.b16 %v2243, %v2175
        %v2283 = vshrl.u32 %v2175, 16
        %v2284 = vshrl.u32 %v2243, 16
        %v2285 = vpack.i.b16 %v2284, %v2283
        %v2289 = vpack.i.b16 %v2244, %v2176
        %v2291 = vshrl.u32 %v2176, 16
        %v2292 = vshrl.u32 %v2244, 16
        %v2293 = vpack.i.b16 %v2292, %v2291
        %v2297 = vpack.i.b16 %v2245, %v2177
        %v2299 = vshrl.u32 %v2177, 16
        %v2300 = vshrl.u32 %v2245, 16
        %v2301 = vpack.i.b16 %v2300, %v2299
        %v2305 = vpack.i.b16 %v2246, %v2178
        %v2307 = vshrl.u32 %v2178, 16
        %v2308 = vshrl.u32 %v2246, 16
        %v2309 = vpack.i.b16 %v2308, %v2307
        %v2313 = vunpack.c.l.b16 %v592
        %v2314 = vunpack.c.l.b16 %v593
        %v2315 = vpack.c.b16 %v2314, %v2313
        %v2317 = vsel %vm632, %v2315, 0
        %2319 = vmatprep.subr.bf16.mxu0 0
        %2320 = vmatpush1.bf16.msra.mxu0 %v2249
        %2321 = vmatprep.subr.bf16.mxu0 0
        %2322 = vmatpush1.bf16.msra.mxu0 %v2281
        %2323 = vmatprep.subr.bf16.mxu0 0
        %2324 = vmatpush1.bf16.msra.mxu0 0
        %2325 = vmatprep.subr.bf16.mxu0 0
        %2326 = vmatpush1.bf16.msra.mxu0 0
        %2327 = vmatprep.subr.bf16.mxu0 0
        %2328 = vmatpush1.bf16.msra.mxu0 0
        %2329 = vmatprep.subr.bf16.mxu0 0
        %2330 = vmatpush1.bf16.msra.mxu0 0
        %2331 = vmatprep.subr.bf16.mxu0 0
        %2332 = vmatpush1.bf16.msra.mxu0 0
        %2333 = vmatprep.subr.bf16.mxu0 0
        %2334 = vmatpush1.bf16.msra.mxu0 0
        %2335 = vmatprep.subr.bf16.mxu0 0
        %2336 = vmatpush1.bf16.msra.mxu0 0
        %2337 = vmatprep.subr.bf16.mxu0 0
        %2338 = vmatpush1.bf16.msra.mxu0 0
        %2339 = vmatprep.subr.bf16.mxu0 0
        %2340 = vmatpush1.bf16.msra.mxu0 0
        %2341 = vmatprep.subr.bf16.mxu0 0
        %2342 = vmatpush1.bf16.msra.mxu0 0
        %2343 = vmatprep.subr.bf16.mxu0 0
        %2344 = vmatpush1.bf16.msra.mxu0 0
        %2345 = vmatprep.subr.bf16.mxu0 0
        %2346 = vmatpush1.bf16.msra.mxu0 0
        %2347 = vmatprep.subr.bf16.mxu0 0
        %2348 = vmatpush1.bf16.msra.mxu0 0
        %2349 = vmatprep.subr.bf16.mxu0 0
        %2350 = vmatpush1.bf16.msra.mxu0 0
        %2351 = vmatprep.mubr.bf16.mxu0 0
        %2352 = vmatmul.mubr.bf16.gmra.mrb[0].mxu0 %v2317
        %v2353 = vpop.f32.mrb[0].mxu0
        %v2354 = vadd.f32 0.0, %v2353
        %v2355 = vpop.f32.mrb[0].mxu0
        %v2356 = vpop.f32.mrb[0].mxu0
        %v2357 = vadd.f32 0.0, %v2356
        %v2358 = vpop.f32.mrb[0].mxu0
        %2359 = vdwg.mxu0
        %v2362 = vunpack.c.l.b16 %v594
        %v2363 = vunpack.c.l.b16 %v595
        %v2364 = vpack.c.b16 %v2363, %v2362
        %v2366 = vsel %vm632, %v2364, 0
        %2368 = vmatprep.subr.bf16.mxu0 0
        %2369 = vmatpush1.bf16.msra.mxu0 %v2253
        %2370 = vmatprep.subr.bf16.mxu0 0
        %2371 = vmatpush1.bf16.msra.mxu0 %v2285
        %2372 = vmatprep.subr.bf16.mxu0 0
        %2373 = vmatpush1.bf16.msra.mxu0 0
        %2374 = vmatprep.subr.bf16.mxu0 0
        %2375 = vmatpush1.bf16.msra.mxu0 0
        %2376 = vmatprep.subr.bf16.mxu0 0
        %2377 = vmatpush1.bf16.msra.mxu0 0
        %2378 = vmatprep.subr.bf16.mxu0 0
        %2379 = vmatpush1.bf16.msra.mxu0 0
        %2380 = vmatprep.subr.bf16.mxu0 0
        %2381 = vmatpush1.bf16.msra.mxu0 0
        %2382 = vmatprep.subr.bf16.mxu0 0
        %2383 = vmatpush1.bf16.msra.mxu0 0
        %2384 = vmatprep.subr.bf16.mxu0 0
        %2385 = vmatpush1.bf16.msra.mxu0 0
        %2386 = vmatprep.subr.bf16.mxu0 0
        %2387 = vmatpush1.bf16.msra.mxu0 0
        %2388 = vmatprep.subr.bf16.mxu0 0
        %2389 = vmatpush1.bf16.msra.mxu0 0
        %2390 = vmatprep.subr.bf16.mxu0 0
        %2391 = vmatpush1.bf16.msra.mxu0 0
        %2392 = vmatprep.subr.bf16.mxu0 0
        %2393 = vmatpush1.bf16.msra.mxu0 0
        %2394 = vmatprep.subr.bf16.mxu0 0
        %2395 = vmatpush1.bf16.msra.mxu0 0
        %2396 = vmatprep.subr.bf16.mxu0 0
        %2397 = vmatpush1.bf16.msra.mxu0 0
        %2398 = vmatprep.subr.bf16.mxu0 0
        %2399 = vmatpush1.bf16.msra.mxu0 0
        %2400 = vmatprep.mubr.bf16.mxu0 0
        %2401 = vmatmul.mubr.bf16.gmra.mrb[0].mxu0 %v2366
        %v2402 = vpop.f32.mrb[0].mxu0
        %v2403 = vadd.f32 0.0, %v2402
        %v2404 = vpop.f32.mrb[0].mxu0
        %v2405 = vpop.f32.mrb[0].mxu0
        %v2406 = vadd.f32 0.0, %v2405
        %v2407 = vpop.f32.mrb[0].mxu0
        %2408 = vdwg.mxu0
        %v2411 = vunpack.c.l.b16 %v596
        %v2412 = vunpack.c.l.b16 %v597
        %v2413 = vpack.c.b16 %v2412, %v2411
        %v2415 = vsel %vm632, %v2413, 0
        %2417 = vmatprep.subr.bf16.mxu0 0
        %2418 = vmatpush1.bf16.msra.mxu0 %v2257
        %2419 = vmatprep.subr.bf16.mxu0 0
        %2420 = vmatpush1.bf16.msra.mxu0 %v2289
        %2421 = vmatprep.subr.bf16.mxu0 0
        %2422 = vmatpush1.bf16.msra.mxu0 0
        %2423 = vmatprep.subr.bf16.mxu0 0
        %2424 = vmatpush1.bf16.msra.mxu0 0
        %2425 = vmatprep.subr.bf16.mxu0 0
        %2426 = vmatpush1.bf16.msra.mxu0 0
        %2427 = vmatprep.subr.bf16.mxu0 0
        %2428 = vmatpush1.bf16.msra.mxu0 0
        %2429 = vmatprep.subr.bf16.mxu0 0
        %2430 = vmatpush1.bf16.msra.mxu0 0
        %2431 = vmatprep.subr.bf16.mxu0 0
        %2432 = vmatpush1.bf16.msra.mxu0 0
        %2433 = vmatprep.subr.bf16.mxu0 0
        %2434 = vmatpush1.bf16.msra.mxu0 0
        %2435 = vmatprep.subr.bf16.mxu0 0
        %2436 = vmatpush1.bf16.msra.mxu0 0
        %2437 = vmatprep.subr.bf16.mxu0 0
        %2438 = vmatpush1.bf16.msra.mxu0 0
        %2439 = vmatprep.subr.bf16.mxu0 0
        %2440 = vmatpush1.bf16.msra.mxu0 0
        %2441 = vmatprep.subr.bf16.mxu0 0
        %2442 = vmatpush1.bf16.msra.mxu0 0
        %2443 = vmatprep.subr.bf16.mxu0 0
        %2444 = vmatpush1.bf16.msra.mxu0 0
        %2445 = vmatprep.subr.bf16.mxu0 0
        %2446 = vmatpush1.bf16.msra.mxu0 0
        %2447 = vmatprep.subr.bf16.mxu0 0
        %2448 = vmatpush1.bf16.msra.mxu0 0
        %2449 = vmatprep.mubr.bf16.mxu0 0
        %2450 = vmatmul.mubr.bf16.gmra.mrb[0].mxu0 %v2415
        %v2451 = vpop.f32.mrb[0].mxu0
        %v2452 = vadd.f32 0.0, %v2451
        %v2453 = vpop.f32.mrb[0].mxu0
        %v2454 = vpop.f32.mrb[0].mxu0
        %v2455 = vadd.f32 0.0, %v2454
        %v2456 = vpop.f32.mrb[0].mxu0
        %2457 = vdwg.mxu0
        %v2460 = vunpack.c.l.b16 %v598
        %v2461 = vunpack.c.l.b16 %v599
        %v2462 = vpack.c.b16 %v2461, %v2460
        %v2464 = vsel %vm632, %v2462, 0
        %2466 = vmatprep.subr.bf16.mxu0 0
        %2467 = vmatpush1.bf16.msra.mxu0 %v2261
        %2468 = vmatprep.subr.bf16.mxu0 0
        %2469 = vmatpush1.bf16.msra.mxu0 %v2293
        %2470 = vmatprep.subr.bf16.mxu0 0
        %2471 = vmatpush1.bf16.msra.mxu0 0
        %2472 = vmatprep.subr.bf16.mxu0 0
        %2473 = vmatpush1.bf16.msra.mxu0 0
        %2474 = vmatprep.subr.bf16.mxu0 0
        %2475 = vmatpush1.bf16.msra.mxu0 0
        %2476 = vmatprep.subr.bf16.mxu0 0
        %2477 = vmatpush1.bf16.msra.mxu0 0
        %2478 = vmatprep.subr.bf16.mxu0 0
        %2479 = vmatpush1.bf16.msra.mxu0 0
        %2480 = vmatprep.subr.bf16.mxu0 0
        %2481 = vmatpush1.bf16.msra.mxu0 0
        %2482 = vmatprep.subr.bf16.mxu0 0
        %2483 = vmatpush1.bf16.msra.mxu0 0
        %2484 = vmatprep.subr.bf16.mxu0 0
        %2485 = vmatpush1.bf16.msra.mxu0 0
        %2486 = vmatprep.subr.bf16.mxu0 0
        %2487 = vmatpush1.bf16.msra.mxu0 0
        %2488 = vmatprep.subr.bf16.mxu0 0
        %2489 = vmatpush1.bf16.msra.mxu0 0
        %2490 = vmatprep.subr.bf16.mxu0 0
        %2491 = vmatpush1.bf16.msra.mxu0 0
        %2492 = vmatprep.subr.bf16.mxu0 0
        %2493 = vmatpush1.bf16.msra.mxu0 0
        %2494 = vmatprep.subr.bf16.mxu0 0
        %2495 = vmatpush1.bf16.msra.mxu0 0
        %2496 = vmatprep.subr.bf16.mxu0 0
        %2497 = vmatpush1.bf16.msra.mxu0 0
        %2498 = vmatprep.mubr.bf16.mxu0 0
        %2499 = vmatmul.mubr.bf16.gmra.mrb[0].mxu0 %v2464
        %v2500 = vpop.f32.mrb[0].mxu0
        %v2501 = vadd.f32 0.0, %v2500
        %v2502 = vpop.f32.mrb[0].mxu0
        %v2503 = vpop.f32.mrb[0].mxu0
        %v2504 = vadd.f32 0.0, %v2503
        %v2505 = vpop.f32.mrb[0].mxu0
        %2506 = vdwg.mxu0
        %v2509 = vunpack.c.l.b16 %v600
        %v2510 = vunpack.c.l.b16 %v601
        %v2511 = vpack.c.b16 %v2510, %v2509
        %v2513 = vsel %vm632, %v2511, 0
        %2515 = vmatprep.subr.bf16.mxu0 0
        %2516 = vmatpush1.bf16.msra.mxu0 %v2265
        %2517 = vmatprep.subr.bf16.mxu0 0
        %2518 = vmatpush1.bf16.msra.mxu0 %v2297
        %2519 = vmatprep.subr.bf16.mxu0 0
        %2520 = vmatpush1.bf16.msra.mxu0 0
        %2521 = vmatprep.subr.bf16.mxu0 0
        %2522 = vmatpush1.bf16.msra.mxu0 0
        %2523 = vmatprep.subr.bf16.mxu0 0
        %2524 = vmatpush1.bf16.msra.mxu0 0
        %2525 = vmatprep.subr.bf16.mxu0 0
        %2526 = vmatpush1.bf16.msra.mxu0 0
        %2527 = vmatprep.subr.bf16.mxu0 0
        %2528 = vmatpush1.bf16.msra.mxu0 0
        %2529 = vmatprep.subr.bf16.mxu0 0
        %2530 = vmatpush1.bf16.msra.mxu0 0
        %2531 = vmatprep.subr.bf16.mxu0 0
        %2532 = vmatpush1.bf16.msra.mxu0 0
        %2533 = vmatprep.subr.bf16.mxu0 0
        %2534 = vmatpush1.bf16.msra.mxu0 0
        %2535 = vmatprep.subr.bf16.mxu0 0
        %2536 = vmatpush1.bf16.msra.mxu0 0
        %2537 = vmatprep.subr.bf16.mxu0 0
        %2538 = vmatpush1.bf16.msra.mxu0 0
        %2539 = vmatprep.subr.bf16.mxu0 0
        %2540 = vmatpush1.bf16.msra.mxu0 0
        %2541 = vmatprep.subr.bf16.mxu0 0
        %2542 = vmatpush1.bf16.msra.mxu0 0
        %2543 = vmatprep.subr.bf16.mxu0 0
        %2544 = vmatpush1.bf16.msra.mxu0 0
        %2545 = vmatprep.subr.bf16.mxu0 0
        %2546 = vmatpush1.bf16.msra.mxu0 0
        %2547 = vmatprep.mubr.bf16.mxu0 0
        %2548 = vmatmul.mubr.bf16.gmra.mrb[0].mxu0 %v2513
        %v2549 = vpop.f32.mrb[0].mxu0
        %v2550 = vadd.f32 0.0, %v2549
        %v2551 = vpop.f32.mrb[0].mxu0
        %v2552 = vpop.f32.mrb[0].mxu0
        %v2553 = vadd.f32 0.0, %v2552
        %v2554 = vpop.f32.mrb[0].mxu0
        %2555 = vdwg.mxu0
        %v2558 = vunpack.c.l.b16 %v602
        %v2559 = vunpack.c.l.b16 %v603
        %v2560 = vpack.c.b16 %v2559, %v2558
        %v2562 = vsel %vm632, %v2560, 0
        %2564 = vmatprep.subr.bf16.mxu0 0
        %2565 = vmatpush1.bf16.msra.mxu0 %v2269
        %2566 = vmatprep.subr.bf16.mxu0 0
        %2567 = vmatpush1.bf16.msra.mxu0 %v2301
        %2568 = vmatprep.subr.bf16.mxu0 0
        %2569 = vmatpush1.bf16.msra.mxu0 0
        %2570 = vmatprep.subr.bf16.mxu0 0
        %2571 = vmatpush1.bf16.msra.mxu0 0
        %2572 = vmatprep.subr.bf16.mxu0 0
        %2573 = vmatpush1.bf16.msra.mxu0 0
        %2574 = vmatprep.subr.bf16.mxu0 0
        %2575 = vmatpush1.bf16.msra.mxu0 0
        %2576 = vmatprep.subr.bf16.mxu0 0
        %2577 = vmatpush1.bf16.msra.mxu0 0
        %2578 = vmatprep.subr.bf16.mxu0 0
        %2579 = vmatpush1.bf16.msra.mxu0 0
        %2580 = vmatprep.subr.bf16.mxu0 0
        %2581 = vmatpush1.bf16.msra.mxu0 0
        %2582 = vmatprep.subr.bf16.mxu0 0
        %2583 = vmatpush1.bf16.msra.mxu0 0
        %2584 = vmatprep.subr.bf16.mxu0 0
        %2585 = vmatpush1.bf16.msra.mxu0 0
        %2586 = vmatprep.subr.bf16.mxu0 0
        %2587 = vmatpush1.bf16.msra.mxu0 0
        %2588 = vmatprep.subr.bf16.mxu0 0
        %2589 = vmatpush1.bf16.msra.mxu0 0
        %2590 = vmatprep.subr.bf16.mxu0 0
        %2591 = vmatpush1.bf16.msra.mxu0 0
        %2592 = vmatprep.subr.bf16.mxu0 0
        %2593 = vmatpush1.bf16.msra.mxu0 0
        %2594 = vmatprep.subr.bf16.mxu0 0
        %2595 = vmatpush1.bf16.msra.mxu0 0
        %2596 = vmatprep.mubr.bf16.mxu0 0
        %2597 = vmatmul.mubr.bf16.gmra.mrb[0].mxu0 %v2562
        %v2598 = vpop.f32.mrb[0].mxu0
        %v2599 = vadd.f32 0.0, %v2598
        %v2600 = vpop.f32.mrb[0].mxu0
        %v2601 = vpop.f32.mrb[0].mxu0
        %v2602 = vadd.f32 0.0, %v2601
        %v2603 = vpop.f32.mrb[0].mxu0
        %2604 = vdwg.mxu0
        %v2607 = vunpack.c.l.b16 %v604
        %v2608 = vunpack.c.l.b16 %v605
        %v2609 = vpack.c.b16 %v2608, %v2607
        %v2611 = vsel %vm632, %v2609, 0
        %2613 = vmatprep.subr.bf16.mxu0 0
        %2614 = vmatpush1.bf16.msra.mxu0 %v2273
        %2615 = vmatprep.subr.bf16.mxu0 0
        %2616 = vmatpush1.bf16.msra.mxu0 %v2305
        %2617 = vmatprep.subr.bf16.mxu0 0
        %2618 = vmatpush1.bf16.msra.mxu0 0
        %2619 = vmatprep.subr.bf16.mxu0 0
        %2620 = vmatpush1.bf16.msra.mxu0 0
        %2621 = vmatprep.subr.bf16.mxu0 0
        %2622 = vmatpush1.bf16.msra.mxu0 0
        %2623 = vmatprep.subr.bf16.mxu0 0
        %2624 = vmatpush1.bf16.msra.mxu0 0
        %2625 = vmatprep.subr.bf16.mxu0 0
        %2626 = vmatpush1.bf16.msra.mxu0 0
        %2627 = vmatprep.subr.bf16.mxu0 0
        %2628 = vmatpush1.bf16.msra.mxu0 0
        %2629 = vmatprep.subr.bf16.mxu0 0
        %2630 = vmatpush1.bf16.msra.mxu0 0
        %2631 = vmatprep.subr.bf16.mxu0 0
        %2632 = vmatpush1.bf16.msra.mxu0 0
        %2633 = vmatprep.subr.bf16.mxu0 0
        %2634 = vmatpush1.bf16.msra.mxu0 0
        %2635 = vmatprep.subr.bf16.mxu0 0
        %2636 = vmatpush1.bf16.msra.mxu0 0
        %2637 = vmatprep.subr.bf16.mxu0 0
        %2638 = vmatpush1.bf16.msra.mxu0 0
        %2639 = vmatprep.subr.bf16.mxu0 0
        %2640 = vmatpush1.bf16.msra.mxu0 0
        %2641 = vmatprep.subr.bf16.mxu0 0
        %2642 = vmatpush1.bf16.msra.mxu0 0
        %2643 = vmatprep.subr.bf16.mxu0 0
        %2644 = vmatpush1.bf16.msra.mxu0 0
        %2645 = vmatprep.mubr.bf16.mxu0 0
        %2646 = vmatmul.mubr.bf16.gmra.mrb[0].mxu0 %v2611
        %v2647 = vpop.f32.mrb[0].mxu0
        %v2648 = vadd.f32 0.0, %v2647
        %v2649 = vpop.f32.mrb[0].mxu0
        %v2650 = vpop.f32.mrb[0].mxu0
        %v2651 = vadd.f32 0.0, %v2650
        %v2652 = vpop.f32.mrb[0].mxu0
        %2653 = vdwg.mxu0
        %v2656 = vunpack.c.l.b16 %v606
        %v2657 = vunpack.c.l.b16 %v607
        %v2658 = vpack.c.b16 %v2657, %v2656
        %v2660 = vsel %vm632, %v2658, 0
        %2662 = vmatprep.subr.bf16.mxu0 0
        %2663 = vmatpush1.bf16.msra.mxu0 %v2277
        %2664 = vmatprep.subr.bf16.mxu0 0
        %2665 = vmatpush1.bf16.msra.mxu0 %v2309
        %2666 = vmatprep.subr.bf16.mxu0 0
        %2667 = vmatpush1.bf16.msra.mxu0 0
        %2668 = vmatprep.subr.bf16.mxu0 0
        %2669 = vmatpush1.bf16.msra.mxu0 0
        %2670 = vmatprep.subr.bf16.mxu0 0
        %2671 = vmatpush1.bf16.msra.mxu0 0
        %2672 = vmatprep.subr.bf16.mxu0 0
        %2673 = vmatpush1.bf16.msra.mxu0 0
        %2674 = vmatprep.subr.bf16.mxu0 0
        %2675 = vmatpush1.bf16.msra.mxu0 0
        %2676 = vmatprep.subr.bf16.mxu0 0
        %2677 = vmatpush1.bf16.msra.mxu0 0
        %2678 = vmatprep.subr.bf16.mxu0 0
        %2679 = vmatpush1.bf16.msra.mxu0 0
        %2680 = vmatprep.subr.bf16.mxu0 0
        %2681 = vmatpush1.bf16.msra.mxu0 0
        %2682 = vmatprep.subr.bf16.mxu0 0
        %2683 = vmatpush1.bf16.msra.mxu0 0
        %2684 = vmatprep.subr.bf16.mxu0 0
        %2685 = vmatpush1.bf16.msra.mxu0 0
        %2686 = vmatprep.subr.bf16.mxu0 0
        %2687 = vmatpush1.bf16.msra.mxu0 0
        %2688 = vmatprep.subr.bf16.mxu0 0
        %2689 = vmatpush1.bf16.msra.mxu0 0
        %2690 = vmatprep.subr.bf16.mxu0 0
        %2691 = vmatpush1.bf16.msra.mxu0 0
        %2692 = vmatprep.subr.bf16.mxu0 0
        %2693 = vmatpush1.bf16.msra.mxu0 0
        %2694 = vmatprep.mubr.bf16.mxu0 0
        %2695 = vmatmul.mubr.bf16.gmra.mrb[0].mxu0 %v2660
        %v2696 = vpop.f32.mrb[0].mxu0
        %v2697 = vadd.f32 0.0, %v2696
        %v2698 = vpop.f32.mrb[0].mxu0
        %v2699 = vpop.f32.mrb[0].mxu0
        %v2700 = vadd.f32 0.0, %v2699
        %v2701 = vpop.f32.mrb[0].mxu0
        %2702 = vdwg.mxu0
        %2703 = vxpose.xlu0.b32.start [1/16] %v2354, 128
        %2704 = vxpose.xlu0.b32.cont [2/16] %v2357, 128
        %2705 = vxpose.xlu0.b32.cont [3/16] 0.0, 128
        %2706 = vxpose.xlu0.b32.cont [4/16] 0.0, 128
        %2707 = vxpose.xlu0.b32.cont [5/16] 0.0, 128
        %2708 = vxpose.xlu0.b32.cont [6/16] 0.0, 128
        %2709 = vxpose.xlu0.b32.cont [7/16] 0.0, 128
        %2710 = vxpose.xlu0.b32.cont [8/16] 0.0, 128
        %2711 = vxpose.xlu0.b32.cont [9/16] 0.0, 128
        %2712 = vxpose.xlu0.b32.cont [10/16] 0.0, 128
        %2713 = vxpose.xlu0.b32.cont [11/16] 0.0, 128
        %2714 = vxpose.xlu0.b32.cont [12/16] 0.0, 128
        %2715 = vxpose.xlu0.b32.cont [13/16] 0.0, 128
        %2716 = vxpose.xlu0.b32.cont [14/16] 0.0, 128
        %2717 = vxpose.xlu0.b32.cont [15/16] 0.0, 128
        %2718 = vxpose.xlu0.b32.end [16/16] 0.0, 128
        %v2719 = vpop.trf.xlu0
        %v2720 = vpop.trf.xlu0
        %v2721 = vpop.trf.xlu0
        %v2722 = vpop.trf.xlu0
        %v2723 = vpop.trf.xlu0
        %v2724 = vpop.trf.xlu0
        %v2725 = vpop.trf.xlu0
        %v2726 = vpop.trf.xlu0
        %v2727 = vpop.trf.xlu0
        %v2728 = vpop.trf.xlu0
        %v2729 = vpop.trf.xlu0
        %v2730 = vpop.trf.xlu0
        %v2731 = vpop.trf.xlu0
        %v2732 = vpop.trf.xlu0
        %v2733 = vpop.trf.xlu0
        %v2734 = vpop.trf.xlu0
        %2735 = vxpose.xlu0.b32.start [1/16] %v2403, 128
        %2736 = vxpose.xlu0.b32.cont [2/16] %v2406, 128
        %2737 = vxpose.xlu0.b32.cont [3/16] 0.0, 128
        %2738 = vxpose.xlu0.b32.cont [4/16] 0.0, 128
        %2739 = vxpose.xlu0.b32.cont [5/16] 0.0, 128
        %2740 = vxpose.xlu0.b32.cont [6/16] 0.0, 128
        %2741 = vxpose.xlu0.b32.cont [7/16] 0.0, 128
        %2742 = vxpose.xlu0.b32.cont [8/16] 0.0, 128
        %2743 = vxpose.xlu0.b32.cont [9/16] 0.0, 128
        %2744 = vxpose.xlu0.b32.cont [10/16] 0.0, 128
        %2745 = vxpose.xlu0.b32.cont [11/16] 0.0, 128
        %2746 = vxpose.xlu0.b32.cont [12/16] 0.0, 128
        %2747 = vxpose.xlu0.b32.cont [13/16] 0.0, 128
        %2748 = vxpose.xlu0.b32.cont [14/16] 0.0, 128
        %2749 = vxpose.xlu0.b32.cont [15/16] 0.0, 128
        %2750 = vxpose.xlu0.b32.end [16/16] 0.0, 128
        %v2751 = vpop.trf.xlu0
        %v2752 = vpop.trf.xlu0
        %v2753 = vpop.trf.xlu0
        %v2754 = vpop.trf.xlu0
        %v2755 = vpop.trf.xlu0
        %v2756 = vpop.trf.xlu0
        %v2757 = vpop.trf.xlu0
        %v2758 = vpop.trf.xlu0
        %v2759 = vpop.trf.xlu0
        %v2760 = vpop.trf.xlu0
        %v2761 = vpop.trf.xlu0
        %v2762 = vpop.trf.xlu0
        %v2763 = vpop.trf.xlu0
        %v2764 = vpop.trf.xlu0
        %v2765 = vpop.trf.xlu0
        %v2766 = vpop.trf.xlu0
        %2767 = vxpose.xlu0.b32.start [1/16] %v2452, 128
        %2768 = vxpose.xlu0.b32.cont [2/16] %v2455, 128
        %2769 = vxpose.xlu0.b32.cont [3/16] 0.0, 128
        %2770 = vxpose.xlu0.b32.cont [4/16] 0.0, 128
        %2771 = vxpose.xlu0.b32.cont [5/16] 0.0, 128
        %2772 = vxpose.xlu0.b32.cont [6/16] 0.0, 128
        %2773 = vxpose.xlu0.b32.cont [7/16] 0.0, 128
        %2774 = vxpose.xlu0.b32.cont [8/16] 0.0, 128
        %2775 = vxpose.xlu0.b32.cont [9/16] 0.0, 128
        %2776 = vxpose.xlu0.b32.cont [10/16] 0.0, 128
        %2777 = vxpose.xlu0.b32.cont [11/16] 0.0, 128
        %2778 = vxpose.xlu0.b32.cont [12/16] 0.0, 128
        %2779 = vxpose.xlu0.b32.cont [13/16] 0.0, 128
        %2780 = vxpose.xlu0.b32.cont [14/16] 0.0, 128
        %2781 = vxpose.xlu0.b32.cont [15/16] 0.0, 128
        %2782 = vxpose.xlu0.b32.end [16/16] 0.0, 128
        %v2783 = vpop.trf.xlu0
        %v2784 = vpop.trf.xlu0
        %v2785 = vpop.trf.xlu0
        %v2786 = vpop.trf.xlu0
        %v2787 = vpop.trf.xlu0
        %v2788 = vpop.trf.xlu0
        %v2789 = vpop.trf.xlu0
        %v2790 = vpop.trf.xlu0
        %v2791 = vpop.trf.xlu0
        %v2792 = vpop.trf.xlu0
        %v2793 = vpop.trf.xlu0
        %v2794 = vpop.trf.xlu0
        %v2795 = vpop.trf.xlu0
        %v2796 = vpop.trf.xlu0
        %v2797 = vpop.trf.xlu0
        %v2798 = vpop.trf.xlu0
        %2799 = vxpose.xlu0.b32.start [1/16] %v2501, 128
        %2800 = vxpose.xlu0.b32.cont [2/16] %v2504, 128
        %2801 = vxpose.xlu0.b32.cont [3/16] 0.0, 128
        %2802 = vxpose.xlu0.b32.cont [4/16] 0.0, 128
        %2803 = vxpose.xlu0.b32.cont [5/16] 0.0, 128
        %2804 = vxpose.xlu0.b32.cont [6/16] 0.0, 128
        %2805 = vxpose.xlu0.b32.cont [7/16] 0.0, 128
        %2806 = vxpose.xlu0.b32.cont [8/16] 0.0, 128
        %2807 = vxpose.xlu0.b32.cont [9/16] 0.0, 128
        %2808 = vxpose.xlu0.b32.cont [10/16] 0.0, 128
        %2809 = vxpose.xlu0.b32.cont [11/16] 0.0, 128
        %2810 = vxpose.xlu0.b32.cont [12/16] 0.0, 128
        %2811 = vxpose.xlu0.b32.cont [13/16] 0.0, 128
        %2812 = vxpose.xlu0.b32.cont [14/16] 0.0, 128
        %2813 = vxpose.xlu0.b32.cont [15/16] 0.0, 128
        %2814 = vxpose.xlu0.b32.end [16/16] 0.0, 128
        %v2815 = vpop.trf.xlu0
        %v2816 = vpop.trf.xlu0
        %v2817 = vpop.trf.xlu0
        %v2818 = vpop.trf.xlu0
        %v2819 = vpop.trf.xlu0
        %v2820 = vpop.trf.xlu0
        %v2821 = vpop.trf.xlu0
        %v2822 = vpop.trf.xlu0
        %v2823 = vpop.trf.xlu0
        %v2824 = vpop.trf.xlu0
        %v2825 = vpop.trf.xlu0
        %v2826 = vpop.trf.xlu0
        %v2827 = vpop.trf.xlu0
        %v2828 = vpop.trf.xlu0
        %v2829 = vpop.trf.xlu0
        %v2830 = vpop.trf.xlu0
        %2831 = vxpose.xlu0.b32.start [1/16] %v2550, 128
        %2832 = vxpose.xlu0.b32.cont [2/16] %v2553, 128
        %2833 = vxpose.xlu0.b32.cont [3/16] 0.0, 128
        %2834 = vxpose.xlu0.b32.cont [4/16] 0.0, 128
        %2835 = vxpose.xlu0.b32.cont [5/16] 0.0, 128
        %2836 = vxpose.xlu0.b32.cont [6/16] 0.0, 128
        %2837 = vxpose.xlu0.b32.cont [7/16] 0.0, 128
        %2838 = vxpose.xlu0.b32.cont [8/16] 0.0, 128
        %2839 = vxpose.xlu0.b32.cont [9/16] 0.0, 128
        %2840 = vxpose.xlu0.b32.cont [10/16] 0.0, 128
        %2841 = vxpose.xlu0.b32.cont [11/16] 0.0, 128
        %2842 = vxpose.xlu0.b32.cont [12/16] 0.0, 128
        %2843 = vxpose.xlu0.b32.cont [13/16] 0.0, 128
        %2844 = vxpose.xlu0.b32.cont [14/16] 0.0, 128
        %2845 = vxpose.xlu0.b32.cont [15/16] 0.0, 128
        %2846 = vxpose.xlu0.b32.end [16/16] 0.0, 128
        %v2847 = vpop.trf.xlu0
        %v2848 = vpop.trf.xlu0
        %v2849 = vpop.trf.xlu0
        %v2850 = vpop.trf.xlu0
        %v2851 = vpop.trf.xlu0
        %v2852 = vpop.trf.xlu0
        %v2853 = vpop.trf.xlu0
        %v2854 = vpop.trf.xlu0
        %v2855 = vpop.trf.xlu0
        %v2856 = vpop.trf.xlu0
        %v2857 = vpop.trf.xlu0
        %v2858 = vpop.trf.xlu0
        %v2859 = vpop.trf.xlu0
        %v2860 = vpop.trf.xlu0
        %v2861 = vpop.trf.xlu0
        %v2862 = vpop.trf.xlu0
        %2863 = vxpose.xlu0.b32.start [1/16] %v2599, 128
        %2864 = vxpose.xlu0.b32.cont [2/16] %v2602, 128
        %2865 = vxpose.xlu0.b32.cont [3/16] 0.0, 128
        %2866 = vxpose.xlu0.b32.cont [4/16] 0.0, 128
        %2867 = vxpose.xlu0.b32.cont [5/16] 0.0, 128
        %2868 = vxpose.xlu0.b32.cont [6/16] 0.0, 128
        %2869 = vxpose.xlu0.b32.cont [7/16] 0.0, 128
        %2870 = vxpose.xlu0.b32.cont [8/16] 0.0, 128
        %2871 = vxpose.xlu0.b32.cont [9/16] 0.0, 128
        %2872 = vxpose.xlu0.b32.cont [10/16] 0.0, 128
        %2873 = vxpose.xlu0.b32.cont [11/16] 0.0, 128
        %2874 = vxpose.xlu0.b32.cont [12/16] 0.0, 128
        %2875 = vxpose.xlu0.b32.cont [13/16] 0.0, 128
        %2876 = vxpose.xlu0.b32.cont [14/16] 0.0, 128
        %2877 = vxpose.xlu0.b32.cont [15/16] 0.0, 128
        %2878 = vxpose.xlu0.b32.end [16/16] 0.0, 128
        %v2879 = vpop.trf.xlu0
        %v2880 = vpop.trf.xlu0
        %v2881 = vpop.trf.xlu0
        %v2882 = vpop.trf.xlu0
        %v2883 = vpop.trf.xlu0
        %v2884 = vpop.trf.xlu0
        %v2885 = vpop.trf.xlu0
        %v2886 = vpop.trf.xlu0
        %v2887 = vpop.trf.xlu0
        %v2888 = vpop.trf.xlu0
        %v2889 = vpop.trf.xlu0
        %v2890 = vpop.trf.xlu0
        %v2891 = vpop.trf.xlu0
        %v2892 = vpop.trf.xlu0
        %v2893 = vpop.trf.xlu0
        %v2894 = vpop.trf.xlu0
        %2895 = vxpose.xlu0.b32.start [1/16] %v2648, 128
        %2896 = vxpose.xlu0.b32.cont [2/16] %v2651, 128
        %2897 = vxpose.xlu0.b32.cont [3/16] 0.0, 128
        %2898 = vxpose.xlu0.b32.cont [4/16] 0.0, 128
        %2899 = vxpose.xlu0.b32.cont [5/16] 0.0, 128
        %2900 = vxpose.xlu0.b32.cont [6/16] 0.0, 128
        %2901 = vxpose.xlu0.b32.cont [7/16] 0.0, 128
        %2902 = vxpose.xlu0.b32.cont [8/16] 0.0, 128
        %2903 = vxpose.xlu0.b32.cont [9/16] 0.0, 128
        %2904 = vxpose.xlu0.b32.cont [10/16] 0.0, 128
        %2905 = vxpose.xlu0.b32.cont [11/16] 0.0, 128
        %2906 = vxpose.xlu0.b32.cont [12/16] 0.0, 128
        %2907 = vxpose.xlu0.b32.cont [13/16] 0.0, 128
        %2908 = vxpose.xlu0.b32.cont [14/16] 0.0, 128
        %2909 = vxpose.xlu0.b32.cont [15/16] 0.0, 128
        %2910 = vxpose.xlu0.b32.end [16/16] 0.0, 128
        %v2911 = vpop.trf.xlu0
        %v2912 = vpop.trf.xlu0
        %v2913 = vpop.trf.xlu0
        %v2914 = vpop.trf.xlu0
        %v2915 = vpop.trf.xlu0
        %v2916 = vpop.trf.xlu0
        %v2917 = vpop.trf.xlu0
        %v2918 = vpop.trf.xlu0
        %v2919 = vpop.trf.xlu0
        %v2920 = vpop.trf.xlu0
        %v2921 = vpop.trf.xlu0
        %v2922 = vpop.trf.xlu0
        %v2923 = vpop.trf.xlu0
        %v2924 = vpop.trf.xlu0
        %v2925 = vpop.trf.xlu0
        %v2926 = vpop.trf.xlu0
        %2927 = vxpose.xlu0.b32.start [1/16] %v2697, 128
        %2928 = vxpose.xlu0.b32.cont [2/16] %v2700, 128
        %2929 = vxpose.xlu0.b32.cont [3/16] 0.0, 128
        %2930 = vxpose.xlu0.b32.cont [4/16] 0.0, 128
        %2931 = vxpose.xlu0.b32.cont [5/16] 0.0, 128
        %2932 = vxpose.xlu0.b32.cont [6/16] 0.0, 128
        %2933 = vxpose.xlu0.b32.cont [7/16] 0.0, 128
        %2934 = vxpose.xlu0.b32.cont [8/16] 0.0, 128
        %2935 = vxpose.xlu0.b32.cont [9/16] 0.0, 128
        %2936 = vxpose.xlu0.b32.cont [10/16] 0.0, 128
        %2937 = vxpose.xlu0.b32.cont [11/16] 0.0, 128
        %2938 = vxpose.xlu0.b32.cont [12/16] 0.0, 128
        %2939 = vxpose.xlu0.b32.cont [13/16] 0.0, 128
        %2940 = vxpose.xlu0.b32.cont [14/16] 0.0, 128
        %2941 = vxpose.xlu0.b32.cont [15/16] 0.0, 128
        %2942 = vxpose.xlu0.b32.end [16/16] 0.0, 128
        %v2943 = vpop.trf.xlu0
        %v2944 = vpop.trf.xlu0
        %v2945 = vpop.trf.xlu0
        %v2946 = vpop.trf.xlu0
        %v2947 = vpop.trf.xlu0
        %v2948 = vpop.trf.xlu0
        %v2949 = vpop.trf.xlu0
        %v2950 = vpop.trf.xlu0
        %v2951 = vpop.trf.xlu0
        %v2952 = vpop.trf.xlu0
        %v2953 = vpop.trf.xlu0
        %v2954 = vpop.trf.xlu0
        %v2955 = vpop.trf.xlu0
        %v2956 = vpop.trf.xlu0
        %v2957 = vpop.trf.xlu0
        %v2958 = vpop.trf.xlu0
        %v2959 = vcombine.low %v2719, %v2783
        %v2961 = vunpack.c.l.s4 1983009808
        %v2962 = vunpack.c.0.s8 %v2961
        %v2963 = vlaneseq
        %v2964 = vshrl.u32 %v2963, 7
        %v2965 = vsub.s32 %v2962, %v2964
        %v2966 = vrot.slane %v2959, %v2965
        %v2967 = vcombine.low %v2751, %v2815
        %v2969 = vunpack.c.l.s4 1983009808
        %v2970 = vunpack.c.0.s8 %v2969
        %v2971 = vlaneseq
        %v2972 = vshrl.u32 %v2971, 7
        %v2973 = vsub.s32 %v2970, %v2972
        %v2974 = vrot.slane %v2967, %v2973
        %v2975 = vcombine.low %v2847, %v2911
        %v2977 = vunpack.c.l.s4 1983009808
        %v2978 = vunpack.c.0.s8 %v2977
        %v2979 = vlaneseq
        %v2980 = vshrl.u32 %v2979, 7
        %v2981 = vsub.s32 %v2978, %v2980
        %v2982 = vrot.slane %v2975, %v2981
        %v2983 = vcombine.low %v2879, %v2943
        %v2985 = vunpack.c.l.s4 1983009808
        %v2986 = vunpack.c.0.s8 %v2985
        %v2987 = vlaneseq
        %v2988 = vshrl.u32 %v2987, 7
        %v2989 = vsub.s32 %v2986, %v2988
        %v2990 = vrot.slane %v2983, %v2989
        %v2991 = vcombine.low %v2966, %v2974
        %v2992 = vcombine.high %v2966, %v2974
        %v2994 = vunpack.c.l.s4 1934713408
        %v2995 = vunpack.c.0.s8 %v2994
        %v2996 = vlaneseq
        %v2997 = vshrl.u32 %v2996, 7
        %v2998 = vsub.s32 %v2995, %v2997
        %v2999 = vrot.slane %v2991, %v2998
        %v3001 = vunpack.c.l.s4 1934713408
        %v3002 = vunpack.c.0.s8 %v3001
        %v3003 = vlaneseq
        %v3004 = vshrl.u32 %v3003, 7
        %v3005 = vsub.s32 %v3002, %v3004
        %v3006 = vrot.slane %v2992, %v3005
        %v3007 = vcombine.low %v2982, %v2990
        %v3008 = vcombine.high %v2982, %v2990
        %v3010 = vunpack.c.l.s4 1934713408
        %v3011 = vunpack.c.0.s8 %v3010
        %v3012 = vlaneseq
        %v3013 = vshrl.u32 %v3012, 7
        %v3014 = vsub.s32 %v3011, %v3013
        %v3015 = vrot.slane %v3007, %v3014
        %v3017 = vunpack.c.l.s4 1934713408
        %v3018 = vunpack.c.0.s8 %v3017
        %v3019 = vlaneseq
        %v3020 = vshrl.u32 %v3019, 7
        %v3021 = vsub.s32 %v3018, %v3020
        %v3022 = vrot.slane %v3008, %v3021
        %v3023 = vcombine.low %v2999, %v3015
        %v3024 = vcombine.high %v2999, %v3015
        %v3025 = vcombine.low %v3006, %v3022
        %v3026 = vcombine.high %v3006, %v3022
        %v3028 = vsel %vm866, %v817, 0
        %3030 = vmatprep.subr.bf16.mxu0 0
        %3031 = vmatpush1.bf16.xpose.msra.mxu0 %v3028
        %3032 = vmatprep.subr.bf16.mxu0 0
        %3033 = vmatpush1.bf16.xpose.msra.mxu0 0
        %3034 = vmatprep.subr.bf16.mxu0 0
        %3035 = vmatpush1.bf16.xpose.msra.mxu0 0
        %3036 = vmatprep.subr.bf16.mxu0 0
        %3037 = vmatpush1.bf16.xpose.msra.mxu0 0
        %3038 = vmatprep.subr.bf16.mxu0 0
        %3039 = vmatpush1.bf16.xpose.msra.mxu0 0
        %3040 = vmatprep.subr.bf16.mxu0 0
        %3041 = vmatpush1.bf16.xpose.msra.mxu0 0
        %3042 = vmatprep.subr.bf16.mxu0 0
        %3043 = vmatpush1.bf16.xpose.msra.mxu0 0
        %3044 = vmatprep.subr.bf16.mxu0 0
        %3045 = vmatpush1.bf16.xpose.msra.mxu0 0
        %3046 = vmatprep.subr.bf16.mxu0 0
        %3047 = vmatpush1.bf16.xpose.msra.mxu0 0
        %3048 = vmatprep.subr.bf16.mxu0 0
        %3049 = vmatpush1.bf16.xpose.msra.mxu0 0
        %3050 = vmatprep.subr.bf16.mxu0 0
        %3051 = vmatpush1.bf16.xpose.msra.mxu0 0
        %3052 = vmatprep.subr.bf16.mxu0 0
        %3053 = vmatpush1.bf16.xpose.msra.mxu0 0
        %3054 = vmatprep.subr.bf16.mxu0 0
        %3055 = vmatpush1.bf16.xpose.msra.mxu0 0
        %3056 = vmatprep.subr.bf16.mxu0 0
        %3057 = vmatpush1.bf16.xpose.msra.mxu0 0
        %3058 = vmatprep.subr.bf16.mxu0 0
        %3059 = vmatpush1.bf16.xpose.msra.mxu0 0
        %3060 = vmatprep.subr.bf16.mxu0 0
        %3061 = vmatpush1.bf16.xpose.msra.mxu0 0
        %3062 = vmatprep.mubr.bf16.mxu0 0
        %3063 = vmatmul.mubr.bf16.gmra.mrb[0].mxu0 %v868
        %v3064 = vpop.f32.mrb[0].mxu0
        %v3065 = vadd.f32 %v3023, %v3064
        %v3066 = vpop.f32.mrb[0].mxu0
        %v3067 = vpop.f32.mrb[0].mxu0
        %v3068 = vpop.f32.mrb[0].mxu0
        %3069 = vdwg.mxu0
        %v3071 = vsel %vm866, %v828, 0
        %3073 = vmatprep.subr.bf16.mxu0 0
        %3074 = vmatpush1.bf16.xpose.msra.mxu0 %v3071
        %3075 = vmatprep.subr.bf16.mxu0 0
        %3076 = vmatpush1.bf16.xpose.msra.mxu0 0
        %3077 = vmatprep.subr.bf16.mxu0 0
        %3078 = vmatpush1.bf16.xpose.msra.mxu0 0
        %3079 = vmatprep.subr.bf16.mxu0 0
        %3080 = vmatpush1.bf16.xpose.msra.mxu0 0
        %3081 = vmatprep.subr.bf16.mxu0 0
        %3082 = vmatpush1.bf16.xpose.msra.mxu0 0
        %3083 = vmatprep.subr.bf16.mxu0 0
        %3084 = vmatpush1.bf16.xpose.msra.mxu0 0
        %3085 = vmatprep.subr.bf16.mxu0 0
        %3086 = vmatpush1.bf16.xpose.msra.mxu0 0
        %3087 = vmatprep.subr.bf16.mxu0 0
        %3088 = vmatpush1.bf16.xpose.msra.mxu0 0
        %3089 = vmatprep.subr.bf16.mxu0 0
        %3090 = vmatpush1.bf16.xpose.msra.mxu0 0
        %3091 = vmatprep.subr.bf16.mxu0 0
        %3092 = vmatpush1.bf16.xpose.msra.mxu0 0
        %3093 = vmatprep.subr.bf16.mxu0 0
        %3094 = vmatpush1.bf16.xpose.msra.mxu0 0
        %3095 = vmatprep.subr.bf16.mxu0 0
        %3096 = vmatpush1.bf16.xpose.msra.mxu0 0
        %3097 = vmatprep.subr.bf16.mxu0 0
        %3098 = vmatpush1.bf16.xpose.msra.mxu0 0
        %3099 = vmatprep.subr.bf16.mxu0 0
        %3100 = vmatpush1.bf16.xpose.msra.mxu0 0
        %3101 = vmatprep.subr.bf16.mxu0 0
        %3102 = vmatpush1.bf16.xpose.msra.mxu0 0
        %3103 = vmatprep.subr.bf16.mxu0 0
        %3104 = vmatpush1.bf16.xpose.msra.mxu0 0
        %3105 = vmatprep.mubr.bf16.mxu0 0
        %3106 = vmatmul.mubr.bf16.gmra.mrb[0].mxu0 %v927
        %v3107 = vpop.f32.mrb[0].mxu0
        %v3108 = vadd.f32 %v3024, %v3107
        %v3109 = vpop.f32.mrb[0].mxu0
        %v3110 = vpop.f32.mrb[0].mxu0
        %v3111 = vpop.f32.mrb[0].mxu0
        %3112 = vdwg.mxu0
        %v3114 = vsel %vm866, %v830, 0
        %3116 = vmatprep.subr.bf16.mxu0 0
        %3117 = vmatpush1.bf16.xpose.msra.mxu0 %v3114
        %3118 = vmatprep.subr.bf16.mxu0 0
        %3119 = vmatpush1.bf16.xpose.msra.mxu0 0
        %3120 = vmatprep.subr.bf16.mxu0 0
        %3121 = vmatpush1.bf16.xpose.msra.mxu0 0
        %3122 = vmatprep.subr.bf16.mxu0 0
        %3123 = vmatpush1.bf16.xpose.msra.mxu0 0
        %3124 = vmatprep.subr.bf16.mxu0 0
        %3125 = vmatpush1.bf16.xpose.msra.mxu0 0
        %3126 = vmatprep.subr.bf16.mxu0 0
        %3127 = vmatpush1.bf16.xpose.msra.mxu0 0
        %3128 = vmatprep.subr.bf16.mxu0 0
        %3129 = vmatpush1.bf16.xpose.msra.mxu0 0
        %3130 = vmatprep.subr.bf16.mxu0 0
        %3131 = vmatpush1.bf16.xpose.msra.mxu0 0
        %3132 = vmatprep.subr.bf16.mxu0 0
        %3133 = vmatpush1.bf16.xpose.msra.mxu0 0
        %3134 = vmatprep.subr.bf16.mxu0 0
        %3135 = vmatpush1.bf16.xpose.msra.mxu0 0
        %3136 = vmatprep.subr.bf16.mxu0 0
        %3137 = vmatpush1.bf16.xpose.msra.mxu0 0
        %3138 = vmatprep.subr.bf16.mxu0 0
        %3139 = vmatpush1.bf16.xpose.msra.mxu0 0
        %3140 = vmatprep.subr.bf16.mxu0 0
        %3141 = vmatpush1.bf16.xpose.msra.mxu0 0
        %3142 = vmatprep.subr.bf16.mxu0 0
        %3143 = vmatpush1.bf16.xpose.msra.mxu0 0
        %3144 = vmatprep.subr.bf16.mxu0 0
        %3145 = vmatpush1.bf16.xpose.msra.mxu0 0
        %3146 = vmatprep.subr.bf16.mxu0 0
        %3147 = vmatpush1.bf16.xpose.msra.mxu0 0
        %3148 = vmatprep.mubr.bf16.mxu0 0
        %3149 = vmatmul.mubr.bf16.gmra.mrb[0].mxu0 %v986
        %v3150 = vpop.f32.mrb[0].mxu0
        %v3151 = vadd.f32 %v3025, %v3150
        %v3152 = vpop.f32.mrb[0].mxu0
        %v3153 = vpop.f32.mrb[0].mxu0
        %v3154 = vpop.f32.mrb[0].mxu0
        %3155 = vdwg.mxu0
        %v3157 = vsel %vm866, %v832, 0
        %3159 = vmatprep.subr.bf16.mxu0 0
        %3160 = vmatpush1.bf16.xpose.msra.mxu0 %v3157
        %3161 = vmatprep.subr.bf16.mxu0 0
        %3162 = vmatpush1.bf16.xpose.msra.mxu0 0
        %3163 = vmatprep.subr.bf16.mxu0 0
        %3164 = vmatpush1.bf16.xpose.msra.mxu0 0
        %3165 = vmatprep.subr.bf16.mxu0 0
        %3166 = vmatpush1.bf16.xpose.msra.mxu0 0
        %3167 = vmatprep.subr.bf16.mxu0 0
        %3168 = vmatpush1.bf16.xpose.msra.mxu0 0
        %3169 = vmatprep.subr.bf16.mxu0 0
        %3170 = vmatpush1.bf16.xpose.msra.mxu0 0
        %3171 = vmatprep.subr.bf16.mxu0 0
        %3172 = vmatpush1.bf16.xpose.msra.mxu0 0
        %3173 = vmatprep.subr.bf16.mxu0 0
        %3174 = vmatpush1.bf16.xpose.msra.mxu0 0
        %3175 = vmatprep.subr.bf16.mxu0 0
        %3176 = vmatpush1.bf16.xpose.msra.mxu0 0
        %3177 = vmatprep.subr.bf16.mxu0 0
        %3178 = vmatpush1.bf16.xpose.msra.mxu0 0
        %3179 = vmatprep.subr.bf16.mxu0 0
        %3180 = vmatpush1.bf16.xpose.msra.mxu0 0
        %3181 = vmatprep.subr.bf16.mxu0 0
        %3182 = vmatpush1.bf16.xpose.msra.mxu0 0
        %3183 = vmatprep.subr.bf16.mxu0 0
        %3184 = vmatpush1.bf16.xpose.msra.mxu0 0
        %3185 = vmatprep.subr.bf16.mxu0 0
        %3186 = vmatpush1.bf16.xpose.msra.mxu0 0
        %3187 = vmatprep.subr.bf16.mxu0 0
        %3188 = vmatpush1.bf16.xpose.msra.mxu0 0
        %3189 = vmatprep.subr.bf16.mxu0 0
        %3190 = vmatpush1.bf16.xpose.msra.mxu0 0
        %3191 = vmatprep.mubr.bf16.mxu0 0
        %3192 = vmatmul.mubr.bf16.gmra.mrb[0].mxu0 %v1045
        %v3193 = vpop.f32.mrb[0].mxu0
        %v3194 = vadd.f32 %v3026, %v3193
        %v3195 = vpop.f32.mrb[0].mxu0
        %v3196 = vpop.f32.mrb[0].mxu0
        %v3197 = vpop.f32.mrb[0].mxu0
        %3198 = vdwg.mxu0
        %v3199 = vmul.f32 %v3065, 0.35355338
        %v3200 = vmul.f32 %v3108, 0.35355338
        %v3201 = vmul.f32 %v3151, 0.35355338
        %v3202 = vmul.f32 %v3194, 0.35355338
        %v3204 = vlaneseq
        %v3205 = vshrl.u32 %v3204, 7
        %v3206 = vsub.s32 0, %v3205
        %v3207 = vrot.slane %v608, %v3206
        %v3209 = vadd.f32 %v3199, %v3207
        %v3210 = vadd.f32 %v3200, %v3207
        %v3211 = vadd.f32 %v3201, %v3207
        %v3212 = vadd.f32 %v3202, %v3207
        %vm3213 = vcmask 97280
        %v3214 = vsel %vm3213, %v3209, -inf
        %3215 = vmax.xlane.f32.xlu0 %v3214
        %v3216 = vpop.xlane.xlu0 %3215
        %v3217 = vsel %vm3213, %v3210, -inf
        %3218 = vmax.xlane.f32.xlu0 %v3217
        %v3219 = vpop.xlane.xlu0 %3218
        %v3220 = vsel %vm3213, %v3211, -inf
        %3221 = vmax.xlane.f32.xlu0 %v3220
        %v3222 = vpop.xlane.xlu0 %3221
        %v3223 = vsel %vm3213, %v3212, -inf
        %3224 = vmax.xlane.f32.xlu0 %v3223
        %v3225 = vpop.xlane.xlu0 %3224
        %v3226 = vsub.f32 %v3209, %v3216
        %v3227 = vsub.f32 %v3210, %v3219
        %v3228 = vsub.f32 %v3211, %v3222
        %v3229 = vsub.f32 %v3212, %v3225
        %v3230 = vmul.f32 %v3226, 1.442695
        %v3231 = vpow.pop %v3230
        %v3232 = vmul.f32 %v3227, 1.442695
        %v3233 = vpow.pop %v3232
        %v3234 = vmul.f32 %v3228, 1.442695
        %v3235 = vpow.pop %v3234
        %v3236 = vmul.f32 %v3229, 1.442695
        %v3237 = vpow.pop %v3236
        %v3238 = vsel %vm3213, %v3231, 0.0
        %3239 = vadd.xlane.f32.xlu0 %v3238
        %v3240 = vpop.xlane.xlu0 %3239
        %v3241 = vsel %vm3213, %v3233, 0.0
        %3242 = vadd.xlane.f32.xlu0 %v3241
        %v3243 = vpop.xlane.xlu0 %3242
        %v3244 = vsel %vm3213, %v3235, 0.0
        %3245 = vadd.xlane.f32.xlu0 %v3244
        %v3246 = vpop.xlane.xlu0 %3245
        %v3247 = vsel %vm3213, %v3237, 0.0
        %3248 = vadd.xlane.f32.xlu0 %v3247
        %v3249 = vpop.xlane.xlu0 %3248
        %v3250 = vrcp.pop %v3240
        %v3251 = vrcp.pop %v3243
        %v3252 = vrcp.pop %v3246
        %v3253 = vrcp.pop %v3249
        %v3254 = vmul.f32 %v3231, %v3250
        %v3255 = vmul.f32 %v3233, %v3251
        %v3256 = vmul.f32 %v3235, %v3252
        %v3257 = vmul.f32 %v3237, %v3253
        %v3258 = vpack.c.bf16 %v3254, %v3254
        %v3259 = vpack.c.bf16 %v3255, %v3255
        %v3260 = vpack.c.bf16 %v3256, %v3256
        %v3261 = vpack.c.bf16 %v3257, %v3257
        %v3263 = vsel %vm3213, %v3258, 0
        %vm3265 = vcmask 1045504
        %v3267 = vsel %vm3265, %v818, 0
        %3269 = vmatprep.subr.bf16.mxu0 0
        %3270 = vmatpush1.bf16.msra.mxu0 %v3267
        %3271 = vmatprep.subr.bf16.mxu0 0
        %3272 = vmatpush1.bf16.msra.mxu0 0
        %3273 = vmatprep.subr.bf16.mxu0 0
        %3274 = vmatpush1.bf16.msra.mxu0 0
        %3275 = vmatprep.subr.bf16.mxu0 0
        %3276 = vmatpush1.bf16.msra.mxu0 0
        %3277 = vmatprep.subr.bf16.mxu0 0
        %3278 = vmatpush1.bf16.msra.mxu0 0
        %3279 = vmatprep.subr.bf16.mxu0 0
        %3280 = vmatpush1.bf16.msra.mxu0 0
        %3281 = vmatprep.subr.bf16.mxu0 0
        %3282 = vmatpush1.bf16.msra.mxu0 0
        %3283 = vmatprep.subr.bf16.mxu0 0
        %3284 = vmatpush1.bf16.msra.mxu0 0
        %3285 = vmatprep.subr.bf16.mxu0 0
        %3286 = vmatpush1.bf16.msra.mxu0 0
        %3287 = vmatprep.subr.bf16.mxu0 0
        %3288 = vmatpush1.bf16.msra.mxu0 0
        %3289 = vmatprep.subr.bf16.mxu0 0
        %3290 = vmatpush1.bf16.msra.mxu0 0
        %3291 = vmatprep.subr.bf16.mxu0 0
        %3292 = vmatpush1.bf16.msra.mxu0 0
        %3293 = vmatprep.subr.bf16.mxu0 0
        %3294 = vmatpush1.bf16.msra.mxu0 0
        %3295 = vmatprep.subr.bf16.mxu0 0
        %3296 = vmatpush1.bf16.msra.mxu0 0
        %3297 = vmatprep.subr.bf16.mxu0 0
        %3298 = vmatpush1.bf16.msra.mxu0 0
        %3299 = vmatprep.subr.bf16.mxu0 0
        %3300 = vmatpush1.bf16.msra.mxu0 0
        %3301 = vmatprep.mubr.bf16.mxu0 0
        %3302 = vmatmul.mubr.bf16.gmra.mrb[0].mxu0 %v3263
        %v3303 = vpop.f32.mrb[0].mxu0
        %v3304 = vadd.f32 0.0, %v3303
        %v3305 = vpop.f32.mrb[0].mxu0
        %v3306 = vpop.f32.mrb[0].mxu0
        %v3307 = vpop.f32.mrb[0].mxu0
        %3308 = vdwg.mxu0
        %v3310 = vsel %vm3213, %v3259, 0
        %v3313 = vsel %vm3265, %v835, 0
        %3315 = vmatprep.subr.bf16.mxu0 0
        %3316 = vmatpush1.bf16.msra.mxu0 %v3313
        %3317 = vmatprep.subr.bf16.mxu0 0
        %3318 = vmatpush1.bf16.msra.mxu0 0
        %3319 = vmatprep.subr.bf16.mxu0 0
        %3320 = vmatpush1.bf16.msra.mxu0 0
        %3321 = vmatprep.subr.bf16.mxu0 0
        %3322 = vmatpush1.bf16.msra.mxu0 0
        %3323 = vmatprep.subr.bf16.mxu0 0
        %3324 = vmatpush1.bf16.msra.mxu0 0
        %3325 = vmatprep.subr.bf16.mxu0 0
        %3326 = vmatpush1.bf16.msra.mxu0 0
        %3327 = vmatprep.subr.bf16.mxu0 0
        %3328 = vmatpush1.bf16.msra.mxu0 0
        %3329 = vmatprep.subr.bf16.mxu0 0
        %3330 = vmatpush1.bf16.msra.mxu0 0
        %3331 = vmatprep.subr.bf16.mxu0 0
        %3332 = vmatpush1.bf16.msra.mxu0 0
        %3333 = vmatprep.subr.bf16.mxu0 0
        %3334 = vmatpush1.bf16.msra.mxu0 0
        %3335 = vmatprep.subr.bf16.mxu0 0
        %3336 = vmatpush1.bf16.msra.mxu0 0
        %3337 = vmatprep.subr.bf16.mxu0 0
        %3338 = vmatpush1.bf16.msra.mxu0 0
        %3339 = vmatprep.subr.bf16.mxu0 0
        %3340 = vmatpush1.bf16.msra.mxu0 0
        %3341 = vmatprep.subr.bf16.mxu0 0
        %3342 = vmatpush1.bf16.msra.mxu0 0
        %3343 = vmatprep.subr.bf16.mxu0 0
        %3344 = vmatpush1.bf16.msra.mxu0 0
        %3345 = vmatprep.subr.bf16.mxu0 0
        %3346 = vmatpush1.bf16.msra.mxu0 0
        %3347 = vmatprep.mubr.bf16.mxu0 0
        %3348 = vmatmul.mubr.bf16.gmra.mrb[0].mxu0 %v3310
        %v3349 = vpop.f32.mrb[0].mxu0
        %v3350 = vadd.f32 0.0, %v3349
        %v3351 = vpop.f32.mrb[0].mxu0
        %v3352 = vpop.f32.mrb[0].mxu0
        %v3353 = vpop.f32.mrb[0].mxu0
        %3354 = vdwg.mxu0
        %v3356 = vsel %vm3213, %v3260, 0
        %v3359 = vsel %vm3265, %v837, 0
        %3361 = vmatprep.subr.bf16.mxu0 0
        %3362 = vmatpush1.bf16.msra.mxu0 %v3359
        %3363 = vmatprep.subr.bf16.mxu0 0
        %3364 = vmatpush1.bf16.msra.mxu0 0
        %3365 = vmatprep.subr.bf16.mxu0 0
        %3366 = vmatpush1.bf16.msra.mxu0 0
        %3367 = vmatprep.subr.bf16.mxu0 0
        %3368 = vmatpush1.bf16.msra.mxu0 0
        %3369 = vmatprep.subr.bf16.mxu0 0
        %3370 = vmatpush1.bf16.msra.mxu0 0
        %3371 = vmatprep.subr.bf16.mxu0 0
        %3372 = vmatpush1.bf16.msra.mxu0 0
        %3373 = vmatprep.subr.bf16.mxu0 0
        %3374 = vmatpush1.bf16.msra.mxu0 0
        %3375 = vmatprep.subr.bf16.mxu0 0
        %3376 = vmatpush1.bf16.msra.mxu0 0
        %3377 = vmatprep.subr.bf16.mxu0 0
        %3378 = vmatpush1.bf16.msra.mxu0 0
        %3379 = vmatprep.subr.bf16.mxu0 0
        %3380 = vmatpush1.bf16.msra.mxu0 0
        %3381 = vmatprep.subr.bf16.mxu0 0
        %3382 = vmatpush1.bf16.msra.mxu0 0
        %3383 = vmatprep.subr.bf16.mxu0 0
        %3384 = vmatpush1.bf16.msra.mxu0 0
        %3385 = vmatprep.subr.bf16.mxu0 0
        %3386 = vmatpush1.bf16.msra.mxu0 0
        %3387 = vmatprep.subr.bf16.mxu0 0
        %3388 = vmatpush1.bf16.msra.mxu0 0
        %3389 = vmatprep.subr.bf16.mxu0 0
        %3390 = vmatpush1.bf16.msra.mxu0 0
        %3391 = vmatprep.subr.bf16.mxu0 0
        %3392 = vmatpush1.bf16.msra.mxu0 0
        %3393 = vmatprep.mubr.bf16.mxu0 0
        %3394 = vmatmul.mubr.bf16.gmra.mrb[0].mxu0 %v3356
        %v3395 = vpop.f32.mrb[0].mxu0
        %v3396 = vadd.f32 0.0, %v3395
        %v3397 = vpop.f32.mrb[0].mxu0
        %v3398 = vpop.f32.mrb[0].mxu0
        %v3399 = vpop.f32.mrb[0].mxu0
        %3400 = vdwg.mxu0
        %v3402 = vsel %vm3213, %v3261, 0
        %v3405 = vsel %vm3265, %v839, 0
        %3407 = vmatprep.subr.bf16.mxu0 0
        %3408 = vmatpush1.bf16.msra.mxu0 %v3405
        %3409 = vmatprep.subr.bf16.mxu0 0
        %3410 = vmatpush1.bf16.msra.mxu0 0
        %3411 = vmatprep.subr.bf16.mxu0 0
        %3412 = vmatpush1.bf16.msra.mxu0 0
        %3413 = vmatprep.subr.bf16.mxu0 0
        %3414 = vmatpush1.bf16.msra.mxu0 0
        %3415 = vmatprep.subr.bf16.mxu0 0
        %3416 = vmatpush1.bf16.msra.mxu0 0
        %3417 = vmatprep.subr.bf16.mxu0 0
        %3418 = vmatpush1.bf16.msra.mxu0 0
        %3419 = vmatprep.subr.bf16.mxu0 0
        %3420 = vmatpush1.bf16.msra.mxu0 0
        %3421 = vmatprep.subr.bf16.mxu0 0
        %3422 = vmatpush1.bf16.msra.mxu0 0
        %3423 = vmatprep.subr.bf16.mxu0 0
        %3424 = vmatpush1.bf16.msra.mxu0 0
        %3425 = vmatprep.subr.bf16.mxu0 0
        %3426 = vmatpush1.bf16.msra.mxu0 0
        %3427 = vmatprep.subr.bf16.mxu0 0
        %3428 = vmatpush1.bf16.msra.mxu0 0
        %3429 = vmatprep.subr.bf16.mxu0 0
        %3430 = vmatpush1.bf16.msra.mxu0 0
        %3431 = vmatprep.subr.bf16.mxu0 0
        %3432 = vmatpush1.bf16.msra.mxu0 0
        %3433 = vmatprep.subr.bf16.mxu0 0
        %3434 = vmatpush1.bf16.msra.mxu0 0
        %3435 = vmatprep.subr.bf16.mxu0 0
        %3436 = vmatpush1.bf16.msra.mxu0 0
        %3437 = vmatprep.subr.bf16.mxu0 0
        %3438 = vmatpush1.bf16.msra.mxu0 0
        %3439 = vmatprep.mubr.bf16.mxu0 0
        %3440 = vmatmul.mubr.bf16.gmra.mrb[0].mxu0 %v3402
        %v3441 = vpop.f32.mrb[0].mxu0
        %v3442 = vadd.f32 0.0, %v3441
        %v3443 = vpop.f32.mrb[0].mxu0
        %v3444 = vpop.f32.mrb[0].mxu0
        %v3445 = vpop.f32.mrb[0].mxu0
        %3446 = vdwg.mxu0
        %v3447 = vpack.c.bf16 %v3304, %v3304
        %v3448 = vpack.c.bf16 %v3350, %v3350
        %v3449 = vpack.c.bf16 %v3396, %v3396
        %v3450 = vpack.c.bf16 %v3442, %v3442
        %3452 = vrot.lane.b32.xlu0 %v3448, 8
        %v3453 = vpop.permute.xlu0 %3452
        %3455 = vrot.lane.b32.xlu0 %v3449, 16
        %v3456 = vpop.permute.xlu0 %3455
        %3458 = vrot.lane.b32.xlu0 %v3450, 24
        %v3459 = vpop.permute.xlu0 %3458
        %v3462 = vsel %vm866, %v3447, %v3453
        %vm3463 = vcmask 130048
        %v3465 = vsel %vm3463, %v3462, %v3456
        %vm3466 = vcmask 195584
        %v3468 = vsel %vm3466, %v3465, %v3459
        %v3469 = vld [vmem:[%s7] sm:$0xf]
        %v3470 = vld [vmem:[%s7 + $0x4] sm:$0xf]
        %v3471 = vld [vmem:[%s7 + $0x8] sm:$0xf]
        %v3472 = vld [vmem:[%s7 + $0xc] sm:$0xf]
        %v3473 = vld [vmem:[%s8] sm:$0x1]
        %v3475 = vlaneseq
        %v3476 = vshrl.u32 %v3475, 7
        %v3477 = vsub.s32 0, %v3476
        %v3478 = vrot.slane %v3473, %v3477
        %v3484 = vunpack.c.l.b16 %v3469
        %v3485 = vunpack.c.l.b16 %v3470
        %v3486 = vunpack.c.l.b16 %v3471
        %v3487 = vunpack.c.l.b16 %v3472
        %v3488 = vpack.c.b16 %v3485, %v3484
        %v3489 = vpack.c.b16 %v3487, %v3486
        %v3492 = vsel %vm632, %v3468, 0
        %3494 = vmatprep.subr.bf16.mxu0 0
        %3495 = vmatpush1.bf16.msra.mxu0 %v3488
        %3496 = vmatprep.subr.bf16.mxu0 0
        %3497 = vmatpush1.bf16.msra.mxu0 %v3489
        %3498 = vmatprep.subr.bf16.mxu0 0
        %3499 = vmatpush1.bf16.msra.mxu0 0
        %3500 = vmatprep.subr.bf16.mxu0 0
        %3501 = vmatpush1.bf16.msra.mxu0 0
        %3502 = vmatprep.subr.bf16.mxu0 0
        %3503 = vmatpush1.bf16.msra.mxu0 0
        %3504 = vmatprep.subr.bf16.mxu0 0
        %3505 = vmatpush1.bf16.msra.mxu0 0
        %3506 = vmatprep.subr.bf16.mxu0 0
        %3507 = vmatpush1.bf16.msra.mxu0 0
        %3508 = vmatprep.subr.bf16.mxu0 0
        %3509 = vmatpush1.bf16.msra.mxu0 0
        %3510 = vmatprep.subr.bf16.mxu0 0
        %3511 = vmatpush1.bf16.msra.mxu0 0
        %3512 = vmatprep.subr.bf16.mxu0 0
        %3513 = vmatpush1.bf16.msra.mxu0 0
        %3514 = vmatprep.subr.bf16.mxu0 0
        %3515 = vmatpush1.bf16.msra.mxu0 0
        %3516 = vmatprep.subr.bf16.mxu0 0
        %3517 = vmatpush1.bf16.msra.mxu0 0
        %3518 = vmatprep.subr.bf16.mxu0 0
        %3519 = vmatpush1.bf16.msra.mxu0 0
        %3520 = vmatprep.subr.bf16.mxu0 0
        %3521 = vmatpush1.bf16.msra.mxu0 0
        %3522 = vmatprep.subr.bf16.mxu0 0
        %3523 = vmatpush1.bf16.msra.mxu0 0
        %3524 = vmatprep.subr.bf16.mxu0 0
        %3525 = vmatpush1.bf16.msra.mxu0 0
        %3526 = vmatprep.mubr.bf16.mxu0 0
        %3527 = vmatmul.mubr.bf16.gmra.mrb[0].mxu0 %v3492
        %v3528 = vpop.f32.mrb[0].mxu0
        %v3529 = vadd.f32 %v3478, %v3528
        %v3530 = vpop.f32.mrb[0].mxu0
        %v3531 = vpop.f32.mrb[0].mxu0
        %v3532 = vpop.f32.mrb[0].mxu0
        %3533 = vdwg.mxu0
        %v3534 = vunpack.c.l.bf16 %v589
        %v3535 = vadd.f32 %v3529, %v3534
        %v3536 = vld [vmem:[%s9] sm:$0x1]
        %s3537 = scalar_lea.vmem %s9, 1
        %v3538 = vld [vmem:[%s3537] sm:$0x1]
        %v3539 = vsel %vm632, %v3535, 0.0
        %3540 = vadd.xlane.f32.xlu0 %v3539
        %v3541 = vpop.xlane.xlu0 %3540
        %v3542 = vrcp.pop 32.0
        %v3543 = vmul.f32 %v3541, %v3542
        %v3544 = vsub.f32 %v3535, %v3543
        %v3545 = vmul.f32 %v3544, %v3544
        %v3546 = vsel %vm632, %v3545, 0.0
        %3547 = vadd.xlane.f32.xlu0 %v3546
        %v3548 = vpop.xlane.xlu0 %3547
        %v3549 = vmul.f32 %v3548, %v3542
        %v3550 = vadd.f32 %v3549, 1e-05
        %v3551 = vrsqrt.pop %v3550
        %v3552 = vmul.f32 %v3544, %v3551
        %v3554 = vlaneseq
        %v3555 = vshrl.u32 %v3554, 7
        %v3556 = vsub.s32 0, %v3555
        %v3557 = vrot.slane %v3536, %v3556
        %v3559 = vmul.f32 %v3552, %v3557
        %v3561 = vlaneseq
        %v3562 = vshrl.u32 %v3561, 7
        %v3563 = vsub.s32 0, %v3562
        %v3564 = vrot.slane %v3538, %v3563
        %v3566 = vadd.f32 %v3559, %v3564
        %v3567 = vpack.c.bf16 %v3566, %v3566
        %v3568 = vld [vmem:[%s10] sm:$0xf]
        %v3569 = vld [vmem:[%s10 + $0x4] sm:$0xf]
        %v3570 = vld [vmem:[%s10 + $0x8] sm:$0xf]
        %v3571 = vld [vmem:[%s10 + $0xc] sm:$0xf]
        %v3572 = vld [vmem:[%s11] sm:$0x1]
        %v3574 = vlaneseq
        %v3575 = vshrl.u32 %v3574, 7
        %v3576 = vsub.s32 0, %v3575
        %v3577 = vrot.slane %v3572, %v3576
        %v3583 = vunpack.c.l.b16 %v3568
        %v3584 = vunpack.c.l.b16 %v3569
        %v3585 = vunpack.c.l.b16 %v3570
        %v3586 = vunpack.c.l.b16 %v3571
        %v3587 = vpack.c.b16 %v3584, %v3583
        %v3588 = vpack.c.b16 %v3586, %v3585
        %v3592 = vsel %vm632, %v3567, 0
        %3594 = vmatprep.subr.bf16.mxu0 0
        %3595 = vmatpush1.bf16.msra.mxu0 %v3587
        %3596 = vmatprep.subr.bf16.mxu0 0
        %3597 = vmatpush1.bf16.msra.mxu0 %v3588
        %3598 = vmatprep.subr.bf16.mxu0 0
        %3599 = vmatpush1.bf16.msra.mxu0 0
        %3600 = vmatprep.subr.bf16.mxu0 0
        %3601 = vmatpush1.bf16.msra.mxu0 0
        %3602 = vmatprep.subr.bf16.mxu0 0
        %3603 = vmatpush1.bf16.msra.mxu0 0
        %3604 = vmatprep.subr.bf16.mxu0 0
        %3605 = vmatpush1.bf16.msra.mxu0 0
        %3606 = vmatprep.subr.bf16.mxu0 0
        %3607 = vmatpush1.bf16.msra.mxu0 0
        %3608 = vmatprep.subr.bf16.mxu0 0
        %3609 = vmatpush1.bf16.msra.mxu0 0
        %3610 = vmatprep.subr.bf16.mxu0 0
        %3611 = vmatpush1.bf16.msra.mxu0 0
        %3612 = vmatprep.subr.bf16.mxu0 0
        %3613 = vmatpush1.bf16.msra.mxu0 0
        %3614 = vmatprep.subr.bf16.mxu0 0
        %3615 = vmatpush1.bf16.msra.mxu0 0
        %3616 = vmatprep.subr.bf16.mxu0 0
        %3617 = vmatpush1.bf16.msra.mxu0 0
        %3618 = vmatprep.subr.bf16.mxu0 0
        %3619 = vmatpush1.bf16.msra.mxu0 0
        %3620 = vmatprep.subr.bf16.mxu0 0
        %3621 = vmatpush1.bf16.msra.mxu0 0
        %3622 = vmatprep.subr.bf16.mxu0 0
        %3623 = vmatpush1.bf16.msra.mxu0 0
        %3624 = vmatprep.subr.bf16.mxu0 0
        %3625 = vmatpush1.bf16.msra.mxu0 0
        %3626 = vmatprep.mubr.bf16.mxu0 0
        %3627 = vmatmul.mubr.bf16.gmra.mrb[0].mxu0 %v3592
        %v3628 = vpop.f32.mrb[0].mxu0
        %v3629 = vadd.f32 %v3577, %v3628
        %v3630 = vpop.f32.mrb[0].mxu0
        %v3631 = vpop.f32.mrb[0].mxu0
        %v3632 = vpop.f32.mrb[0].mxu0
        %3633 = vdwg.mxu0
        %v3634 = vmul.f32 %v3629, %v3629
        %v3635 = vmul.f32 %v3629, %v3634
        %v3636 = vmul.f32 %v3635, 0.044715
        %v3637 = vadd.f32 %v3629, %v3636
        %v3638 = vmul.f32 %v3637, 0.7978846
        %v3639 = vtanh.pop %v3638
        %v3640 = vadd.f32 %v3639, 1.0
        %v3641 = vmul.f32 %v3640, 0.5
        %v3642 = vmul.f32 %v3629, %v3641
        %v3643 = vpack.c.bf16 %v3642, %v3642
        %v3644 = vld [vmem:[%s12] sm:$0xf]
        %v3645 = vld [vmem:[%s12 + $0x4] sm:$0xf]
        %v3646 = vld [vmem:[%s12 + $0x8] sm:$0xf]
        %v3647 = vld [vmem:[%s12 + $0xc] sm:$0xf]
        %v3648 = vld [vmem:[%s12 + $0x10] sm:$0xf]
        %v3649 = vld [vmem:[%s12 + $0x14] sm:$0xf]
        %v3650 = vld [vmem:[%s12 + $0x18] sm:$0xf]
        %v3651 = vld [vmem:[%s12 + $0x1c] sm:$0xf]
        %v3652 = vld [vmem:[%s13] sm:$0x1]
        %v3654 = vlaneseq
        %v3655 = vshrl.u32 %v3654, 7
        %v3656 = vsub.s32 0, %v3655
        %v3657 = vrot.slane %v3652, %v3656
        %v3667 = vunpack.c.l.b16 %v3644
        %v3668 = vunpack.c.l.b16 %v3645
        %v3669 = vunpack.c.l.b16 %v3646
        %v3670 = vunpack.c.l.b16 %v3647
        %v3671 = vunpack.c.l.b16 %v3648
        %v3672 = vunpack.c.l.b16 %v3649
        %v3673 = vunpack.c.l.b16 %v3650
        %v3674 = vunpack.c.l.b16 %v3651
        %v3675 = vpack.c.b16 %v3668, %v3667
        %v3676 = vpack.c.b16 %v3670, %v3669
        %v3677 = vpack.c.b16 %v3672, %v3671
        %v3678 = vpack.c.b16 %v3674, %v3673
        %vm3683 = vcmask 523264
        %v3685 = vsel %vm3683, %v3643, 0
        %3687 = vmatprep.subr.bf16.mxu0 0
        %3688 = vmatpush1.bf16.msra.mxu0 %v3675
        %3689 = vmatprep.subr.bf16.mxu0 0
        %3690 = vmatpush1.bf16.msra.mxu0 %v3676
        %3691 = vmatprep.subr.bf16.mxu0 0
        %3692 = vmatpush1.bf16.msra.mxu0 %v3677
        %3693 = vmatprep.subr.bf16.mxu0 0
        %3694 = vmatpush1.bf16.msra.mxu0 %v3678
        %3695 = vmatprep.subr.bf16.mxu0 0
        %3696 = vmatpush1.bf16.msra.mxu0 0
        %3697 = vmatprep.subr.bf16.mxu0 0
        %3698 = vmatpush1.bf16.msra.mxu0 0
        %3699 = vmatprep.subr.bf16.mxu0 0
        %3700 = vmatpush1.bf16.msra.mxu0 0
        %3701 = vmatprep.subr.bf16.mxu0 0
        %3702 = vmatpush1.bf16.msra.mxu0 0
        %3703 = vmatprep.subr.bf16.mxu0 0
        %3704 = vmatpush1.bf16.msra.mxu0 0
        %3705 = vmatprep.subr.bf16.mxu0 0
        %3706 = vmatpush1.bf16.msra.mxu0 0
        %3707 = vmatprep.subr.bf16.mxu0 0
        %3708 = vmatpush1.bf16.msra.mxu0 0
        %3709 = vmatprep.subr.bf16.mxu0 0
        %3710 = vmatpush1.bf16.msra.mxu0 0
        %3711 = vmatprep.subr.bf16.mxu0 0
        %3712 = vmatpush1.bf16.msra.mxu0 0
        %3713 = vmatprep.subr.bf16.mxu0 0
        %3714 = vmatpush1.bf16.msra.mxu0 0
        %3715 = vmatprep.subr.bf16.mxu0 0
        %3716 = vmatpush1.bf16.msra.mxu0 0
        %3717 = vmatprep.subr.bf16.mxu0 0
        %3718 = vmatpush1.bf16.msra.mxu0 0
        %3719 = vmatprep.mubr.bf16.mxu0 0
        %3720 = vmatmul.mubr.bf16.gmra.mrb[0].mxu0 %v3685
        %v3721 = vpop.f32.mrb[0].mxu0
        %v3722 = vadd.f32 %v3657, %v3721
        %v3723 = vpop.f32.mrb[0].mxu0
        %v3724 = vpop.f32.mrb[0].mxu0
        %v3725 = vpop.f32.mrb[0].mxu0
        %3726 = vdwg.mxu0
        %v3727 = vadd.f32 %v3566, %v3722
        %v3728 = vld [vmem:[%s14] sm:$0x1]
        %s3729 = scalar_lea.vmem %s14, 1
        %v3730 = vld [vmem:[%s3729] sm:$0x1]
        %v3731 = vsel %vm632, %v3727, 0.0
        %3732 = vadd.xlane.f32.xlu0 %v3731
        %v3733 = vpop.xlane.xlu0 %3732
        %v3734 = vmul.f32 %v3733, %v3542
        %v3735 = vsub.f32 %v3727, %v3734
        %v3736 = vmul.f32 %v3735, %v3735
        %v3737 = vsel %vm632, %v3736, 0.0
        %3738 = vadd.xlane.f32.xlu0 %v3737
        %v3739 = vpop.xlane.xlu0 %3738
        %v3740 = vmul.f32 %v3739, %v3542
        %v3741 = vadd.f32 %v3740, 1e-05
        %v3742 = vrsqrt.pop %v3741
        %v3743 = vmul.f32 %v3735, %v3742
        %v3745 = vlaneseq
        %v3746 = vshrl.u32 %v3745, 7
        %v3747 = vsub.s32 0, %v3746
        %v3748 = vrot.slane %v3728, %v3747
        %v3750 = vmul.f32 %v3743, %v3748
        %v3752 = vlaneseq
        %v3753 = vshrl.u32 %v3752, 7
        %v3754 = vsub.s32 0, %v3753
        %v3755 = vrot.slane %v3730, %v3754
        %v3757 = vadd.f32 %v3750, %v3755
        %v3758 = vpack.c.bf16 %v3757, %v3757
        %vm3759 = vcmask 257024
        %3760 = vst.msk [vmem:[%s561] sm:$0xf] %vm3759, %v3758
        %s3761 = sand.u32 %s390, 1
        %s3762 = scalar_lea.sflag [#allocation3], %s3761
        %s3763 = sand.u32 %s390, 1
        %s3764 = smul.addr %s3763, 4
        %s3765 = scalar_lea.vmem [#allocation2], %s3764
        // Predicated region
        $region81: #{tpu_custom_call.1} parent=79 // pred_check
          %p3766 = pneg %p400
        $region82: #{tpu_custom_call.1} parent=79 // pred_check_branch
          %3768 = sbr.rel (%p3766) target = $region84
        $region83: #{tpu_custom_call.1} parent=79 // pred_region
          %s3770 = ssub.s32 64, 64
          %3771 = vsyncadd %s3762, %s3770
          %s3772 = sadd.s32 %s34, %s33
          %s3773 = smul.addr %s3772, 64
          %s3774 = scalar_lea.hbm %s15, %s3773
          %s3776 = sshll.u32 %s3765, 4
          %s3777 = int_to_ptr.vmem [resolvable:$true] %s3776
          %3779 = dma.vmem_to_hbm [thread:$0]  %s3777, 64, %s3774, %s3762
        $region84: #{tpu_custom_call.1} parent=79 // pred_fallthru
          _
      $region80: #{tpu_custom_call.1} parent=5 // pred_fallthru
        _
      %p3780 = scmp.le.s32.totalorder 2, %s24
      // Predicated region
      $region85: #{tpu_custom_call.1} parent=5 // pred_check
        %p3781 = pneg %p3780
      $region86: #{tpu_custom_call.1} parent=5 // pred_check_branch
        %3783 = sbr.rel (%p3781) target = $region88
      $region87: #{tpu_custom_call.1} parent=5 // pred_region
        %s3784 = ssub.s32 %s24, 2
        // Predicated region
        $region89: #{tpu_custom_call.1} parent=87 // pred_check
          %p3785 = pneg %p406
        $region90: #{tpu_custom_call.1} parent=87 // pred_check_branch
          %3787 = sbr.rel (%p3785) target = $region92
        $region91: #{tpu_custom_call.1} parent=87 // pred_region
          %s3788 = sand.u32 %s391, 1
          %s3789 = scalar_lea.sflag [#allocation3], %s3788
          %s3790 = sand.u32 %s391, 1
          %s3791 = smul.addr %s3790, 4
          %s3792 = scalar_lea.vmem [#allocation2], %s3791
          %3793 = dma.done %s3789, 64
        $region92: #{tpu_custom_call.1} parent=87 // pred_fallthru
          _
      $region88: #{tpu_custom_call.1} parent=5 // pred_fallthru
        _
    $region6: #{tpu_custom_call.1} parent=1 // loop_footer
      %s28 = sadd.s32 1, %s24
    $region7: #{tpu_custom_call.1} parent=1 // loop_footer_branch
      %23 = sbr.rel target = $region3
    $region8: #{tpu_custom_call.1} parent=1 // loop_exit
      _
    %3794 = vsyncpa [#allocation3], 1
    %s3795 = scalar_lea.sflag [#allocation3], 1
    %3796 = vsyncpa %s3795, 1

</llo_original>
